<compile_context>
chip_gen: v6e
topology: v6e:2x2x1
jax: 0.10.0
libtpu: 0.0.40
codegen_flags: <defaults>
</compile_context>

<pallas_src>
import math

import jax
import jax.numpy as jnp
from jax import lax
from jax.experimental import pallas as pl
from jax.experimental.pallas import tpu as pltpu


# ----------------------------------------------------------------------------
# helpers
# ----------------------------------------------------------------------------
def _round_up(x, m):
    return (x + m - 1) // m * m


def _chan_pad(c):
    # Lane-dense (x128) at real ResNet widths; only sublane-align tiny widths.
    # TODO(synk): at tiny widths the 8-lane output hits masked stores; if such
    #             widths matter, pad to 128 anyway (lane-dense stores win).
    return _round_up(c, 128) if c >= 64 else _round_up(c, 8)


def _pad_axis(a, axis, new_size):
    if a.shape[axis] == new_size:
        return a
    pads = [(0, 0)] * a.ndim
    pads[axis] = (0, new_size - a.shape[axis])
    return jnp.pad(a, pads)


def _fold_bn(gamma, beta, mean, var, eps=1e-5):
    scale = gamma / jnp.sqrt(var + eps)
    return scale, beta - mean * scale


def _prep(x_nhwc, stride):
    """Zero-pad (by 1) and, only for stride>1, regroup into stride phases.

    Returns (xp, (s, Ho, Wo, Hq, Wq)) with xp of shape (N, s*s*Hq, Wq, C) and
        xp[n, ((kh%s)*s + kw%s)*Hq + i + kh//s, j + kw//s, c]
            == xpad[n, i*s + kh, j*s + kw, c]
    so the 3x3/stride-s conv tap (kh,kw) for output (i,j) is a contiguous
    static slice of the per-image tile.  For stride=1 this is just jnp.pad
    (no reshape/transpose HBM pass); total bytes == padded-input bytes.
    """
    N, H, W, C = x_nhwc.shape
    s = stride
    Ho = (H - 1) // s + 1
    Wo = (W - 1) // s + 1
    Hq = Ho + (2 // s)
    Wq = Wo + (2 // s)
    if s == 1:
        xp = jnp.pad(x_nhwc, ((0, 0), (1, 1), (1, 1), (0, 0)))
    else:
        xpad = jnp.pad(
            x_nhwc,
            ((0, 0), (1, s * Hq - H - 1), (1, s * Wq - W - 1), (0, 0)))
        xr = xpad.reshape(N, Hq, s, Wq, s, C)
        xr = jnp.transpose(xr, (0, 2, 4, 1, 3, 5))     # (N, a, b, Hq, Wq, C)
        xp = xr.reshape(N, s * s * Hq, Wq, C)
    return xp, (s, Ho, Wo, Hq, Wq)


# ----------------------------------------------------------------------------
# Fused kernel: 3x3 conv as 9 matmul-accumulates (no patch materialization)
#               + folded-BN bias + optional residual / 1x1 projection + ReLU.
# ----------------------------------------------------------------------------
def _make_conv_kernel(s, Hq, Ho, Wo, cin, relu, mode, proj_meta=None):
    """mode in (None, 'add', 'proj'); cin is the padded input channel count."""
    M = Ho * Wo

    def kernel(x_ref, w_ref, b_ref, *rest):
        if mode == "add":
            res_ref, out_ref = rest
        elif mode == "proj":
            xs_ref, wsc_ref, out_ref = rest
        else:
            (out_ref,) = rest

        xb = x_ref[...]                            # (s*s*Hq, Wq, Cin) bf16

        # 9 taps, each a static slice of the VMEM tile, matmul-accumulated
        # into f32.  Weight slice offsets t*cin are multiples of the padded
        # channel count (>=8) -> sublane aligned.
        acc = None
        for kh in range(3):
            for kw in range(3):
                p = (kh % s) * s + (kw % s)        # stride phase
                r0 = p * Hq + kh // s
                c0 = kw // s
                tap = xb[r0:r0 + Ho, c0:c0 + Wo, :].reshape(M, cin)
                t = kh * 3 + kw
                part = jnp.dot(tap, w_ref[t * cin:(t + 1) * cin, :],
                               preferred_element_type=jnp.float32)
                acc = part if acc is None else acc + part

        acc = acc + b_ref[...]                     # folded BN bias (f32)

        if mode == "add":                          # identity shortcut (bf16)
            acc = acc + res_ref[...].astype(jnp.float32)
        elif mode == "proj":                       # fused 1x1-conv shortcut
            xs_r0, xs_c0, cin0 = proj_meta
            xs = xs_ref[xs_r0:xs_r0 + Ho, xs_c0:xs_c0 + Wo, :].reshape(M, cin0)
            acc = acc + jnp.dot(xs, wsc_ref[...],
                                preferred_element_type=jnp.float32)
        if relu:
            acc = jnp.maximum(acc, 0.0)
        out_ref[...] = acc.astype(out_ref.dtype)

    return kernel


def conv3x3_fused(xp, geom, w_k9, bias, *, relu, out_dtype,
                  residual=None, proj=None):
    """Fused 3x3 conv (+folded BN) (+residual / 1x1 projection) (+ReLU).

    xp      : (N, s*s*Hq, Wq, Cin_p)  bf16 padded / phase-split activations
    geom    : (s, Ho, Wo, Hq, Wq) from _prep
    w_k9    : (9*Cin_p, Cout_p)  bf16 conv weights with BN scale folded in
    bias    : (1, Cout_p)        f32 folded bias
    residual: (N, Ho*Wo, Cout_p) bf16, added (in f32) before ReLU
    proj    : (xs5, (s0, Hq0, Wq0), wsc):
              xs5 (N, s0*s0, Hq0, Wq0, Cin0_p) bf16 phase view of the block
              input, wsc (Cin0_p, Cout_p) bf16
    returns : (N, Ho*Wo, Cout_p) in out_dtype
    """
    N, PH, PW, Cin = xp.shape
    s, Ho, Wo, Hq, Wq = geom
    K9, Cout = w_k9.shape
    M = Ho * Wo

    co_blk = Cout if Cout < 128 else 128
    n_co = Cout // co_blk

    mode = "add" if residual is not None else ("proj" if proj is not None
                                               else None)

    in_specs = [
        pl.BlockSpec((None, PH, PW, Cin), lambda n, j: (n, 0, 0, 0)),
        pl.BlockSpec((K9, co_blk), lambda n, j: (0, j)),
        pl.BlockSpec((1, co_blk), lambda n, j: (0, j)),
    ]
    args = [xp, w_k9, bias]
    proj_meta = None

    if mode == "add":
        in_specs.append(pl.BlockSpec((None, M, co_blk), lambda n, j: (n, 0, j)))
        args.append(residual)
    elif mode == "proj":
        xs5, (s0, Hq0, Wq0), wsc = proj
        cin0 = xs5.shape[-1]
        phase = (1 % s0) * s0 + (1 % s0)           # center tap phase
        proj_meta = (1 // s0, 1 // s0, cin0)       # in-phase row/col offsets
        in_specs.append(pl.BlockSpec(
            (None, None, Hq0, Wq0, cin0),
            lambda n, j, ph=phase: (n, ph, 0, 0, 0)))
        in_specs.append(pl.BlockSpec((cin0, co_blk), lambda n, j: (0, j)))
        args += [xs5, wsc]

    kernel = _make_conv_kernel(s, Hq, Ho, Wo, Cin, relu, mode, proj_meta)

    return pl.pallas_call(
        kernel,
        out_shape=jax.ShapeDtypeStruct((N, M, Cout), out_dtype),
        grid=(N, n_co),
        in_specs=in_specs,
        out_specs=pl.BlockSpec((None, M, co_blk), lambda n, j: (n, 0, j)),
        compiler_params=pltpu.CompilerParams(
            dimension_semantics=("parallel", "parallel"),
            vmem_limit_bytes=32 * 1024 * 1024),
    )(*args)


# ----------------------------------------------------------------------------
# BasicBlock forward (NCHW in / NCHW out, eval-mode BN).
# ----------------------------------------------------------------------------
def basic_block_forward(x_nchw, params, stride, compute_dtype=jnp.bfloat16):
    x = jnp.transpose(x_nchw, (0, 2, 3, 1))                  # NHWC, f32
    N, H, W, cin = x.shape
    planes = params["w1"].shape[-1]
    cin_p = _chan_pad(cin)
    pl_p = _chan_pad(planes)
    has_proj = (stride != 1) or (cin != planes)

    # Fold eval-mode BN into weights/bias, pad channels, cast matmul operands.
    s1, b1 = _fold_bn(params["g1"], params["be1"], params["m1"], params["v1"])
    w1 = params["w1"] * s1                                   # (3,3,cin,planes)
    w1 = _pad_axis(_pad_axis(w1, 2, cin_p), 3, pl_p)
    w1 = w1.reshape(9 * cin_p, pl_p).astype(compute_dtype)
    b1 = _pad_axis(b1, 0, pl_p).reshape(1, pl_p).astype(jnp.float32)

    s2, b2 = _fold_bn(params["g2"], params["be2"], params["m2"], params["v2"])
    w2 = params["w2"] * s2                                   # (3,3,planes,planes)
    w2 = _pad_axis(_pad_axis(w2, 2, pl_p), 3, pl_p)
    w2 = w2.reshape(9 * pl_p, pl_p).astype(compute_dtype)
    bias2 = b2
    if has_proj:
        ssc, bsc = _fold_bn(params["gsc"], params["besc"],
                            params["msc"], params["vsc"])
        wsc = params["wsc"][0, 0] * ssc                      # (cin, planes)
        wsc = _pad_axis(_pad_axis(wsc, 0, cin_p), 1, pl_p).astype(compute_dtype)
        bias2 = bias2 + bsc                                  # merge the biases
    bias2 = _pad_axis(bias2, 0, pl_p).reshape(1, pl_p).astype(jnp.float32)

    xb = _pad_axis(x, 3, cin_p).astype(compute_dtype)        # bf16 activations

    # conv1 + bn1 + relu (intermediate kept in bf16)
    xp1, geom1 = _prep(xb, stride)
    _, Ho, Wo, Hq1, Wq1 = geom1
    h1 = conv3x3_fused(xp1, geom1, w1, b1, relu=True, out_dtype=compute_dtype)
    h1 = h1.reshape(N, Ho, Wo, pl_p)

    # conv2 + bn2 + shortcut + relu, fused into a single kernel
    xp2, geom2 = _prep(h1, 1)
    if has_proj:
        # 1x1/stride-s shortcut input == center tap of conv1's input tile:
        # serve it as a squeezed phase view of xp1 (no strided HBM copy).
        xs5 = xp1.reshape(N, stride * stride, Hq1, Wq1, cin_p)
        out = conv3x3_fused(xp2, geom2, w2, bias2, relu=True,
                            out_dtype=jnp.float32,
                            proj=(xs5, (stride, Hq1, Wq1), wsc))
    else:
        res = xb.reshape(N, H * W, cin_p)                    # identity, bf16
        out = conv3x3_fused(xp2, geom2, w2, bias2, relu=True,
                            out_dtype=jnp.float32, residual=res)

    # Drop channel padding BEFORE the layout transpose (less data to move).
    out = out.reshape(N, Ho, Wo, pl_p)[..., :planes]
    # TODO(synk): if the consumer accepts NHWC (or an (N,C,M) slab), skip this
    #             transpose / emit a lane-dense (Cout, M) block from the kernel.
    return jnp.transpose(out, (0, 3, 1, 2))                  # NHWC -> NCHW


# ----------------------------------------------------------------------------
# Pure-JAX reference (PyTorch eval-mode semantics, f32 / HIGHEST precision).
# ----------------------------------------------------------------------------
def ref_forward(x_nchw, params, stride):
    x = jnp.transpose(x_nchw, (0, 2, 3, 1)).astype(jnp.float32)
    dn = ("NHWC", "HWIO", "NHWC")
    hi = lax.Precision.HIGHEST

    def bn(y, g, be, m, v, eps=1e-5):
        return (y - m) / jnp.sqrt(v + eps) * g + be

    h = lax.conv_general_dilated(x, params["w1"], (stride, stride),
                                 [(1, 1), (1, 1)], dimension_numbers=dn,
                                 precision=hi)
    h = jax.nn.relu(bn(h, params["g1"], params["be1"], params["m1"], params["v1"]))
    o = lax.conv_general_dilated(h, params["w2"], (1, 1),
                                 [(1, 1), (1, 1)], dimension_numbers=dn,
                                 precision=hi)
    o = bn(o, params["g2"], params["be2"], params["m2"], params["v2"])
    if stride != 1 or x.shape[-1] != o.shape[-1]:
        s_ = lax.conv_general_dilated(x, params["wsc"], (stride, stride),
                                      [(0, 0), (0, 0)], dimension_numbers=dn,
                                      precision=hi)
        s_ = bn(s_, params["gsc"], params["besc"], params["msc"], params["vsc"])
    else:
        s_ = x
    return jnp.transpose(jax.nn.relu(o + s_), (0, 3, 1, 2))


# ----------------------------------------------------------------------------
# Deterministic parameter construction (raw, PyTorch-like, HWIO weights).
# ----------------------------------------------------------------------------
def make_params(key, in_planes, planes, stride):
    ks = jax.random.split(key, 6)
    f32 = jnp.float32

    def conv_w(k, kh, kw, ci, co):
        fan = kh * kw * ci
        return jax.random.normal(k, (kh, kw, ci, co), f32) / math.sqrt(fan)

    def bn_p(k, c):
        k1, k2, k3, k4 = jax.random.split(k, 4)
        return (1.0 + 0.1 * jax.random.normal(k1, (c,), f32),          # gamma
                0.1 * jax.random.normal(k2, (c,), f32),                # beta
                0.1 * jax.random.normal(k3, (c,), f32),                # mean
                0.5 + jnp.abs(jax.random.normal(k4, (c,), f32)) * 0.5)  # var

    p = {"w1": conv_w(ks[0], 3, 3, in_planes, planes)}
    p["g1"], p["be1"], p["m1"], p["v1"] = bn_p(ks[1], planes)
    p["w2"] = conv_w(ks[2], 3, 3, planes, planes)
    p["g2"], p["be2"], p["m2"], p["v2"] = bn_p(ks[3], planes)
    if stride != 1 or in_planes != planes:
        p["wsc"] = conv_w(ks[4], 1, 1, in_planes, planes)
        p["gsc"], p["besc"], p["msc"], p["vsc"] = bn_p(ks[5], planes)
    return p


if __name__ == "__main__":
    key = jax.random.PRNGKey(0)
    kx, kx2, kp, kp2 = jax.random.split(key, 4)

    fwd = jax.jit(basic_block_forward, static_argnums=(2,))

    # Case 1: downsampling block (stride=2, channel expansion -> 1x1 shortcut)
    in_planes, planes, stride = 4, 8, 2
    x = jax.random.normal(kx, (2, in_planes, 16, 16), jnp.float32)   # NCHW
    params = make_params(kp, in_planes, planes, stride)
    out = jax.block_until_ready(fwd(x, params, stride))
    ref = ref_forward(x, params, stride)
    assert out.shape == (2, planes, 8, 8)
    # bf16 matmuls / bf16 residual vs f32 reference -> loose-ish tolerance.
    assert jnp.allclose(out, ref, atol=5e-2, rtol=5e-2), \
        float(jnp.max(jnp.abs(out - ref)))

    # Case 2: identity-shortcut block (stride=1, same channels)
    in_planes2, planes2, stride2 = 8, 8, 1
    x2 = jax.random.normal(kx2, (2, in_planes2, 16, 16), jnp.float32)
    params2 = make_params(kp2, in_planes2, planes2, stride2)
    out2 = jax.block_until_ready(fwd(x2, params2, stride2))
    ref2 = ref_forward(x2, params2, stride2)
    assert out2.shape == (2, planes2, 16, 16)
    assert jnp.allclose(out2, ref2, atol=5e-2, rtol=5e-2), \
        float(jnp.max(jnp.abs(out2 - ref2)))

    print("KERNEL_OK")
</pallas_src>

<mosaic_0001>
module attributes {stable_mosaic.version = 11 : i64} {
  func.func @kernel(%arg0: i32, %arg1: i32, %arg2: memref<1x36x9x8xbf16, #tpu.memory_space<vmem>>, %arg3: memref<72x8xbf16, #tpu.memory_space<vmem>>, %arg4: memref<1x8xf32, #tpu.memory_space<vmem>>, %arg5: memref<1x64x8xbf16, #tpu.memory_space<vmem>>) attributes {dimension_semantics = [#tpu.dimension_semantics<parallel>, #tpu.dimension_semantics<parallel>], iteration_bounds = array<i64: 2, 1>, scalar_prefetch = 0 : i64, scratch_operands = 0 : i64, tpu.core_type = #tpu.core_type<tc>, window_params = [{transform_indices = @transform_0, window_bounds = array<i64: 1, 36, 9, 8>}, {transform_indices = @transform_1, window_bounds = array<i64: 72, 8>}, {transform_indices = @transform_2, window_bounds = array<i64: 1, 8>}, {transform_indices = @transform_3, window_bounds = array<i64: 1, 64, 8>}]} {
    %c0 = arith.constant 0 : index
    %c0_0 = arith.constant 0 : index
    %c0_1 = arith.constant 0 : index
    %c0_2 = arith.constant 0 : index
    %0 = vector.load %arg2[%c0, %c0_0, %c0_1, %c0_2] : memref<1x36x9x8xbf16, #tpu.memory_space<vmem>>, vector<1x36x9x8xbf16>
    %1 = vector.shape_cast %0 : vector<1x36x9x8xbf16> to vector<36x9x8xbf16>
    %2 = vector.extract_strided_slice %1 {offsets = [0, 0, 0], sizes = [8, 8, 8], strides = [1, 1, 1]} : vector<36x9x8xbf16> to vector<8x8x8xbf16>
    %3 = vector.shape_cast %2 : vector<8x8x8xbf16> to vector<64x8xbf16>
    %c0_3 = arith.constant 0 : index
    %c0_4 = arith.constant 0 : index
    %4 = vector.load %arg3[%c0_3, %c0_4] : memref<72x8xbf16, #tpu.memory_space<vmem>>, vector<8x8xbf16>
    %cst = arith.constant dense<0.000000e+00> : vector<64x8xf32>
    %5 = tpu.matmul %3, %4, %cst {dimension_numbers = #tpu.dot_dimension_numbers<[1], [0], [0], [1], [0, 0, 1, 1], [], []>} : vector<64x8xbf16>, vector<8x8xbf16>, vector<64x8xf32> -> vector<64x8xf32>
    %6 = vector.extract_strided_slice %1 {offsets = [9, 0, 0], sizes = [8, 8, 8], strides = [1, 1, 1]} : vector<36x9x8xbf16> to vector<8x8x8xbf16>
    %7 = vector.shape_cast %6 : vector<8x8x8xbf16> to vector<64x8xbf16>
    %c8 = arith.constant 8 : index
    %c0_5 = arith.constant 0 : index
    %8 = vector.load %arg3[%c8, %c0_5] : memref<72x8xbf16, #tpu.memory_space<vmem>>, vector<8x8xbf16>
    %cst_6 = arith.constant dense<0.000000e+00> : vector<64x8xf32>
    %9 = tpu.matmul %7, %8, %cst_6 {dimension_numbers = #tpu.dot_dimension_numbers<[1], [0], [0], [1], [0, 0, 1, 1], [], []>} : vector<64x8xbf16>, vector<8x8xbf16>, vector<64x8xf32> -> vector<64x8xf32>
    %10 = arith.addf %5, %9 : vector<64x8xf32>
    %11 = vector.extract_strided_slice %1 {offsets = [0, 1, 0], sizes = [8, 8, 8], strides = [1, 1, 1]} : vector<36x9x8xbf16> to vector<8x8x8xbf16>
    %12 = vector.shape_cast %11 : vector<8x8x8xbf16> to vector<64x8xbf16>
    %c16 = arith.constant 16 : index
    %c0_7 = arith.constant 0 : index
    %13 = vector.load %arg3[%c16, %c0_7] : memref<72x8xbf16, #tpu.memory_space<vmem>>, vector<8x8xbf16>
    %cst_8 = arith.constant dense<0.000000e+00> : vector<64x8xf32>
    %14 = tpu.matmul %12, %13, %cst_8 {dimension_numbers = #tpu.dot_dimension_numbers<[1], [0], [0], [1], [0, 0, 1, 1], [], []>} : vector<64x8xbf16>, vector<8x8xbf16>, vector<64x8xf32> -> vector<64x8xf32>
    %15 = arith.addf %10, %14 : vector<64x8xf32>
    %16 = vector.extract_strided_slice %1 {offsets = [18, 0, 0], sizes = [8, 8, 8], strides = [1, 1, 1]} : vector<36x9x8xbf16> to vector<8x8x8xbf16>
    %17 = vector.shape_cast %16 : vector<8x8x8xbf16> to vector<64x8xbf16>
    %c24 = arith.constant 24 : index
    %c0_9 = arith.constant 0 : index
    %18 = vector.load %arg3[%c24, %c0_9] : memref<72x8xbf16, #tpu.memory_space<vmem>>, vector<8x8xbf16>
    %cst_10 = arith.constant dense<0.000000e+00> : vector<64x8xf32>
    %19 = tpu.matmul %17, %18, %cst_10 {dimension_numbers = #tpu.dot_dimension_numbers<[1], [0], [0], [1], [0, 0, 1, 1], [], []>} : vector<64x8xbf16>, vector<8x8xbf16>, vector<64x8xf32> -> vector<64x8xf32>
    %20 = arith.addf %15, %19 : vector<64x8xf32>
    %21 = vector.extract_strided_slice %1 {offsets = [27, 0, 0], sizes = [8, 8, 8], strides = [1, 1, 1]} : vector<36x9x8xbf16> to vector<8x8x8xbf16>
    %22 = vector.shape_cast %21 : vector<8x8x8xbf16> to vector<64x8xbf16>
    %c32 = arith.constant 32 : index
    %c0_11 = arith.constant 0 : index
    %23 = vector.load %arg3[%c32, %c0_11] : memref<72x8xbf16, #tpu.memory_space<vmem>>, vector<8x8xbf16>
    %cst_12 = arith.constant dense<0.000000e+00> : vector<64x8xf32>
    %24 = tpu.matmul %22, %23, %cst_12 {dimension_numbers = #tpu.dot_dimension_numbers<[1], [0], [0], [1], [0, 0, 1, 1], [], []>} : vector<64x8xbf16>, vector<8x8xbf16>, vector<64x8xf32> -> vector<64x8xf32>
    %25 = arith.addf %20, %24 : vector<64x8xf32>
    %26 = vector.extract_strided_slice %1 {offsets = [18, 1, 0], sizes = [8, 8, 8], strides = [1, 1, 1]} : vector<36x9x8xbf16> to vector<8x8x8xbf16>
    %27 = vector.shape_cast %26 : vector<8x8x8xbf16> to vector<64x8xbf16>
    %c40 = arith.constant 40 : index
    %c0_13 = arith.constant 0 : index
    %28 = vector.load %arg3[%c40, %c0_13] : memref<72x8xbf16, #tpu.memory_space<vmem>>, vector<8x8xbf16>
    %cst_14 = arith.constant dense<0.000000e+00> : vector<64x8xf32>
    %29 = tpu.matmul %27, %28, %cst_14 {dimension_numbers = #tpu.dot_dimension_numbers<[1], [0], [0], [1], [0, 0, 1, 1], [], []>} : vector<64x8xbf16>, vector<8x8xbf16>, vector<64x8xf32> -> vector<64x8xf32>
    %30 = arith.addf %25, %29 : vector<64x8xf32>
    %31 = vector.extract_strided_slice %1 {offsets = [1, 0, 0], sizes = [8, 8, 8], strides = [1, 1, 1]} : vector<36x9x8xbf16> to vector<8x8x8xbf16>
    %32 = vector.shape_cast %31 : vector<8x8x8xbf16> to vector<64x8xbf16>
    %c48 = arith.constant 48 : index
    %c0_15 = arith.constant 0 : index
    %33 = vector.load %arg3[%c48, %c0_15] : memref<72x8xbf16, #tpu.memory_space<vmem>>, vector<8x8xbf16>
    %cst_16 = arith.constant dense<0.000000e+00> : vector<64x8xf32>
    %34 = tpu.matmul %32, %33, %cst_16 {dimension_numbers = #tpu.dot_dimension_numbers<[1], [0], [0], [1], [0, 0, 1, 1], [], []>} : vector<64x8xbf16>, vector<8x8xbf16>, vector<64x8xf32> -> vector<64x8xf32>
    %35 = arith.addf %30, %34 : vector<64x8xf32>
    %36 = vector.extract_strided_slice %1 {offsets = [10, 0, 0], sizes = [8, 8, 8], strides = [1, 1, 1]} : vector<36x9x8xbf16> to vector<8x8x8xbf16>
    %37 = vector.shape_cast %36 : vector<8x8x8xbf16> to vector<64x8xbf16>
    %c56 = arith.constant 56 : index
    %c0_17 = arith.constant 0 : index
    %38 = vector.load %arg3[%c56, %c0_17] : memref<72x8xbf16, #tpu.memory_space<vmem>>, vector<8x8xbf16>
    %cst_18 = arith.constant dense<0.000000e+00> : vector<64x8xf32>
    %39 = tpu.matmul %37, %38, %cst_18 {dimension_numbers = #tpu.dot_dimension_numbers<[1], [0], [0], [1], [0, 0, 1, 1], [], []>} : vector<64x8xbf16>, vector<8x8xbf16>, vector<64x8xf32> -> vector<64x8xf32>
    %40 = arith.addf %35, %39 : vector<64x8xf32>
    %41 = vector.extract_strided_slice %1 {offsets = [1, 1, 0], sizes = [8, 8, 8], strides = [1, 1, 1]} : vector<36x9x8xbf16> to vector<8x8x8xbf16>
    %42 = vector.shape_cast %41 : vector<8x8x8xbf16> to vector<64x8xbf16>
    %c64 = arith.constant 64 : index
    %c0_19 = arith.constant 0 : index
    %43 = vector.load %arg3[%c64, %c0_19] : memref<72x8xbf16, #tpu.memory_space<vmem>>, vector<8x8xbf16>
    %cst_20 = arith.constant dense<0.000000e+00> : vector<64x8xf32>
    %44 = tpu.matmul %42, %43, %cst_20 {dimension_numbers = #tpu.dot_dimension_numbers<[1], [0], [0], [1], [0, 0, 1, 1], [], []>} : vector<64x8xbf16>, vector<8x8xbf16>, vector<64x8xf32> -> vector<64x8xf32>
    %45 = arith.addf %40, %44 : vector<64x8xf32>
    %c0_21 = arith.constant 0 : index
    %c0_22 = arith.constant 0 : index
    %46 = vector.load %arg4[%c0_21, %c0_22] : memref<1x8xf32, #tpu.memory_space<vmem>>, vector<1x8xf32>
    %47 = vector.broadcast %46 : vector<1x8xf32> to vector<64x8xf32>
    %48 = arith.addf %45, %47 : vector<64x8xf32>
    %cst_23 = arith.constant 0.000000e+00 : f32
    %49 = vector.broadcast %cst_23 : f32 to vector<64x8xf32>
    %50 = arith.maximumf %48, %49 : vector<64x8xf32>
    %51 = arith.truncf %50 : vector<64x8xf32> to vector<64x8xbf16>
    %c0_24 = arith.constant 0 : index
    %c0_25 = arith.constant 0 : index
    %c0_26 = arith.constant 0 : index
    %52 = vector.load %arg5[%c0_24, %c0_25, %c0_26] : memref<1x64x8xbf16, #tpu.memory_space<vmem>>, vector<1x64x8xbf16>
    %53 = vector.shape_cast %52 : vector<1x64x8xbf16> to vector<64x8xbf16>
    %54 = vector.shape_cast %51 : vector<64x8xbf16> to vector<1x64x8xbf16>
    tpu.vector_store %arg5[%c0_24, %c0_25, %c0_26], %54 {strides = array<i32>} : memref<1x64x8xbf16, #tpu.memory_space<vmem>>, vector<1x64x8xbf16>,
    return
  }
  func.func @transform_0(%arg0: i32, %arg1: i32) -> (i32, i32, i32, i32) {
    %c0_i32 = arith.constant 0 : i32
    %c0_i32_0 = arith.constant 0 : i32
    %c0_i32_1 = arith.constant 0 : i32
    %c0_i32_2 = arith.constant 0 : i32
    return %arg0, %c0_i32, %c0_i32_0, %c0_i32_1 : i32, i32, i32, i32
  }
  func.func @transform_1(%arg0: i32, %arg1: i32) -> (i32, i32) {
    %c0_i32 = arith.constant 0 : i32
    %c0_i32_0 = arith.constant 0 : i32
    return %c0_i32, %arg1 : i32, i32
  }
  func.func @transform_2(%arg0: i32, %arg1: i32) -> (i32, i32) {
    %c0_i32 = arith.constant 0 : i32
    %c0_i32_0 = arith.constant 0 : i32
    return %c0_i32, %arg1 : i32, i32
  }
  func.func @transform_3(%arg0: i32, %arg1: i32) -> (i32, i32, i32) {
    %c0_i32 = arith.constant 0 : i32
    %c0_i32_0 = arith.constant 0 : i32
    return %arg0, %c0_i32, %arg1 : i32, i32, i32
  }
}

module attributes {stable_mosaic.version = 11 : i64} {
  func.func @kernel(%arg0: i32, %arg1: i32, %arg2: memref<1x10x10x8xbf16, #tpu.memory_space<vmem>>, %arg3: memref<72x8xbf16, #tpu.memory_space<vmem>>, %arg4: memref<1x8xf32, #tpu.memory_space<vmem>>, %arg5: memref<1x1x9x9x8xbf16, #tpu.memory_space<vmem>>, %arg6: memref<8x8xbf16, #tpu.memory_space<vmem>>, %arg7: memref<1x64x8xf32, #tpu.memory_space<vmem>>) attributes {dimension_semantics = [#tpu.dimension_semantics<parallel>, #tpu.dimension_semantics<parallel>], iteration_bounds = array<i64: 2, 1>, scalar_prefetch = 0 : i64, scratch_operands = 0 : i64, tpu.core_type = #tpu.core_type<tc>, window_params = [{transform_indices = @transform_0, window_bounds = array<i64: 1, 10, 10, 8>}, {transform_indices = @transform_1, window_bounds = array<i64: 72, 8>}, {transform_indices = @transform_2, window_bounds = array<i64: 1, 8>}, {transform_indices = @transform_3, window_bounds = array<i64: 1, 1, 9, 9, 8>}, {transform_indices = @transform_4, window_bounds = array<i64: 8, 8>}, {transform_indices = @transform_5, window_bounds = array<i64: 1, 64, 8>}]} {
    %c0 = arith.constant 0 : index
    %c0_0 = arith.constant 0 : index
    %c0_1 = arith.constant 0 : index
    %c0_2 = arith.constant 0 : index
    %0 = vector.load %arg2[%c0, %c0_0, %c0_1, %c0_2] : memref<1x10x10x8xbf16, #tpu.memory_space<vmem>>, vector<1x10x10x8xbf16>
    %1 = vector.shape_cast %0 : vector<1x10x10x8xbf16> to vector<10x10x8xbf16>
    %2 = vector.extract_strided_slice %1 {offsets = [0, 0, 0], sizes = [8, 8, 8], strides = [1, 1, 1]} : vector<10x10x8xbf16> to vector<8x8x8xbf16>
    %3 = vector.shape_cast %2 : vector<8x8x8xbf16> to vector<64x8xbf16>
    %c0_3 = arith.constant 0 : index
    %c0_4 = arith.constant 0 : index
    %4 = vector.load %arg3[%c0_3, %c0_4] : memref<72x8xbf16, #tpu.memory_space<vmem>>, vector<8x8xbf16>
    %cst = arith.constant dense<0.000000e+00> : vector<64x8xf32>
    %5 = tpu.matmul %3, %4, %cst {dimension_numbers = #tpu.dot_dimension_numbers<[1], [0], [0], [1], [0, 0, 1, 1], [], []>} : vector<64x8xbf16>, vector<8x8xbf16>, vector<64x8xf32> -> vector<64x8xf32>
    %6 = vector.extract_strided_slice %1 {offsets = [0, 1, 0], sizes = [8, 8, 8], strides = [1, 1, 1]} : vector<10x10x8xbf16> to vector<8x8x8xbf16>
    %7 = vector.shape_cast %6 : vector<8x8x8xbf16> to vector<64x8xbf16>
    %c8 = arith.constant 8 : index
    %c0_5 = arith.constant 0 : index
    %8 = vector.load %arg3[%c8, %c0_5] : memref<72x8xbf16, #tpu.memory_space<vmem>>, vector<8x8xbf16>
    %cst_6 = arith.constant dense<0.000000e+00> : vector<64x8xf32>
    %9 = tpu.matmul %7, %8, %cst_6 {dimension_numbers = #tpu.dot_dimension_numbers<[1], [0], [0], [1], [0, 0, 1, 1], [], []>} : vector<64x8xbf16>, vector<8x8xbf16>, vector<64x8xf32> -> vector<64x8xf32>
    %10 = arith.addf %5, %9 : vector<64x8xf32>
    %11 = vector.extract_strided_slice %1 {offsets = [0, 2, 0], sizes = [8, 8, 8], strides = [1, 1, 1]} : vector<10x10x8xbf16> to vector<8x8x8xbf16>
    %12 = vector.shape_cast %11 : vector<8x8x8xbf16> to vector<64x8xbf16>
    %c16 = arith.constant 16 : index
    %c0_7 = arith.constant 0 : index
    %13 = vector.load %arg3[%c16, %c0_7] : memref<72x8xbf16, #tpu.memory_space<vmem>>, vector<8x8xbf16>
    %cst_8 = arith.constant dense<0.000000e+00> : vector<64x8xf32>
    %14 = tpu.matmul %12, %13, %cst_8 {dimension_numbers = #tpu.dot_dimension_numbers<[1], [0], [0], [1], [0, 0, 1, 1], [], []>} : vector<64x8xbf16>, vector<8x8xbf16>, vector<64x8xf32> -> vector<64x8xf32>
    %15 = arith.addf %10, %14 : vector<64x8xf32>
    %16 = vector.extract_strided_slice %1 {offsets = [1, 0, 0], sizes = [8, 8, 8], strides = [1, 1, 1]} : vector<10x10x8xbf16> to vector<8x8x8xbf16>
    %17 = vector.shape_cast %16 : vector<8x8x8xbf16> to vector<64x8xbf16>
    %c24 = arith.constant 24 : index
    %c0_9 = arith.constant 0 : index
    %18 = vector.load %arg3[%c24, %c0_9] : memref<72x8xbf16, #tpu.memory_space<vmem>>, vector<8x8xbf16>
    %cst_10 = arith.constant dense<0.000000e+00> : vector<64x8xf32>
    %19 = tpu.matmul %17, %18, %cst_10 {dimension_numbers = #tpu.dot_dimension_numbers<[1], [0], [0], [1], [0, 0, 1, 1], [], []>} : vector<64x8xbf16>, vector<8x8xbf16>, vector<64x8xf32> -> vector<64x8xf32>
    %20 = arith.addf %15, %19 : vector<64x8xf32>
    %21 = vector.extract_strided_slice %1 {offsets = [1, 1, 0], sizes = [8, 8, 8], strides = [1, 1, 1]} : vector<10x10x8xbf16> to vector<8x8x8xbf16>
    %22 = vector.shape_cast %21 : vector<8x8x8xbf16> to vector<64x8xbf16>
    %c32 = arith.constant 32 : index
    %c0_11 = arith.constant 0 : index
    %23 = vector.load %arg3[%c32, %c0_11] : memref<72x8xbf16, #tpu.memory_space<vmem>>, vector<8x8xbf16>
    %cst_12 = arith.constant dense<0.000000e+00> : vector<64x8xf32>
    %24 = tpu.matmul %22, %23, %cst_12 {dimension_numbers = #tpu.dot_dimension_numbers<[1], [0], [0], [1], [0, 0, 1, 1], [], []>} : vector<64x8xbf16>, vector<8x8xbf16>, vector<64x8xf32> -> vector<64x8xf32>
    %25 = arith.addf %20, %24 : vector<64x8xf32>
    %26 = vector.extract_strided_slice %1 {offsets = [1, 2, 0], sizes = [8, 8, 8], strides = [1, 1, 1]} : vector<10x10x8xbf16> to vector<8x8x8xbf16>
    %27 = vector.shape_cast %26 : vector<8x8x8xbf16> to vector<64x8xbf16>
    %c40 = arith.constant 40 : index
    %c0_13 = arith.constant 0 : index
    %28 = vector.load %arg3[%c40, %c0_13] : memref<72x8xbf16, #tpu.memory_space<vmem>>, vector<8x8xbf16>
    %cst_14 = arith.constant dense<0.000000e+00> : vector<64x8xf32>
    %29 = tpu.matmul %27, %28, %cst_14 {dimension_numbers = #tpu.dot_dimension_numbers<[1], [0], [0], [1], [0, 0, 1, 1], [], []>} : vector<64x8xbf16>, vector<8x8xbf16>, vector<64x8xf32> -> vector<64x8xf32>
    %30 = arith.addf %25, %29 : vector<64x8xf32>
    %31 = vector.extract_strided_slice %1 {offsets = [2, 0, 0], sizes = [8, 8, 8], strides = [1, 1, 1]} : vector<10x10x8xbf16> to vector<8x8x8xbf16>
    %32 = vector.shape_cast %31 : vector<8x8x8xbf16> to vector<64x8xbf16>
    %c48 = arith.constant 48 : index
    %c0_15 = arith.constant 0 : index
    %33 = vector.load %arg3[%c48, %c0_15] : memref<72x8xbf16, #tpu.memory_space<vmem>>, vector<8x8xbf16>
    %cst_16 = arith.constant dense<0.000000e+00> : vector<64x8xf32>
    %34 = tpu.matmul %32, %33, %cst_16 {dimension_numbers = #tpu.dot_dimension_numbers<[1], [0], [0], [1], [0, 0, 1, 1], [], []>} : vector<64x8xbf16>, vector<8x8xbf16>, vector<64x8xf32> -> vector<64x8xf32>
    %35 = arith.addf %30, %34 : vector<64x8xf32>
    %36 = vector.extract_strided_slice %1 {offsets = [2, 1, 0], sizes = [8, 8, 8], strides = [1, 1, 1]} : vector<10x10x8xbf16> to vector<8x8x8xbf16>
    %37 = vector.shape_cast %36 : vector<8x8x8xbf16> to vector<64x8xbf16>
    %c56 = arith.constant 56 : index
    %c0_17 = arith.constant 0 : index
    %38 = vector.load %arg3[%c56, %c0_17] : memref<72x8xbf16, #tpu.memory_space<vmem>>, vector<8x8xbf16>
    %cst_18 = arith.constant dense<0.000000e+00> : vector<64x8xf32>
    %39 = tpu.matmul %37, %38, %cst_18 {dimension_numbers = #tpu.dot_dimension_numbers<[1], [0], [0], [1], [0, 0, 1, 1], [], []>} : vector<64x8xbf16>, vector<8x8xbf16>, vector<64x8xf32> -> vector<64x8xf32>
    %40 = arith.addf %35, %39 : vector<64x8xf32>
    %41 = vector.extract_strided_slice %1 {offsets = [2, 2, 0], sizes = [8, 8, 8], strides = [1, 1, 1]} : vector<10x10x8xbf16> to vector<8x8x8xbf16>
    %42 = vector.shape_cast %41 : vector<8x8x8xbf16> to vector<64x8xbf16>
    %c64 = arith.constant 64 : index
    %c0_19 = arith.constant 0 : index
    %43 = vector.load %arg3[%c64, %c0_19] : memref<72x8xbf16, #tpu.memory_space<vmem>>, vector<8x8xbf16>
    %cst_20 = arith.constant dense<0.000000e+00> : vector<64x8xf32>
    %44 = tpu.matmul %42, %43, %cst_20 {dimension_numbers = #tpu.dot_dimension_numbers<[1], [0], [0], [1], [0, 0, 1, 1], [], []>} : vector<64x8xbf16>, vector<8x8xbf16>, vector<64x8xf32> -> vector<64x8xf32>
    %45 = arith.addf %40, %44 : vector<64x8xf32>
    %c0_21 = arith.constant 0 : index
    %c0_22 = arith.constant 0 : index
    %46 = vector.load %arg4[%c0_21, %c0_22] : memref<1x8xf32, #tpu.memory_space<vmem>>, vector<1x8xf32>
    %47 = vector.broadcast %46 : vector<1x8xf32> to vector<64x8xf32>
    %48 = arith.addf %45, %47 : vector<64x8xf32>
    %c0_23 = arith.constant 0 : index
    %c0_24 = arith.constant 0 : index
    %c0_25 = arith.constant 0 : index
    %c0_26 = arith.constant 0 : index
    %c0_27 = arith.constant 0 : index
    %49 = vector.load %arg5[%c0_23, %c0_24, %c0_25, %c0_26, %c0_27] : memref<1x1x9x9x8xbf16, #tpu.memory_space<vmem>>, vector<1x1x8x8x8xbf16>
    %50 = vector.shape_cast %49 : vector<1x1x8x8x8xbf16> to vector<8x8x8xbf16>
    %51 = vector.shape_cast %50 : vector<8x8x8xbf16> to vector<64x8xbf16>
    %c0_28 = arith.constant 0 : index
    %c0_29 = arith.constant 0 : index
    %52 = vector.load %arg6[%c0_28, %c0_29] : memref<8x8xbf16, #tpu.memory_space<vmem>>, vector<8x8xbf16>
    %cst_30 = arith.constant dense<0.000000e+00> : vector<64x8xf32>
    %53 = tpu.matmul %51, %52, %cst_30 {dimension_numbers = #tpu.dot_dimension_numbers<[1], [0], [0], [1], [0, 0, 1, 1], [], []>} : vector<64x8xbf16>, vector<8x8xbf16>, vector<64x8xf32> -> vector<64x8xf32>
    %54 = arith.addf %48, %53 : vector<64x8xf32>
    %cst_31 = arith.constant 0.000000e+00 : f32
    %55 = vector.broadcast %cst_31 : f32 to vector<64x8xf32>
    %56 = arith.maximumf %54, %55 : vector<64x8xf32>
    %c0_32 = arith.constant 0 : index
    %c0_33 = arith.constant 0 : index
    %c0_34 = arith.constant 0 : index
    %57 = vector.load %arg7[%c0_32, %c0_33, %c0_34] : memref<1x64x8xf32, #tpu.memory_space<vmem>>, vector<1x64x8xf32>
    %58 = vector.shape_cast %57 : vector<1x64x8xf32> to vector<64x8xf32>
    %59 = vector.shape_cast %56 : vector<64x8xf32> to vector<1x64x8xf32>
    tpu.vector_store %arg7[%c0_32, %c0_33, %c0_34], %59 {strides = array<i32>} : memref<1x64x8xf32, #tpu.memory_space<vmem>>, vector<1x64x8xf32>,
    return
  }
  func.func @transform_0(%arg0: i32, %arg1: i32) -> (i32, i32, i32, i32) {
    %c0_i32 = arith.constant 0 : i32
    %c0_i32_0 = arith.constant 0 : i32
    %c0_i32_1 = arith.constant 0 : i32
    %c0_i32_2 = arith.constant 0 : i32
    return %arg0, %c0_i32, %c0_i32_0, %c0_i32_1 : i32, i32, i32, i32
  }
  func.func @transform_1(%arg0: i32, %arg1: i32) -> (i32, i32) {
    %c0_i32 = arith.constant 0 : i32
    %c0_i32_0 = arith.constant 0 : i32
    return %c0_i32, %arg1 : i32, i32
  }
  func.func @transform_2(%arg0: i32, %arg1: i32) -> (i32, i32) {
    %c0_i32 = arith.constant 0 : i32
    %c0_i32_0 = arith.constant 0 : i32
    return %c0_i32, %arg1 : i32, i32
  }
  func.func @transform_3(%arg0: i32, %arg1: i32) -> (i32, i32, i32, i32, i32) {
    %c3_i32 = arith.constant 3 : i32
    %c0_i32 = arith.constant 0 : i32
    %c0_i32_0 = arith.constant 0 : i32
    %c0_i32_1 = arith.constant 0 : i32
    %c0_i32_2 = arith.constant 0 : i32
    return %arg0, %c3_i32, %c0_i32, %c0_i32_0, %c0_i32_1 : i32, i32, i32, i32, i32
  }
  func.func @transform_4(%arg0: i32, %arg1: i32) -> (i32, i32) {
    %c0_i32 = arith.constant 0 : i32
    %c0_i32_0 = arith.constant 0 : i32
    return %c0_i32, %arg1 : i32, i32
  }
  func.func @transform_5(%arg0: i32, %arg1: i32) -> (i32, i32, i32) {
    %c0_i32 = arith.constant 0 : i32
    %c0_i32_0 = arith.constant 0 : i32
    return %arg0, %c0_i32, %arg1 : i32, i32, i32
  }
}

</mosaic_0001>

<llo_original>
// kernel: basic_block_forward.2
$region0: #{basic_block_forward.2}
  #allocation0 [shape = 'u32[]', space=smem, size = 0x4, offset = 0x4, fixed_abs, tag = 'smem constant byte address 0x4 - core index']
  #allocation1 [shape = 'u32[144,128]{1,0:T(1,128)}', space=vmem, size = 0x12000, scoped, tag = 'internal scratch']
  %s0 = inlined_call_operand.vmem [shape: bf16[2,36,9,8], index: 0, kind: input, shape index: {}]
  %s1 = inlined_call_operand.vmem [shape: bf16[72,8], index: 1, kind: input, shape index: {}]
  %s2 = inlined_call_operand.vmem [shape: f32[1,8], index: 2, kind: input, shape index: {}]
  %s3 = inlined_call_operand.vmem [shape: bf16[2,64,8], index: 3, kind: output, shape index: {}]
  %s4 = sld [smem:[#allocation0]]
  $region45: #{basic_block_forward.2} parent=0
    _
  %s6 = ssub.s32 1, %s4
  %s7 = scalar_select 0, %s6, %s4
  loop: start=0, step=1, limit=4
  $region2: #{basic_block_forward.2} parent=0 // loop_pre_header
    _
  $region3: #{basic_block_forward.2} parent=0 // loop_header
    %s9 = sphi 0, %s13
    %p10 = scmp.ge.s32.totalorder %s9, 4
    %s16 = sphi 0, %s28
    %s17 = sphi 0, %s24
    %s18 = sphi 0, %s16
    %s19 = sphi 0, %s17
    %s20 = sphi 0, %s18
    %s21 = sphi 0, %s19
    %s31 = sphi 0, %s33
    %s34 = sphi 0, %s31
    %s35 = sphi 0, %s34
    %s51 = sphi 0, %s35
    %s57 = sphi 0, %s59
    %s60 = sphi 0, %s57
    %s61 = sphi 0, %s60
    %s77 = sphi 0, %s61
    %s83 = sphi 0, %s85
    %s86 = sphi 0, %s83
    %s87 = sphi 0, %s86
    %s103 = sphi 0, %s87
    %s111 = sphi 0, %s113
    %s114 = sphi 0, %s111
    %s115 = sphi 0, %s114
    %s131 = sphi 0, %s115
  $region4: #{basic_block_forward.2} parent=0 // loop_header_branch
    %12 = sbr.rel (%p10) target = $region8
  $region5: #{basic_block_forward.2} parent=0 // loop_body
    %s14 = ssub.s32 %s9, 1
    %s15 = ssub.s32 %s9, 2
    %s22 = sadd.s32 1, %s17
    %p23 = scmp.ge.s32.totalorder %s22, 1
    %s24 = scalar_select %p23, 0, %s22
    %s25 = sadd.s32 1, %s16
    %s26 = scalar_select %p23, %s25, %s16
    %p27 = scmp.ge.s32.totalorder %s26, 2
    %s28 = scalar_select %p27, 0, %s26
    %s29 = ssub.s32 %s16, %s28
    %p30 = scmp.eq.s32.totalorder %s29, 0
    %s32 = sadd.s32 %s31, 1
    %s33 = scalar_select %p30, %s31, %s32
    %p36 = pneg %p30
    %p37 = scmp.eq.s32.totalorder %s9, 1
    %p38 = por %p36, %p37
    %p39 = scmp.ne.s32.totalorder %s31, %s34
    %p40 = scmp.eq.s32.totalorder %s9, 0
    %p41 = por %p39, %p40
    %p42 = scmp.ne.s32.totalorder %s31, %s34
    %p43 = scmp.eq.s32.totalorder %s14, 1
    %p44 = por %p42, %p43
    %p45 = scmp.ne.s32.totalorder %s34, %s35
    %p46 = scmp.eq.s32.totalorder %s14, 0
    %p47 = por %p45, %p46
    %p48 = scmp.ne.s32.totalorder %s34, %s35
    %p49 = scmp.eq.s32.totalorder %s15, 1
    %p50 = por %p48, %p49
    %p52 = scmp.ne.s32.totalorder %s35, %s51
    %p53 = scmp.eq.s32.totalorder %s15, 0
    %p54 = por %p52, %p53
    %s55 = ssub.s32 %s17, %s24
    %p56 = scmp.eq.s32.totalorder %s55, 0
    %s58 = sadd.s32 %s57, 1
    %s59 = scalar_select %p56, %s57, %s58
    %p62 = pneg %p56
    %p63 = scmp.eq.s32.totalorder %s9, 1
    %p64 = por %p62, %p63
    %p65 = scmp.ne.s32.totalorder %s57, %s60
    %p66 = scmp.eq.s32.totalorder %s9, 0
    %p67 = por %p65, %p66
    %p68 = scmp.ne.s32.totalorder %s57, %s60
    %p69 = scmp.eq.s32.totalorder %s14, 1
    %p70 = por %p68, %p69
    %p71 = scmp.ne.s32.totalorder %s60, %s61
    %p72 = scmp.eq.s32.totalorder %s14, 0
    %p73 = por %p71, %p72
    %p74 = scmp.ne.s32.totalorder %s60, %s61
    %p75 = scmp.eq.s32.totalorder %s15, 1
    %p76 = por %p74, %p75
    %p78 = scmp.ne.s32.totalorder %s61, %s77
    %p79 = scmp.eq.s32.totalorder %s15, 0
    %p80 = por %p78, %p79
    %s81 = ssub.s32 %s17, %s24
    %p82 = scmp.eq.s32.totalorder %s81, 0
    %s84 = sadd.s32 %s83, 1
    %s85 = scalar_select %p82, %s83, %s84
    %p88 = pneg %p82
    %p89 = scmp.eq.s32.totalorder %s9, 1
    %p90 = por %p88, %p89
    %p91 = scmp.ne.s32.totalorder %s83, %s86
    %p92 = scmp.eq.s32.totalorder %s9, 0
    %p93 = por %p91, %p92
    %p94 = scmp.ne.s32.totalorder %s83, %s86
    %p95 = scmp.eq.s32.totalorder %s14, 1
    %p96 = por %p94, %p95
    %p97 = scmp.ne.s32.totalorder %s86, %s87
    %p98 = scmp.eq.s32.totalorder %s14, 0
    %p99 = por %p97, %p98
    %p100 = scmp.ne.s32.totalorder %s86, %s87
    %p101 = scmp.eq.s32.totalorder %s15, 1
    %p102 = por %p100, %p101
    %p104 = scmp.ne.s32.totalorder %s87, %s103
    %p105 = scmp.eq.s32.totalorder %s15, 0
    %p106 = por %p104, %p105
    %s107 = ssub.s32 %s16, %s28
    %s108 = ssub.s32 %s17, %s24
    %s109 = sor.u32 %s107, %s108
    %p110 = scmp.eq.s32.totalorder %s109, 0
    %s112 = sadd.s32 %s111, 1
    %s113 = scalar_select %p110, %s111, %s112
    %p116 = pneg %p110
    %p117 = scmp.eq.s32.totalorder %s9, 1
    %p118 = por %p116, %p117
    %p119 = scmp.ne.s32.totalorder %s111, %s114
    %p120 = scmp.eq.s32.totalorder %s9, 0
    %p121 = por %p119, %p120
    %p122 = scmp.ne.s32.totalorder %s111, %s114
    %p123 = scmp.eq.s32.totalorder %s14, 1
    %p124 = por %p122, %p123
    %p125 = scmp.ne.s32.totalorder %s114, %s115
    %p126 = scmp.eq.s32.totalorder %s14, 0
    %p127 = por %p125, %p126
    %p128 = scmp.ne.s32.totalorder %s114, %s115
    %p129 = scmp.eq.s32.totalorder %s15, 1
    %p130 = por %p128, %p129
    %p132 = scmp.ne.s32.totalorder %s115, %s131
    %p133 = scmp.eq.s32.totalorder %s15, 0
    %p134 = por %p132, %p133
    %p135 = scmp.le.s32.totalorder 1, %s9
    %p136 = scmp.lt.s32.totalorder %s9, 3
    %p137 = pnand %p135, %p136
    %p138 = pneg %p137
    // Predicated region
    $region9: #{basic_block_forward.2} parent=5 // pred_check
      _
    $region10: #{basic_block_forward.2} parent=5 // pred_check_branch
      %140 = sbr.rel (%p137) target = $region12
    $region11: #{basic_block_forward.2} parent=5 // pred_region
      %s141 = ssub.s32 %s9, 1
      // Predicated region
      $region13: #{basic_block_forward.2} parent=11 // pred_check
        %p142 = pneg %p73
      $region14: #{basic_block_forward.2} parent=11 // pred_check_branch
        %144 = sbr.rel (%p142) target = $region16
      $region15: #{basic_block_forward.2} parent=11 // pred_region
        %p145 = scmp.lt.s32.totalorder %s19, 0
        %s146 = scalar_select %p145, %s19, 0
        %s147 = smul.addr %s146, 4
        %s148 = scalar_lea.vmem %s1, %s147
      $region16: #{basic_block_forward.2} parent=11 // pred_fallthru
        _
      // Predicated region
      $region17: #{basic_block_forward.2} parent=11 // pred_check
        %p149 = pneg %p99
      $region18: #{basic_block_forward.2} parent=11 // pred_check_branch
        %151 = sbr.rel (%p149) target = $region20
      $region19: #{basic_block_forward.2} parent=11 // pred_region
        %p152 = scmp.lt.s32.totalorder %s19, 0
        %s153 = scalar_select %p152, %s19, 0
        %s154 = scalar_lea.vmem %s2, %s153
      $region20: #{basic_block_forward.2} parent=11 // pred_fallthru
        _
    $region12: #{basic_block_forward.2} parent=5 // pred_fallthru
      _
    %p155 = scmp.lt.s32.totalorder %s9, 2
    // Predicated region
    $region21: #{basic_block_forward.2} parent=5 // pred_check
      %p156 = pneg %p155
    $region22: #{basic_block_forward.2} parent=5 // pred_check_branch
      %158 = sbr.rel (%p156) target = $region24
    $region23: #{basic_block_forward.2} parent=5 // pred_region
      // Predicated region
      $region25: #{basic_block_forward.2} parent=23 // pred_check
        %p159 = pneg %p41
      $region26: #{basic_block_forward.2} parent=23 // pred_check_branch
        %161 = sbr.rel (%p159) target = $region28
      $region27: #{basic_block_forward.2} parent=23 // pred_region
        %p162 = scmp.lt.s32.totalorder %s16, 1
        %s163 = scalar_select %p162, %s16, 1
        %s164 = smul.addr %s163, 72
        %s165 = smul.addr %s164, 4
        %s166 = scalar_lea.vmem %s0, %s165
      $region28: #{basic_block_forward.2} parent=23 // pred_fallthru
        _
    $region24: #{basic_block_forward.2} parent=5 // pred_fallthru
      _
    %p167 = scmp.le.s32.totalorder 1, %s9
    %p168 = scmp.lt.s32.totalorder %s9, 3
    %p169 = pnand %p167, %p168
    %p170 = pneg %p169
    // Predicated region
    $region29: #{basic_block_forward.2} parent=5 // pred_check
      _
    $region30: #{basic_block_forward.2} parent=5 // pred_check_branch
      %172 = sbr.rel (%p169) target = $region32
    $region31: #{basic_block_forward.2} parent=5 // pred_region
      %s173 = ssub.s32 %s9, 1
      %p174 = scmp.lt.s32.totalorder %s18, 1
      %s175 = scalar_select %p174, %s18, 1
      %s176 = smul.addr %s175, 72
      %s177 = smul.addr %s176, 4
      %s178 = scalar_lea.vmem %s0, %s177
      %p179 = pneg %p47
      %p180 = pneg %p44
      %p181 = scmp.lt.s32.totalorder %s19, 0
      %s182 = scalar_select %p181, %s19, 0
      %s183 = smul.addr %s182, 4
      %s184 = scalar_lea.vmem %s1, %s183
      %p185 = pneg %p73
      %p186 = pneg %p70
      %p187 = scmp.lt.s32.totalorder %s19, 0
      %s188 = scalar_select %p187, %s19, 0
      %s189 = scalar_lea.vmem %s2, %s188
      %p190 = pneg %p99
      %p191 = pneg %p96
      %p192 = pneg %p127
      %p193 = pneg %p124
      %p194 = scmp.lt.s32.totalorder %s18, 1
      %s195 = scalar_select %p194, %s18, 1
      %p196 = scmp.lt.s32.totalorder %s19, 0
      %s197 = scalar_select %p196, %s19, 0
      %s198 = smul.addr %s195, 8
      %s199 = sadd.s32 %s197, %s198
      %s200 = smul.addr %s199, 4
      %s201 = scalar_lea.vmem %s3, %s200
      %p202 = scmp.lt.s32.totalorder %s18, 1
      %s203 = scalar_select %p202, %s18, 1
      %s204 = smul.addr %s203, 72
      %s205 = smul.addr %s204, 4
      %s206 = scalar_lea.vmem %s0, %s205
      %p207 = scmp.lt.s32.totalorder %s19, 0
      %s208 = scalar_select %p207, %s19, 0
      %s209 = smul.addr %s208, 4
      %s210 = scalar_lea.vmem %s1, %s209
      %p211 = scmp.lt.s32.totalorder %s19, 0
      %s212 = scalar_select %p211, %s19, 0
      %s213 = scalar_lea.vmem %s2, %s212
      %p214 = scmp.lt.s32.totalorder %s18, 1
      %s215 = scalar_select %p214, %s18, 1
      %p216 = scmp.lt.s32.totalorder %s19, 0
      %s217 = scalar_select %p216, %s19, 0
      %s218 = smul.addr %s215, 8
      %s219 = sadd.s32 %s217, %s218
      %s220 = smul.addr %s219, 4
      %s221 = scalar_lea.vmem %s3, %s220
      %v223 = vld [vmem:[%s206] sm:$0xf]
      %v224 = vld [vmem:[%s206 + $0x4] sm:$0x1]
      %v225 = vld [vmem:[%s206 + $0x8] sm:$0xf]
      %v226 = vld [vmem:[%s206 + $0xc] sm:$0x1]
      %v227 = vld [vmem:[%s206 + $0x10] sm:$0xf]
      %v228 = vld [vmem:[%s206 + $0x14] sm:$0x1]
      %v229 = vld [vmem:[%s206 + $0x18] sm:$0xf]
      %v230 = vld [vmem:[%s206 + $0x1c] sm:$0x1]
      %v231 = vld [vmem:[%s206 + $0x20] sm:$0xf]
      %v232 = vld [vmem:[%s206 + $0x24] sm:$0x1]
      %v233 = vld [vmem:[%s206 + $0x28] sm:$0xf]
      %v234 = vld [vmem:[%s206 + $0x2c] sm:$0x1]
      %v235 = vld [vmem:[%s206 + $0x30] sm:$0xf]
      %v236 = vld [vmem:[%s206 + $0x34] sm:$0x1]
      %v237 = vld [vmem:[%s206 + $0x38] sm:$0xf]
      %v238 = vld [vmem:[%s206 + $0x3c] sm:$0x1]
      %v239 = vld [vmem:[%s206 + $0x40] sm:$0xf]
      %v240 = vld [vmem:[%s206 + $0x44] sm:$0x1]
      %v241 = vld [vmem:[%s206 + $0x48] sm:$0xf]
      %v242 = vld [vmem:[%s206 + $0x50] sm:$0xf]
      %v243 = vld [vmem:[%s206 + $0x58] sm:$0xf]
      %v244 = vld [vmem:[%s206 + $0x60] sm:$0xf]
      %v245 = vld [vmem:[%s206 + $0x68] sm:$0xf]
      %v246 = vld [vmem:[%s206 + $0x70] sm:$0xf]
      %v247 = vld [vmem:[%s206 + $0x78] sm:$0xf]
      %v248 = vld [vmem:[%s206 + $0x80] sm:$0xf]
      %v249 = vld [vmem:[%s206 + $0x88] sm:$0xf]
      %v250 = vld [vmem:[%s206 + $0x90] sm:$0xf]
      %v251 = vld [vmem:[%s206 + $0x94] sm:$0x1]
      %v252 = vld [vmem:[%s206 + $0x98] sm:$0xf]
      %v253 = vld [vmem:[%s206 + $0x9c] sm:$0x1]
      %v254 = vld [vmem:[%s206 + $0xa0] sm:$0xf]
      %v255 = vld [vmem:[%s206 + $0xa4] sm:$0x1]
      %v256 = vld [vmem:[%s206 + $0xa8] sm:$0xf]
      %v257 = vld [vmem:[%s206 + $0xac] sm:$0x1]
      %v258 = vld [vmem:[%s206 + $0xb0] sm:$0xf]
      %v259 = vld [vmem:[%s206 + $0xb4] sm:$0x1]
      %v260 = vld [vmem:[%s206 + $0xb8] sm:$0xf]
      %v261 = vld [vmem:[%s206 + $0xbc] sm:$0x1]
      %v262 = vld [vmem:[%s206 + $0xc0] sm:$0xf]
      %v263 = vld [vmem:[%s206 + $0xc4] sm:$0x1]
      %v264 = vld [vmem:[%s206 + $0xc8] sm:$0xf]
      %v265 = vld [vmem:[%s206 + $0xcc] sm:$0x1]
      %v266 = vld [vmem:[%s206 + $0xd8] sm:$0xf]
      %v267 = vld [vmem:[%s206 + $0xe0] sm:$0xf]
      %v268 = vld [vmem:[%s206 + $0xe8] sm:$0xf]
      %v269 = vld [vmem:[%s206 + $0xf0] sm:$0xf]
      %v270 = vld [vmem:[%s206 + $0xf8] sm:$0xf]
      %v271 = vld [vmem:[%s206 + $0x100] sm:$0xf]
      %v272 = vld [vmem:[%s206 + $0x108] sm:$0xf]
      %v273 = vld [vmem:[%s206 + $0x110] sm:$0xf]
      %v274 = vld [vmem:[%s210] sm:$0xf]
      %v275 = vld [vmem:[%s210 + $0x4] sm:$0xf]
      %v284 = vunpack.c.l.b16 %v241
      %v285 = vunpack.c.l.b16 %v242
      %v286 = vunpack.c.l.b16 %v243
      %v287 = vunpack.c.l.b16 %v244
      %v288 = vunpack.c.l.b16 %v245
      %v289 = vunpack.c.l.b16 %v246
      %v290 = vunpack.c.l.b16 %v247
      %v291 = vunpack.c.l.b16 %v248
      %v292 = vpack.c.b16 %v285, %v284
      %v293 = vpack.c.b16 %v287, %v286
      %v294 = vpack.c.b16 %v289, %v288
      %v295 = vpack.c.b16 %v291, %v290
      %vm296 = vcmask 64512
      %v298 = vsel %vm296, %v292, 0
      %v301 = vsel %vm296, %v293, 0
      %v304 = vsel %vm296, %v294, 0
      %v307 = vsel %vm296, %v295, 0
      %vm309 = vcmask 1043456
      %v311 = vsel %vm309, %v275, 0
      %313 = vmatprep.subr.bf16.mxu0 0
      %314 = vmatpush1.bf16.msra.mxu0 0
      %315 = vmatprep.subr.bf16.mxu0 0
      %316 = vmatpush1.bf16.msra.mxu0 0
      %317 = vmatprep.subr.bf16.mxu0 0
      %318 = vmatpush1.bf16.msra.mxu0 0
      %319 = vmatprep.subr.bf16.mxu0 0
      %320 = vmatpush1.bf16.msra.mxu0 0
      %321 = vmatprep.subr.bf16.mxu0 0
      %322 = vmatpush1.bf16.msra.mxu0 0
      %323 = vmatprep.subr.bf16.mxu0 0
      %324 = vmatpush1.bf16.msra.mxu0 0
      %325 = vmatprep.subr.bf16.mxu0 0
      %326 = vmatpush1.bf16.msra.mxu0 0
      %327 = vmatprep.subr.bf16.mxu0 0
      %328 = vmatpush1.bf16.msra.mxu0 %v311
      %329 = vmatprep.subr.bf16.mxu0 0
      %330 = vmatpush2.bf16.msra.mxu0 0
      %331 = vmatprep.subr.bf16.mxu0 0
      %332 = vmatpush2.bf16.msra.mxu0 0
      %333 = vmatprep.subr.bf16.mxu0 0
      %334 = vmatpush2.bf16.msra.mxu0 0
      %335 = vmatprep.subr.bf16.mxu0 0
      %336 = vmatpush2.bf16.msra.mxu0 0
      %337 = vmatprep.subr.bf16.mxu0 0
      %338 = vmatpush2.bf16.msra.mxu0 0
      %339 = vmatprep.subr.bf16.mxu0 0
      %340 = vmatpush2.bf16.msra.mxu0 0
      %341 = vmatprep.subr.bf16.mxu0 0
      %342 = vmatpush2.bf16.msra.mxu0 0
      %343 = vmatprep.subr.bf16.mxu0 0
      %344 = vmatpush2.bf16.msra.mxu0 0
      %345 = vmatprep.mubr.bf16.mxu0 0
      %346 = vmatmul.mubr.bf16.gmra.mxu0 %v298
      %v347 = vpop.f32.mrf.mxu0
      %v348 = vadd.f32 0.0, %v347
      %v349 = vpop.f32.mrf.mxu0
      %v350 = vpop.f32.mrf.mxu0
      %v351 = vadd.f32 0.0, %v350
      %v352 = vpop.f32.mrf.mxu0
      %353 = vmatprep.mubr.bf16.mxu0 0
      %354 = vmatmul.mubr.bf16.gmra.mxu0 %v301
      %v355 = vpop.f32.mrf.mxu0
      %v356 = vadd.f32 0.0, %v355
      %v357 = vpop.f32.mrf.mxu0
      %v358 = vpop.f32.mrf.mxu0
      %v359 = vadd.f32 0.0, %v358
      %v360 = vpop.f32.mrf.mxu0
      %361 = vmatprep.mubr.bf16.mxu0 0
      %362 = vmatmul.mubr.bf16.gmra.mxu0 %v304
      %v363 = vpop.f32.mrf.mxu0
      %v364 = vadd.f32 0.0, %v363
      %v365 = vpop.f32.mrf.mxu0
      %v366 = vpop.f32.mrf.mxu0
      %v367 = vadd.f32 0.0, %v366
      %v368 = vpop.f32.mrf.mxu0
      %369 = vmatprep.mubr.bf16.mxu0 0
      %370 = vmatmul.mubr.bf16.gmra.mxu0 %v307
      %v371 = vpop.f32.mrf.mxu0
      %v372 = vadd.f32 0.0, %v371
      %v373 = vpop.f32.mrf.mxu0
      %v374 = vpop.f32.mrf.mxu0
      %v375 = vadd.f32 0.0, %v374
      %v376 = vpop.f32.mrf.mxu0
      %377 = vdwg.mxu0
      %v386 = vunpack.c.l.b16 %v223
      %v387 = vunpack.c.l.b16 %v225
      %v388 = vunpack.c.l.b16 %v227
      %v389 = vunpack.c.l.b16 %v229
      %v390 = vunpack.c.l.b16 %v231
      %v391 = vunpack.c.l.b16 %v233
      %v392 = vunpack.c.l.b16 %v235
      %v393 = vunpack.c.l.b16 %v237
      %v394 = vpack.c.b16 %v387, %v386
      %v395 = vpack.c.b16 %v389, %v388
      %v396 = vpack.c.b16 %v391, %v390
      %v397 = vpack.c.b16 %v393, %v392
      %v399 = vsel %vm296, %v394, 0
      %v402 = vsel %vm296, %v395, 0
      %v405 = vsel %vm296, %v396, 0
      %v408 = vsel %vm296, %v397, 0
      %v411 = vsel %vm309, %v274, 0
      %413 = vmatprep.subr.bf16.mxu0 0
      %414 = vmatpush1.bf16.msra.mxu0 0
      %415 = vmatprep.subr.bf16.mxu0 0
      %416 = vmatpush1.bf16.msra.mxu0 0
      %417 = vmatprep.subr.bf16.mxu0 0
      %418 = vmatpush1.bf16.msra.mxu0 0
      %419 = vmatprep.subr.bf16.mxu0 0
      %420 = vmatpush1.bf16.msra.mxu0 0
      %421 = vmatprep.subr.bf16.mxu0 0
      %422 = vmatpush1.bf16.msra.mxu0 0
      %423 = vmatprep.subr.bf16.mxu0 0
      %424 = vmatpush1.bf16.msra.mxu0 0
      %425 = vmatprep.subr.bf16.mxu0 0
      %426 = vmatpush1.bf16.msra.mxu0 0
      %427 = vmatprep.subr.bf16.mxu0 0
      %428 = vmatpush1.bf16.msra.mxu0 %v411
      %429 = vmatprep.subr.bf16.mxu0 0
      %430 = vmatpush2.bf16.msra.mxu0 0
      %431 = vmatprep.subr.bf16.mxu0 0
      %432 = vmatpush2.bf16.msra.mxu0 0
      %433 = vmatprep.subr.bf16.mxu0 0
      %434 = vmatpush2.bf16.msra.mxu0 0
      %435 = vmatprep.subr.bf16.mxu0 0
      %436 = vmatpush2.bf16.msra.mxu0 0
      %437 = vmatprep.subr.bf16.mxu0 0
      %438 = vmatpush2.bf16.msra.mxu0 0
      %439 = vmatprep.subr.bf16.mxu0 0
      %440 = vmatpush2.bf16.msra.mxu0 0
      %441 = vmatprep.subr.bf16.mxu0 0
      %442 = vmatpush2.bf16.msra.mxu0 0
      %443 = vmatprep.subr.bf16.mxu0 0
      %444 = vmatpush2.bf16.msra.mxu0 0
      %445 = vmatprep.mubr.bf16.mxu0 0
      %446 = vmatmul.mubr.bf16.gmra.mxu0 %v399
      %v447 = vpop.f32.mrf.mxu0
      %v448 = vadd.f32 %v348, %v447
      %v449 = vpop.f32.mrf.mxu0
      %v450 = vpop.f32.mrf.mxu0
      %v451 = vadd.f32 %v351, %v450
      %v452 = vpop.f32.mrf.mxu0
      %453 = vmatprep.mubr.bf16.mxu0 0
      %454 = vmatmul.mubr.bf16.gmra.mxu0 %v402
      %v455 = vpop.f32.mrf.mxu0
      %v456 = vadd.f32 %v356, %v455
      %v457 = vpop.f32.mrf.mxu0
      %v458 = vpop.f32.mrf.mxu0
      %v459 = vadd.f32 %v359, %v458
      %v460 = vpop.f32.mrf.mxu0
      %461 = vmatprep.mubr.bf16.mxu0 0
      %462 = vmatmul.mubr.bf16.gmra.mxu0 %v405
      %v463 = vpop.f32.mrf.mxu0
      %v464 = vadd.f32 %v364, %v463
      %v465 = vpop.f32.mrf.mxu0
      %v466 = vpop.f32.mrf.mxu0
      %v467 = vadd.f32 %v367, %v466
      %v468 = vpop.f32.mrf.mxu0
      %469 = vmatprep.mubr.bf16.mxu0 0
      %470 = vmatmul.mubr.bf16.gmra.mxu0 %v408
      %v471 = vpop.f32.mrf.mxu0
      %v472 = vadd.f32 %v372, %v471
      %v473 = vpop.f32.mrf.mxu0
      %v474 = vpop.f32.mrf.mxu0
      %v475 = vadd.f32 %v375, %v474
      %v476 = vpop.f32.mrf.mxu0
      %477 = vdwg.mxu0
      %vm478 = vsmask.f32 3328
      %vm479 = vsmask.f32 7440
      %vm480 = vmor %vm478, %vm479
      %v482 = vshrl.u32 %v223, 16
      %v484 = vrot.slane %v482, 4
      %v485 = vshll.u32 %v223, 16
      %v487 = vrot.slane %v485, 5
      %v488 = vor.u32 %v484, %v487
      %v489 = vrot.slane %v488, 4
      %v491 = vshll.u32 %v224, 16
      %v493 = vrot.slane %v491, 5
      %v494 = vsel %vm480, %v489, %v493
      %v496 = vshrl.u32 %v225, 16
      %v498 = vrot.slane %v496, 4
      %v499 = vshll.u32 %v225, 16
      %v501 = vrot.slane %v499, 5
      %v502 = vor.u32 %v498, %v501
      %v503 = vrot.slane %v502, 4
      %v505 = vshll.u32 %v226, 16
      %v507 = vrot.slane %v505, 5
      %v508 = vsel %vm480, %v503, %v507
      %v510 = vshrl.u32 %v227, 16
      %v512 = vrot.slane %v510, 4
      %v513 = vshll.u32 %v227, 16
      %v515 = vrot.slane %v513, 5
      %v516 = vor.u32 %v512, %v515
      %v517 = vrot.slane %v516, 4
      %v519 = vshll.u32 %v228, 16
      %v521 = vrot.slane %v519, 5
      %v522 = vsel %vm480, %v517, %v521
      %v524 = vshrl.u32 %v229, 16
      %v526 = vrot.slane %v524, 4
      %v527 = vshll.u32 %v229, 16
      %v529 = vrot.slane %v527, 5
      %v530 = vor.u32 %v526, %v529
      %v531 = vrot.slane %v530, 4
      %v533 = vshll.u32 %v230, 16
      %v535 = vrot.slane %v533, 5
      %v536 = vsel %vm480, %v531, %v535
      %v538 = vshrl.u32 %v231, 16
      %v540 = vrot.slane %v538, 4
      %v541 = vshll.u32 %v231, 16
      %v543 = vrot.slane %v541, 5
      %v544 = vor.u32 %v540, %v543
      %v545 = vrot.slane %v544, 4
      %v547 = vshll.u32 %v232, 16
      %v549 = vrot.slane %v547, 5
      %v550 = vsel %vm480, %v545, %v549
      %v552 = vshrl.u32 %v233, 16
      %v554 = vrot.slane %v552, 4
      %v555 = vshll.u32 %v233, 16
      %v557 = vrot.slane %v555, 5
      %v558 = vor.u32 %v554, %v557
      %v559 = vrot.slane %v558, 4
      %v561 = vshll.u32 %v234, 16
      %v563 = vrot.slane %v561, 5
      %v564 = vsel %vm480, %v559, %v563
      %v566 = vshrl.u32 %v235, 16
      %v568 = vrot.slane %v566, 4
      %v569 = vshll.u32 %v235, 16
      %v571 = vrot.slane %v569, 5
      %v572 = vor.u32 %v568, %v571
      %v573 = vrot.slane %v572, 4
      %v575 = vshll.u32 %v236, 16
      %v577 = vrot.slane %v575, 5
      %v578 = vsel %vm480, %v573, %v577
      %v580 = vshrl.u32 %v237, 16
      %v582 = vrot.slane %v580, 4
      %v583 = vshll.u32 %v237, 16
      %v585 = vrot.slane %v583, 5
      %v586 = vor.u32 %v582, %v585
      %v587 = vrot.slane %v586, 4
      %v589 = vshll.u32 %v238, 16
      %v591 = vrot.slane %v589, 5
      %v592 = vsel %vm480, %v587, %v591
      %v593 = vld [vmem:[%s210 + $0x8] sm:$0xf]
      %v594 = vunpack.c.l.b16 %v494
      %v595 = vunpack.c.l.b16 %v508
      %v596 = vunpack.c.l.b16 %v522
      %v597 = vunpack.c.l.b16 %v536
      %v598 = vunpack.c.l.b16 %v550
      %v599 = vunpack.c.l.b16 %v564
      %v600 = vunpack.c.l.b16 %v578
      %v601 = vunpack.c.l.b16 %v592
      %v602 = vpack.c.b16 %v595, %v594
      %v603 = vpack.c.b16 %v597, %v596
      %v604 = vpack.c.b16 %v599, %v598
      %v605 = vpack.c.b16 %v601, %v600
      %v607 = vsel %vm296, %v602, 0
      %v610 = vsel %vm296, %v603, 0
      %v613 = vsel %vm296, %v604, 0
      %v616 = vsel %vm296, %v605, 0
      %v619 = vsel %vm309, %v593, 0
      %621 = vmatprep.subr.bf16.mxu0 0
      %622 = vmatpush1.bf16.msra.mxu0 0
      %623 = vmatprep.subr.bf16.mxu0 0
      %624 = vmatpush1.bf16.msra.mxu0 0
      %625 = vmatprep.subr.bf16.mxu0 0
      %626 = vmatpush1.bf16.msra.mxu0 0
      %627 = vmatprep.subr.bf16.mxu0 0
      %628 = vmatpush1.bf16.msra.mxu0 0
      %629 = vmatprep.subr.bf16.mxu0 0
      %630 = vmatpush1.bf16.msra.mxu0 0
      %631 = vmatprep.subr.bf16.mxu0 0
      %632 = vmatpush1.bf16.msra.mxu0 0
      %633 = vmatprep.subr.bf16.mxu0 0
      %634 = vmatpush1.bf16.msra.mxu0 0
      %635 = vmatprep.subr.bf16.mxu0 0
      %636 = vmatpush1.bf16.msra.mxu0 %v619
      %637 = vmatprep.subr.bf16.mxu0 0
      %638 = vmatpush2.bf16.msra.mxu0 0
      %639 = vmatprep.subr.bf16.mxu0 0
      %640 = vmatpush2.bf16.msra.mxu0 0
      %641 = vmatprep.subr.bf16.mxu0 0
      %642 = vmatpush2.bf16.msra.mxu0 0
      %643 = vmatprep.subr.bf16.mxu0 0
      %644 = vmatpush2.bf16.msra.mxu0 0
      %645 = vmatprep.subr.bf16.mxu0 0
      %646 = vmatpush2.bf16.msra.mxu0 0
      %647 = vmatprep.subr.bf16.mxu0 0
      %648 = vmatpush2.bf16.msra.mxu0 0
      %649 = vmatprep.subr.bf16.mxu0 0
      %650 = vmatpush2.bf16.msra.mxu0 0
      %651 = vmatprep.subr.bf16.mxu0 0
      %652 = vmatpush2.bf16.msra.mxu0 0
      %653 = vmatprep.mubr.bf16.mxu0 0
      %654 = vmatmul.mubr.bf16.gmra.mxu0 %v607
      %v655 = vpop.f32.mrf.mxu0
      %v656 = vadd.f32 0.0, %v655
      %v657 = vpop.f32.mrf.mxu0
      %v658 = vpop.f32.mrf.mxu0
      %v659 = vadd.f32 0.0, %v658
      %v660 = vpop.f32.mrf.mxu0
      %661 = vmatprep.mubr.bf16.mxu0 0
      %662 = vmatmul.mubr.bf16.gmra.mxu0 %v610
      %v663 = vpop.f32.mrf.mxu0
      %v664 = vadd.f32 0.0, %v663
      %v665 = vpop.f32.mrf.mxu0
      %v666 = vpop.f32.mrf.mxu0
      %v667 = vadd.f32 0.0, %v666
      %v668 = vpop.f32.mrf.mxu0
      %669 = vmatprep.mubr.bf16.mxu0 0
      %670 = vmatmul.mubr.bf16.gmra.mxu0 %v613
      %v671 = vpop.f32.mrf.mxu0
      %v672 = vadd.f32 0.0, %v671
      %v673 = vpop.f32.mrf.mxu0
      %v674 = vpop.f32.mrf.mxu0
      %v675 = vadd.f32 0.0, %v674
      %v676 = vpop.f32.mrf.mxu0
      %677 = vmatprep.mubr.bf16.mxu0 0
      %678 = vmatmul.mubr.bf16.gmra.mxu0 %v616
      %v679 = vpop.f32.mrf.mxu0
      %v680 = vadd.f32 0.0, %v679
      %v681 = vpop.f32.mrf.mxu0
      %v682 = vpop.f32.mrf.mxu0
      %v683 = vadd.f32 0.0, %v682
      %v684 = vpop.f32.mrf.mxu0
      %685 = vdwg.mxu0
      %v686 = vadd.f32 %v448, %v656
      %v687 = vadd.f32 %v451, %v659
      %v688 = vadd.f32 %v456, %v664
      %v689 = vadd.f32 %v459, %v667
      %v690 = vadd.f32 %v464, %v672
      %v691 = vadd.f32 %v467, %v675
      %v692 = vadd.f32 %v472, %v680
      %v693 = vadd.f32 %v475, %v683
      %v694 = vld [vmem:[%s210 + $0xc] sm:$0xf]
      %v703 = vunpack.c.l.b16 %v250
      %v704 = vunpack.c.l.b16 %v252
      %v705 = vunpack.c.l.b16 %v254
      %v706 = vunpack.c.l.b16 %v256
      %v707 = vunpack.c.l.b16 %v258
      %v708 = vunpack.c.l.b16 %v260
      %v709 = vunpack.c.l.b16 %v262
      %v710 = vunpack.c.l.b16 %v264
      %v711 = vpack.c.b16 %v704, %v703
      %v712 = vpack.c.b16 %v706, %v705
      %v713 = vpack.c.b16 %v708, %v707
      %v714 = vpack.c.b16 %v710, %v709
      %v716 = vsel %vm296, %v711, 0
      %v719 = vsel %vm296, %v712, 0
      %v722 = vsel %vm296, %v713, 0
      %v725 = vsel %vm296, %v714, 0
      %v728 = vsel %vm309, %v694, 0
      %730 = vmatprep.subr.bf16.mxu0 0
      %731 = vmatpush1.bf16.msra.mxu0 0
      %732 = vmatprep.subr.bf16.mxu0 0
      %733 = vmatpush1.bf16.msra.mxu0 0
      %734 = vmatprep.subr.bf16.mxu0 0
      %735 = vmatpush1.bf16.msra.mxu0 0
      %736 = vmatprep.subr.bf16.mxu0 0
      %737 = vmatpush1.bf16.msra.mxu0 0
      %738 = vmatprep.subr.bf16.mxu0 0
      %739 = vmatpush1.bf16.msra.mxu0 0
      %740 = vmatprep.subr.bf16.mxu0 0
      %741 = vmatpush1.bf16.msra.mxu0 0
      %742 = vmatprep.subr.bf16.mxu0 0
      %743 = vmatpush1.bf16.msra.mxu0 0
      %744 = vmatprep.subr.bf16.mxu0 0
      %745 = vmatpush1.bf16.msra.mxu0 %v728
      %746 = vmatprep.subr.bf16.mxu0 0
      %747 = vmatpush2.bf16.msra.mxu0 0
      %748 = vmatprep.subr.bf16.mxu0 0
      %749 = vmatpush2.bf16.msra.mxu0 0
      %750 = vmatprep.subr.bf16.mxu0 0
      %751 = vmatpush2.bf16.msra.mxu0 0
      %752 = vmatprep.subr.bf16.mxu0 0
      %753 = vmatpush2.bf16.msra.mxu0 0
      %754 = vmatprep.subr.bf16.mxu0 0
      %755 = vmatpush2.bf16.msra.mxu0 0
      %756 = vmatprep.subr.bf16.mxu0 0
      %757 = vmatpush2.bf16.msra.mxu0 0
      %758 = vmatprep.subr.bf16.mxu0 0
      %759 = vmatpush2.bf16.msra.mxu0 0
      %760 = vmatprep.subr.bf16.mxu0 0
      %761 = vmatpush2.bf16.msra.mxu0 0
      %762 = vmatprep.mubr.bf16.mxu0 0
      %763 = vmatmul.mubr.bf16.gmra.mxu0 %v716
      %v764 = vpop.f32.mrf.mxu0
      %v765 = vadd.f32 0.0, %v764
      %v766 = vpop.f32.mrf.mxu0
      %v767 = vpop.f32.mrf.mxu0
      %v768 = vadd.f32 0.0, %v767
      %v769 = vpop.f32.mrf.mxu0
      %770 = vmatprep.mubr.bf16.mxu0 0
      %771 = vmatmul.mubr.bf16.gmra.mxu0 %v719
      %v772 = vpop.f32.mrf.mxu0
      %v773 = vadd.f32 0.0, %v772
      %v774 = vpop.f32.mrf.mxu0
      %v775 = vpop.f32.mrf.mxu0
      %v776 = vadd.f32 0.0, %v775
      %v777 = vpop.f32.mrf.mxu0
      %778 = vmatprep.mubr.bf16.mxu0 0
      %779 = vmatmul.mubr.bf16.gmra.mxu0 %v722
      %v780 = vpop.f32.mrf.mxu0
      %v781 = vadd.f32 0.0, %v780
      %v782 = vpop.f32.mrf.mxu0
      %v783 = vpop.f32.mrf.mxu0
      %v784 = vadd.f32 0.0, %v783
      %v785 = vpop.f32.mrf.mxu0
      %786 = vmatprep.mubr.bf16.mxu0 0
      %787 = vmatmul.mubr.bf16.gmra.mxu0 %v725
      %v788 = vpop.f32.mrf.mxu0
      %v789 = vadd.f32 0.0, %v788
      %v790 = vpop.f32.mrf.mxu0
      %v791 = vpop.f32.mrf.mxu0
      %v792 = vadd.f32 0.0, %v791
      %v793 = vpop.f32.mrf.mxu0
      %794 = vdwg.mxu0
      %v795 = vadd.f32 %v686, %v765
      %v796 = vadd.f32 %v687, %v768
      %v797 = vadd.f32 %v688, %v773
      %v798 = vadd.f32 %v689, %v776
      %v799 = vadd.f32 %v690, %v781
      %v800 = vadd.f32 %v691, %v784
      %v801 = vadd.f32 %v692, %v789
      %v802 = vadd.f32 %v693, %v792
      %v803 = vld [vmem:[%s210 + $0x10] sm:$0xf]
      %v812 = vunpack.c.l.b16 %v266
      %v813 = vunpack.c.l.b16 %v267
      %v814 = vunpack.c.l.b16 %v268
      %v815 = vunpack.c.l.b16 %v269
      %v816 = vunpack.c.l.b16 %v270
      %v817 = vunpack.c.l.b16 %v271
      %v818 = vunpack.c.l.b16 %v272
      %v819 = vunpack.c.l.b16 %v273
      %v820 = vpack.c.b16 %v813, %v812
      %v821 = vpack.c.b16 %v815, %v814
      %v822 = vpack.c.b16 %v817, %v816
      %v823 = vpack.c.b16 %v819, %v818
      %v825 = vsel %vm296, %v820, 0
      %v828 = vsel %vm296, %v821, 0
      %v831 = vsel %vm296, %v822, 0
      %v834 = vsel %vm296, %v823, 0
      %v837 = vsel %vm309, %v803, 0
      %839 = vmatprep.subr.bf16.mxu0 0
      %840 = vmatpush1.bf16.msra.mxu0 0
      %841 = vmatprep.subr.bf16.mxu0 0
      %842 = vmatpush1.bf16.msra.mxu0 0
      %843 = vmatprep.subr.bf16.mxu0 0
      %844 = vmatpush1.bf16.msra.mxu0 0
      %845 = vmatprep.subr.bf16.mxu0 0
      %846 = vmatpush1.bf16.msra.mxu0 0
      %847 = vmatprep.subr.bf16.mxu0 0
      %848 = vmatpush1.bf16.msra.mxu0 0
      %849 = vmatprep.subr.bf16.mxu0 0
      %850 = vmatpush1.bf16.msra.mxu0 0
      %851 = vmatprep.subr.bf16.mxu0 0
      %852 = vmatpush1.bf16.msra.mxu0 0
      %853 = vmatprep.subr.bf16.mxu0 0
      %854 = vmatpush1.bf16.msra.mxu0 %v837
      %855 = vmatprep.subr.bf16.mxu0 0
      %856 = vmatpush2.bf16.msra.mxu0 0
      %857 = vmatprep.subr.bf16.mxu0 0
      %858 = vmatpush2.bf16.msra.mxu0 0
      %859 = vmatprep.subr.bf16.mxu0 0
      %860 = vmatpush2.bf16.msra.mxu0 0
      %861 = vmatprep.subr.bf16.mxu0 0
      %862 = vmatpush2.bf16.msra.mxu0 0
      %863 = vmatprep.subr.bf16.mxu0 0
      %864 = vmatpush2.bf16.msra.mxu0 0
      %865 = vmatprep.subr.bf16.mxu0 0
      %866 = vmatpush2.bf16.msra.mxu0 0
      %867 = vmatprep.subr.bf16.mxu0 0
      %868 = vmatpush2.bf16.msra.mxu0 0
      %869 = vmatprep.subr.bf16.mxu0 0
      %870 = vmatpush2.bf16.msra.mxu0 0
      %871 = vmatprep.mubr.bf16.mxu0 0
      %872 = vmatmul.mubr.bf16.gmra.mxu0 %v825
      %v873 = vpop.f32.mrf.mxu0
      %v874 = vadd.f32 0.0, %v873
      %v875 = vpop.f32.mrf.mxu0
      %v876 = vpop.f32.mrf.mxu0
      %v877 = vadd.f32 0.0, %v876
      %v878 = vpop.f32.mrf.mxu0
      %879 = vmatprep.mubr.bf16.mxu0 0
      %880 = vmatmul.mubr.bf16.gmra.mxu0 %v828
      %v881 = vpop.f32.mrf.mxu0
      %v882 = vadd.f32 0.0, %v881
      %v883 = vpop.f32.mrf.mxu0
      %v884 = vpop.f32.mrf.mxu0
      %v885 = vadd.f32 0.0, %v884
      %v886 = vpop.f32.mrf.mxu0
      %887 = vmatprep.mubr.bf16.mxu0 0
      %888 = vmatmul.mubr.bf16.gmra.mxu0 %v831
      %v889 = vpop.f32.mrf.mxu0
      %v890 = vadd.f32 0.0, %v889
      %v891 = vpop.f32.mrf.mxu0
      %v892 = vpop.f32.mrf.mxu0
      %v893 = vadd.f32 0.0, %v892
      %v894 = vpop.f32.mrf.mxu0
      %895 = vmatprep.mubr.bf16.mxu0 0
      %896 = vmatmul.mubr.bf16.gmra.mxu0 %v834
      %v897 = vpop.f32.mrf.mxu0
      %v898 = vadd.f32 0.0, %v897
      %v899 = vpop.f32.mrf.mxu0
      %v900 = vpop.f32.mrf.mxu0
      %v901 = vadd.f32 0.0, %v900
      %v902 = vpop.f32.mrf.mxu0
      %903 = vdwg.mxu0
      %v904 = vadd.f32 %v795, %v874
      %v905 = vadd.f32 %v796, %v877
      %v906 = vadd.f32 %v797, %v882
      %v907 = vadd.f32 %v798, %v885
      %v908 = vadd.f32 %v799, %v890
      %v909 = vadd.f32 %v800, %v893
      %v910 = vadd.f32 %v801, %v898
      %v911 = vadd.f32 %v802, %v901
      %v913 = vshrl.u32 %v250, 16
      %v915 = vrot.slane %v913, 4
      %v916 = vshll.u32 %v250, 16
      %v918 = vrot.slane %v916, 5
      %v919 = vor.u32 %v915, %v918
      %v920 = vrot.slane %v919, 4
      %v922 = vshll.u32 %v251, 16
      %v924 = vrot.slane %v922, 5
      %v925 = vsel %vm480, %v920, %v924
      %v927 = vshrl.u32 %v252, 16
      %v929 = vrot.slane %v927, 4
      %v930 = vshll.u32 %v252, 16
      %v932 = vrot.slane %v930, 5
      %v933 = vor.u32 %v929, %v932
      %v934 = vrot.slane %v933, 4
      %v936 = vshll.u32 %v253, 16
      %v938 = vrot.slane %v936, 5
      %v939 = vsel %vm480, %v934, %v938
      %v941 = vshrl.u32 %v254, 16
      %v943 = vrot.slane %v941, 4
      %v944 = vshll.u32 %v254, 16
      %v946 = vrot.slane %v944, 5
      %v947 = vor.u32 %v943, %v946
      %v948 = vrot.slane %v947, 4
      %v950 = vshll.u32 %v255, 16
      %v952 = vrot.slane %v950, 5
      %v953 = vsel %vm480, %v948, %v952
      %v955 = vshrl.u32 %v256, 16
      %v957 = vrot.slane %v955, 4
      %v958 = vshll.u32 %v256, 16
      %v960 = vrot.slane %v958, 5
      %v961 = vor.u32 %v957, %v960
      %v962 = vrot.slane %v961, 4
      %v964 = vshll.u32 %v257, 16
      %v966 = vrot.slane %v964, 5
      %v967 = vsel %vm480, %v962, %v966
      %v969 = vshrl.u32 %v258, 16
      %v971 = vrot.slane %v969, 4
      %v972 = vshll.u32 %v258, 16
      %v974 = vrot.slane %v972, 5
      %v975 = vor.u32 %v971, %v974
      %v976 = vrot.slane %v975, 4
      %v978 = vshll.u32 %v259, 16
      %v980 = vrot.slane %v978, 5
      %v981 = vsel %vm480, %v976, %v980
      %v983 = vshrl.u32 %v260, 16
      %v985 = vrot.slane %v983, 4
      %v986 = vshll.u32 %v260, 16
      %v988 = vrot.slane %v986, 5
      %v989 = vor.u32 %v985, %v988
      %v990 = vrot.slane %v989, 4
      %v992 = vshll.u32 %v261, 16
      %v994 = vrot.slane %v992, 5
      %v995 = vsel %vm480, %v990, %v994
      %v997 = vshrl.u32 %v262, 16
      %v999 = vrot.slane %v997, 4
      %v1000 = vshll.u32 %v262, 16
      %v1002 = vrot.slane %v1000, 5
      %v1003 = vor.u32 %v999, %v1002
      %v1004 = vrot.slane %v1003, 4
      %v1006 = vshll.u32 %v263, 16
      %v1008 = vrot.slane %v1006, 5
      %v1009 = vsel %vm480, %v1004, %v1008
      %v1011 = vshrl.u32 %v264, 16
      %v1013 = vrot.slane %v1011, 4
      %v1014 = vshll.u32 %v264, 16
      %v1016 = vrot.slane %v1014, 5
      %v1017 = vor.u32 %v1013, %v1016
      %v1018 = vrot.slane %v1017, 4
      %v1020 = vshll.u32 %v265, 16
      %v1022 = vrot.slane %v1020, 5
      %v1023 = vsel %vm480, %v1018, %v1022
      %v1024 = vld [vmem:[%s210 + $0x14] sm:$0xf]
      %v1025 = vunpack.c.l.b16 %v925
      %v1026 = vunpack.c.l.b16 %v939
      %v1027 = vunpack.c.l.b16 %v953
      %v1028 = vunpack.c.l.b16 %v967
      %v1029 = vunpack.c.l.b16 %v981
      %v1030 = vunpack.c.l.b16 %v995
      %v1031 = vunpack.c.l.b16 %v1009
      %v1032 = vunpack.c.l.b16 %v1023
      %v1033 = vpack.c.b16 %v1026, %v1025
      %v1034 = vpack.c.b16 %v1028, %v1027
      %v1035 = vpack.c.b16 %v1030, %v1029
      %v1036 = vpack.c.b16 %v1032, %v1031
      %v1038 = vsel %vm296, %v1033, 0
      %v1041 = vsel %vm296, %v1034, 0
      %v1044 = vsel %vm296, %v1035, 0
      %v1047 = vsel %vm296, %v1036, 0
      %v1050 = vsel %vm309, %v1024, 0
      %1052 = vmatprep.subr.bf16.mxu0 0
      %1053 = vmatpush1.bf16.msra.mxu0 0
      %1054 = vmatprep.subr.bf16.mxu0 0
      %1055 = vmatpush1.bf16.msra.mxu0 0
      %1056 = vmatprep.subr.bf16.mxu0 0
      %1057 = vmatpush1.bf16.msra.mxu0 0
      %1058 = vmatprep.subr.bf16.mxu0 0
      %1059 = vmatpush1.bf16.msra.mxu0 0
      %1060 = vmatprep.subr.bf16.mxu0 0
      %1061 = vmatpush1.bf16.msra.mxu0 0
      %1062 = vmatprep.subr.bf16.mxu0 0
      %1063 = vmatpush1.bf16.msra.mxu0 0
      %1064 = vmatprep.subr.bf16.mxu0 0
      %1065 = vmatpush1.bf16.msra.mxu0 0
      %1066 = vmatprep.subr.bf16.mxu0 0
      %1067 = vmatpush1.bf16.msra.mxu0 %v1050
      %1068 = vmatprep.subr.bf16.mxu0 0
      %1069 = vmatpush2.bf16.msra.mxu0 0
      %1070 = vmatprep.subr.bf16.mxu0 0
      %1071 = vmatpush2.bf16.msra.mxu0 0
      %1072 = vmatprep.subr.bf16.mxu0 0
      %1073 = vmatpush2.bf16.msra.mxu0 0
      %1074 = vmatprep.subr.bf16.mxu0 0
      %1075 = vmatpush2.bf16.msra.mxu0 0
      %1076 = vmatprep.subr.bf16.mxu0 0
      %1077 = vmatpush2.bf16.msra.mxu0 0
      %1078 = vmatprep.subr.bf16.mxu0 0
      %1079 = vmatpush2.bf16.msra.mxu0 0
      %1080 = vmatprep.subr.bf16.mxu0 0
      %1081 = vmatpush2.bf16.msra.mxu0 0
      %1082 = vmatprep.subr.bf16.mxu0 0
      %1083 = vmatpush2.bf16.msra.mxu0 0
      %1084 = vmatprep.mubr.bf16.mxu0 0
      %1085 = vmatmul.mubr.bf16.gmra.mxu0 %v1038
      %v1086 = vpop.f32.mrf.mxu0
      %v1087 = vadd.f32 0.0, %v1086
      %v1088 = vpop.f32.mrf.mxu0
      %v1089 = vpop.f32.mrf.mxu0
      %v1090 = vadd.f32 0.0, %v1089
      %v1091 = vpop.f32.mrf.mxu0
      %1092 = vmatprep.mubr.bf16.mxu0 0
      %1093 = vmatmul.mubr.bf16.gmra.mxu0 %v1041
      %v1094 = vpop.f32.mrf.mxu0
      %v1095 = vadd.f32 0.0, %v1094
      %v1096 = vpop.f32.mrf.mxu0
      %v1097 = vpop.f32.mrf.mxu0
      %v1098 = vadd.f32 0.0, %v1097
      %v1099 = vpop.f32.mrf.mxu0
      %1100 = vmatprep.mubr.bf16.mxu0 0
      %1101 = vmatmul.mubr.bf16.gmra.mxu0 %v1044
      %v1102 = vpop.f32.mrf.mxu0
      %v1103 = vadd.f32 0.0, %v1102
      %v1104 = vpop.f32.mrf.mxu0
      %v1105 = vpop.f32.mrf.mxu0
      %v1106 = vadd.f32 0.0, %v1105
      %v1107 = vpop.f32.mrf.mxu0
      %1108 = vmatprep.mubr.bf16.mxu0 0
      %1109 = vmatmul.mubr.bf16.gmra.mxu0 %v1047
      %v1110 = vpop.f32.mrf.mxu0
      %v1111 = vadd.f32 0.0, %v1110
      %v1112 = vpop.f32.mrf.mxu0
      %v1113 = vpop.f32.mrf.mxu0
      %v1114 = vadd.f32 0.0, %v1113
      %v1115 = vpop.f32.mrf.mxu0
      %1116 = vdwg.mxu0
      %v1117 = vadd.f32 %v904, %v1087
      %v1118 = vadd.f32 %v905, %v1090
      %v1119 = vadd.f32 %v906, %v1095
      %v1120 = vadd.f32 %v907, %v1098
      %v1121 = vadd.f32 %v908, %v1103
      %v1122 = vadd.f32 %v909, %v1106
      %v1123 = vadd.f32 %v910, %v1111
      %v1124 = vadd.f32 %v911, %v1114
      %v1125 = vld [vmem:[%s210 + $0x18] sm:$0xf]
      %v1127 = vunpack.c.l.b16 %v239
      %v1128 = vpack.c.b16 %v388, %v387
      %v1129 = vpack.c.b16 %v390, %v389
      %v1130 = vpack.c.b16 %v392, %v391
      %v1131 = vpack.c.b16 %v1127, %v393
      %v1133 = vsel %vm296, %v1128, 0
      %v1136 = vsel %vm296, %v1129, 0
      %v1139 = vsel %vm296, %v1130, 0
      %v1142 = vsel %vm296, %v1131, 0
      %v1145 = vsel %vm309, %v1125, 0
      %1147 = vmatprep.subr.bf16.mxu0 0
      %1148 = vmatpush1.bf16.msra.mxu0 0
      %1149 = vmatprep.subr.bf16.mxu0 0
      %1150 = vmatpush1.bf16.msra.mxu0 0
      %1151 = vmatprep.subr.bf16.mxu0 0
      %1152 = vmatpush1.bf16.msra.mxu0 0
      %1153 = vmatprep.subr.bf16.mxu0 0
      %1154 = vmatpush1.bf16.msra.mxu0 0
      %1155 = vmatprep.subr.bf16.mxu0 0
      %1156 = vmatpush1.bf16.msra.mxu0 0
      %1157 = vmatprep.subr.bf16.mxu0 0
      %1158 = vmatpush1.bf16.msra.mxu0 0
      %1159 = vmatprep.subr.bf16.mxu0 0
      %1160 = vmatpush1.bf16.msra.mxu0 0
      %1161 = vmatprep.subr.bf16.mxu0 0
      %1162 = vmatpush1.bf16.msra.mxu0 %v1145
      %1163 = vmatprep.subr.bf16.mxu0 0
      %1164 = vmatpush2.bf16.msra.mxu0 0
      %1165 = vmatprep.subr.bf16.mxu0 0
      %1166 = vmatpush2.bf16.msra.mxu0 0
      %1167 = vmatprep.subr.bf16.mxu0 0
      %1168 = vmatpush2.bf16.msra.mxu0 0
      %1169 = vmatprep.subr.bf16.mxu0 0
      %1170 = vmatpush2.bf16.msra.mxu0 0
      %1171 = vmatprep.subr.bf16.mxu0 0
      %1172 = vmatpush2.bf16.msra.mxu0 0
      %1173 = vmatprep.subr.bf16.mxu0 0
      %1174 = vmatpush2.bf16.msra.mxu0 0
      %1175 = vmatprep.subr.bf16.mxu0 0
      %1176 = vmatpush2.bf16.msra.mxu0 0
      %1177 = vmatprep.subr.bf16.mxu0 0
      %1178 = vmatpush2.bf16.msra.mxu0 0
      %1179 = vmatprep.mubr.bf16.mxu0 0
      %1180 = vmatmul.mubr.bf16.gmra.mxu0 %v1133
      %v1181 = vpop.f32.mrf.mxu0
      %v1182 = vadd.f32 0.0, %v1181
      %v1183 = vpop.f32.mrf.mxu0
      %v1184 = vpop.f32.mrf.mxu0
      %v1185 = vadd.f32 0.0, %v1184
      %v1186 = vpop.f32.mrf.mxu0
      %1187 = vmatprep.mubr.bf16.mxu0 0
      %1188 = vmatmul.mubr.bf16.gmra.mxu0 %v1136
      %v1189 = vpop.f32.mrf.mxu0
      %v1190 = vadd.f32 0.0, %v1189
      %v1191 = vpop.f32.mrf.mxu0
      %v1192 = vpop.f32.mrf.mxu0
      %v1193 = vadd.f32 0.0, %v1192
      %v1194 = vpop.f32.mrf.mxu0
      %1195 = vmatprep.mubr.bf16.mxu0 0
      %1196 = vmatmul.mubr.bf16.gmra.mxu0 %v1139
      %v1197 = vpop.f32.mrf.mxu0
      %v1198 = vadd.f32 0.0, %v1197
      %v1199 = vpop.f32.mrf.mxu0
      %v1200 = vpop.f32.mrf.mxu0
      %v1201 = vadd.f32 0.0, %v1200
      %v1202 = vpop.f32.mrf.mxu0
      %1203 = vmatprep.mubr.bf16.mxu0 0
      %1204 = vmatmul.mubr.bf16.gmra.mxu0 %v1142
      %v1205 = vpop.f32.mrf.mxu0
      %v1206 = vadd.f32 0.0, %v1205
      %v1207 = vpop.f32.mrf.mxu0
      %v1208 = vpop.f32.mrf.mxu0
      %v1209 = vadd.f32 0.0, %v1208
      %v1210 = vpop.f32.mrf.mxu0
      %1211 = vdwg.mxu0
      %v1212 = vadd.f32 %v1117, %v1182
      %v1213 = vadd.f32 %v1118, %v1185
      %v1214 = vadd.f32 %v1119, %v1190
      %v1215 = vadd.f32 %v1120, %v1193
      %v1216 = vadd.f32 %v1121, %v1198
      %v1217 = vadd.f32 %v1122, %v1201
      %v1218 = vadd.f32 %v1123, %v1206
      %v1219 = vadd.f32 %v1124, %v1209
      %v1220 = vld [vmem:[%s210 + $0x1c] sm:$0xf]
      %v1222 = vunpack.c.l.b16 %v249
      %v1223 = vpack.c.b16 %v286, %v285
      %v1224 = vpack.c.b16 %v288, %v287
      %v1225 = vpack.c.b16 %v290, %v289
      %v1226 = vpack.c.b16 %v1222, %v291
      %v1228 = vsel %vm296, %v1223, 0
      %v1231 = vsel %vm296, %v1224, 0
      %v1234 = vsel %vm296, %v1225, 0
      %v1237 = vsel %vm296, %v1226, 0
      %v1240 = vsel %vm309, %v1220, 0
      %1242 = vmatprep.subr.bf16.mxu0 0
      %1243 = vmatpush1.bf16.msra.mxu0 0
      %1244 = vmatprep.subr.bf16.mxu0 0
      %1245 = vmatpush1.bf16.msra.mxu0 0
      %1246 = vmatprep.subr.bf16.mxu0 0
      %1247 = vmatpush1.bf16.msra.mxu0 0
      %1248 = vmatprep.subr.bf16.mxu0 0
      %1249 = vmatpush1.bf16.msra.mxu0 0
      %1250 = vmatprep.subr.bf16.mxu0 0
      %1251 = vmatpush1.bf16.msra.mxu0 0
      %1252 = vmatprep.subr.bf16.mxu0 0
      %1253 = vmatpush1.bf16.msra.mxu0 0
      %1254 = vmatprep.subr.bf16.mxu0 0
      %1255 = vmatpush1.bf16.msra.mxu0 0
      %1256 = vmatprep.subr.bf16.mxu0 0
      %1257 = vmatpush1.bf16.msra.mxu0 %v1240
      %1258 = vmatprep.subr.bf16.mxu0 0
      %1259 = vmatpush2.bf16.msra.mxu0 0
      %1260 = vmatprep.subr.bf16.mxu0 0
      %1261 = vmatpush2.bf16.msra.mxu0 0
      %1262 = vmatprep.subr.bf16.mxu0 0
      %1263 = vmatpush2.bf16.msra.mxu0 0
      %1264 = vmatprep.subr.bf16.mxu0 0
      %1265 = vmatpush2.bf16.msra.mxu0 0
      %1266 = vmatprep.subr.bf16.mxu0 0
      %1267 = vmatpush2.bf16.msra.mxu0 0
      %1268 = vmatprep.subr.bf16.mxu0 0
      %1269 = vmatpush2.bf16.msra.mxu0 0
      %1270 = vmatprep.subr.bf16.mxu0 0
      %1271 = vmatpush2.bf16.msra.mxu0 0
      %1272 = vmatprep.subr.bf16.mxu0 0
      %1273 = vmatpush2.bf16.msra.mxu0 0
      %1274 = vmatprep.mubr.bf16.mxu0 0
      %1275 = vmatmul.mubr.bf16.gmra.mxu0 %v1228
      %v1276 = vpop.f32.mrf.mxu0
      %v1277 = vadd.f32 0.0, %v1276
      %v1278 = vpop.f32.mrf.mxu0
      %v1279 = vpop.f32.mrf.mxu0
      %v1280 = vadd.f32 0.0, %v1279
      %v1281 = vpop.f32.mrf.mxu0
      %1282 = vmatprep.mubr.bf16.mxu0 0
      %1283 = vmatmul.mubr.bf16.gmra.mxu0 %v1231
      %v1284 = vpop.f32.mrf.mxu0
      %v1285 = vadd.f32 0.0, %v1284
      %v1286 = vpop.f32.mrf.mxu0
      %v1287 = vpop.f32.mrf.mxu0
      %v1288 = vadd.f32 0.0, %v1287
      %v1289 = vpop.f32.mrf.mxu0
      %1290 = vmatprep.mubr.bf16.mxu0 0
      %1291 = vmatmul.mubr.bf16.gmra.mxu0 %v1234
      %v1292 = vpop.f32.mrf.mxu0
      %v1293 = vadd.f32 0.0, %v1292
      %v1294 = vpop.f32.mrf.mxu0
      %v1295 = vpop.f32.mrf.mxu0
      %v1296 = vadd.f32 0.0, %v1295
      %v1297 = vpop.f32.mrf.mxu0
      %1298 = vmatprep.mubr.bf16.mxu0 0
      %1299 = vmatmul.mubr.bf16.gmra.mxu0 %v1237
      %v1300 = vpop.f32.mrf.mxu0
      %v1301 = vadd.f32 0.0, %v1300
      %v1302 = vpop.f32.mrf.mxu0
      %v1303 = vpop.f32.mrf.mxu0
      %v1304 = vadd.f32 0.0, %v1303
      %v1305 = vpop.f32.mrf.mxu0
      %1306 = vdwg.mxu0
      %v1307 = vadd.f32 %v1212, %v1277
      %v1308 = vadd.f32 %v1213, %v1280
      %v1309 = vadd.f32 %v1214, %v1285
      %v1310 = vadd.f32 %v1215, %v1288
      %v1311 = vadd.f32 %v1216, %v1293
      %v1312 = vadd.f32 %v1217, %v1296
      %v1313 = vadd.f32 %v1218, %v1301
      %v1314 = vadd.f32 %v1219, %v1304
      %v1316 = vshrl.u32 %v239, 16
      %v1318 = vrot.slane %v1316, 4
      %v1319 = vshll.u32 %v239, 16
      %v1321 = vrot.slane %v1319, 5
      %v1322 = vor.u32 %v1318, %v1321
      %v1323 = vrot.slane %v1322, 4
      %v1325 = vshll.u32 %v240, 16
      %v1327 = vrot.slane %v1325, 5
      %v1328 = vsel %vm480, %v1323, %v1327
      %v1329 = vld [vmem:[%s210 + $0x20] sm:$0xf]
      %v1330 = vunpack.c.l.b16 %v1328
      %v1331 = vpack.c.b16 %v596, %v595
      %v1332 = vpack.c.b16 %v598, %v597
      %v1333 = vpack.c.b16 %v600, %v599
      %v1334 = vpack.c.b16 %v1330, %v601
      %v1336 = vsel %vm296, %v1331, 0
      %v1339 = vsel %vm296, %v1332, 0
      %v1342 = vsel %vm296, %v1333, 0
      %v1345 = vsel %vm296, %v1334, 0
      %v1348 = vsel %vm309, %v1329, 0
      %1350 = vmatprep.subr.bf16.mxu0 0
      %1351 = vmatpush1.bf16.msra.mxu0 0
      %1352 = vmatprep.subr.bf16.mxu0 0
      %1353 = vmatpush1.bf16.msra.mxu0 0
      %1354 = vmatprep.subr.bf16.mxu0 0
      %1355 = vmatpush1.bf16.msra.mxu0 0
      %1356 = vmatprep.subr.bf16.mxu0 0
      %1357 = vmatpush1.bf16.msra.mxu0 0
      %1358 = vmatprep.subr.bf16.mxu0 0
      %1359 = vmatpush1.bf16.msra.mxu0 0
      %1360 = vmatprep.subr.bf16.mxu0 0
      %1361 = vmatpush1.bf16.msra.mxu0 0
      %1362 = vmatprep.subr.bf16.mxu0 0
      %1363 = vmatpush1.bf16.msra.mxu0 0
      %1364 = vmatprep.subr.bf16.mxu0 0
      %1365 = vmatpush1.bf16.msra.mxu0 %v1348
      %1366 = vmatprep.subr.bf16.mxu0 0
      %1367 = vmatpush2.bf16.msra.mxu0 0
      %1368 = vmatprep.subr.bf16.mxu0 0
      %1369 = vmatpush2.bf16.msra.mxu0 0
      %1370 = vmatprep.subr.bf16.mxu0 0
      %1371 = vmatpush2.bf16.msra.mxu0 0
      %1372 = vmatprep.subr.bf16.mxu0 0
      %1373 = vmatpush2.bf16.msra.mxu0 0
      %1374 = vmatprep.subr.bf16.mxu0 0
      %1375 = vmatpush2.bf16.msra.mxu0 0
      %1376 = vmatprep.subr.bf16.mxu0 0
      %1377 = vmatpush2.bf16.msra.mxu0 0
      %1378 = vmatprep.subr.bf16.mxu0 0
      %1379 = vmatpush2.bf16.msra.mxu0 0
      %1380 = vmatprep.subr.bf16.mxu0 0
      %1381 = vmatpush2.bf16.msra.mxu0 0
      %1382 = vmatprep.mubr.bf16.mxu0 0
      %1383 = vmatmul.mubr.bf16.gmra.mxu0 %v1336
      %v1384 = vpop.f32.mrf.mxu0
      %v1385 = vadd.f32 0.0, %v1384
      %v1386 = vpop.f32.mrf.mxu0
      %v1387 = vpop.f32.mrf.mxu0
      %v1388 = vadd.f32 0.0, %v1387
      %v1389 = vpop.f32.mrf.mxu0
      %1390 = vmatprep.mubr.bf16.mxu0 0
      %1391 = vmatmul.mubr.bf16.gmra.mxu0 %v1339
      %v1392 = vpop.f32.mrf.mxu0
      %v1393 = vadd.f32 0.0, %v1392
      %v1394 = vpop.f32.mrf.mxu0
      %v1395 = vpop.f32.mrf.mxu0
      %v1396 = vadd.f32 0.0, %v1395
      %v1397 = vpop.f32.mrf.mxu0
      %1398 = vmatprep.mubr.bf16.mxu0 0
      %1399 = vmatmul.mubr.bf16.gmra.mxu0 %v1342
      %v1400 = vpop.f32.mrf.mxu0
      %v1401 = vadd.f32 0.0, %v1400
      %v1402 = vpop.f32.mrf.mxu0
      %v1403 = vpop.f32.mrf.mxu0
      %v1404 = vadd.f32 0.0, %v1403
      %v1405 = vpop.f32.mrf.mxu0
      %1406 = vmatprep.mubr.bf16.mxu0 0
      %1407 = vmatmul.mubr.bf16.gmra.mxu0 %v1345
      %v1408 = vpop.f32.mrf.mxu0
      %v1409 = vadd.f32 0.0, %v1408
      %v1410 = vpop.f32.mrf.mxu0
      %v1411 = vpop.f32.mrf.mxu0
      %v1412 = vadd.f32 0.0, %v1411
      %v1413 = vpop.f32.mrf.mxu0
      %1414 = vdwg.mxu0
      %v1415 = vadd.f32 %v1307, %v1385
      %v1416 = vadd.f32 %v1308, %v1388
      %v1417 = vadd.f32 %v1309, %v1393
      %v1418 = vadd.f32 %v1310, %v1396
      %v1419 = vadd.f32 %v1311, %v1401
      %v1420 = vadd.f32 %v1312, %v1404
      %v1421 = vadd.f32 %v1313, %v1409
      %v1422 = vadd.f32 %v1314, %v1412
      %v1423 = vld [vmem:[%s213] sm:$0x1]
      %v1425 = vlaneseq
      %v1426 = vshrl.u32 %v1425, 7
      %v1427 = vsub.s32 0, %v1426
      %v1428 = vrot.slane %v1423, %v1427
      %v1430 = vadd.f32 %v1415, %v1428
      %v1431 = vadd.f32 %v1416, %v1428
      %v1432 = vadd.f32 %v1417, %v1428
      %v1433 = vadd.f32 %v1418, %v1428
      %v1434 = vadd.f32 %v1419, %v1428
      %v1435 = vadd.f32 %v1420, %v1428
      %v1436 = vadd.f32 %v1421, %v1428
      %v1437 = vadd.f32 %v1422, %v1428
      %v1438 = vmax.f32 %v1430, 0.0
      %v1439 = vmax.f32 %v1431, 0.0
      %v1440 = vmax.f32 %v1432, 0.0
      %v1441 = vmax.f32 %v1433, 0.0
      %v1442 = vmax.f32 %v1434, 0.0
      %v1443 = vmax.f32 %v1435, 0.0
      %v1444 = vmax.f32 %v1436, 0.0
      %v1445 = vmax.f32 %v1437, 0.0
      %v1446 = vpack.c.bf16 %v1439, %v1438
      %v1447 = vpack.c.bf16 %v1441, %v1440
      %v1448 = vpack.c.bf16 %v1443, %v1442
      %v1449 = vpack.c.bf16 %v1445, %v1444
      %v1454 = vunpack.c.l.b16 %v1446
      %v1455 = vunpack.c.h.b16 %v1446
      %v1456 = vunpack.c.l.b16 %v1447
      %v1457 = vunpack.c.h.b16 %v1447
      %v1458 = vunpack.c.l.b16 %v1448
      %v1459 = vunpack.c.h.b16 %v1448
      %v1460 = vunpack.c.l.b16 %v1449
      %v1461 = vunpack.c.h.b16 %v1449
      %v1462 = vpack.c.b16 %v1454, %v1454
      %v1463 = vpack.c.b16 %v1455, %v1455
      %v1464 = vpack.c.b16 %v1456, %v1456
      %v1465 = vpack.c.b16 %v1457, %v1457
      %v1466 = vpack.c.b16 %v1458, %v1458
      %v1467 = vpack.c.b16 %v1459, %v1459
      %v1468 = vpack.c.b16 %v1460, %v1460
      %v1469 = vpack.c.b16 %v1461, %v1461
      %vm1478 = vcmask 60416
      %1479 = vst.msk [vmem:[%s221] sm:$0xf] %vm1478, %v1462
      %1480 = vst.msk [vmem:[%s221 + $0x4] sm:$0xf] %vm1478, %v1463
      %1481 = vst.msk [vmem:[%s221 + $0x8] sm:$0xf] %vm1478, %v1464
      %1482 = vst.msk [vmem:[%s221 + $0xc] sm:$0xf] %vm1478, %v1465
      %1483 = vst.msk [vmem:[%s221 + $0x10] sm:$0xf] %vm1478, %v1466
      %1484 = vst.msk [vmem:[%s221 + $0x14] sm:$0xf] %vm1478, %v1467
      %1485 = vst.msk [vmem:[%s221 + $0x18] sm:$0xf] %vm1478, %v1468
      %1486 = vst.msk [vmem:[%s221 + $0x1c] sm:$0xf] %vm1478, %v1469
      %p1487 = scmp.lt.s32.totalorder %s18, 1
      %s1488 = scalar_select %p1487, %s18, 1
      %p1489 = scmp.lt.s32.totalorder %s19, 0
      %s1490 = scalar_select %p1489, %s19, 0
      %s1491 = smul.addr %s1488, 8
      %s1492 = sadd.s32 %s1490, %s1491
      %s1493 = smul.addr %s1492, 4
      %s1494 = scalar_lea.vmem %s3, %s1493
      // Predicated region
      $region33: #{basic_block_forward.2} parent=31 // pred_check
        %p1495 = pneg %p124
      $region34: #{basic_block_forward.2} parent=31 // pred_check_branch
        %1497 = sbr.rel (%p1495) target = $region36
      $region35: #{basic_block_forward.2} parent=31 // pred_region
        _
      $region36: #{basic_block_forward.2} parent=31 // pred_fallthru
        _
    $region32: #{basic_block_forward.2} parent=5 // pred_fallthru
      _
    %p1498 = scmp.le.s32.totalorder 2, %s9
    // Predicated region
    $region37: #{basic_block_forward.2} parent=5 // pred_check
      %p1499 = pneg %p1498
    $region38: #{basic_block_forward.2} parent=5 // pred_check_branch
      %1501 = sbr.rel (%p1499) target = $region40
    $region39: #{basic_block_forward.2} parent=5 // pred_region
      %s1502 = ssub.s32 %s9, 2
      // Predicated region
      $region41: #{basic_block_forward.2} parent=39 // pred_check
        %p1503 = pneg %p130
      $region42: #{basic_block_forward.2} parent=39 // pred_check_branch
        %1505 = sbr.rel (%p1503) target = $region44
      $region43: #{basic_block_forward.2} parent=39 // pred_region
        %p1506 = scmp.lt.s32.totalorder %s20, 1
        %s1507 = scalar_select %p1506, %s20, 1
        %p1508 = scmp.lt.s32.totalorder %s21, 0
        %s1509 = scalar_select %p1508, %s21, 0
        %s1510 = smul.addr %s1507, 8
        %s1511 = sadd.s32 %s1509, %s1510
        %s1512 = smul.addr %s1511, 4
        %s1513 = scalar_lea.vmem %s3, %s1512
      $region44: #{basic_block_forward.2} parent=39 // pred_fallthru
        _
    $region40: #{basic_block_forward.2} parent=5 // pred_fallthru
      _
  $region6: #{basic_block_forward.2} parent=0 // loop_footer
    %s13 = sadd.s32 1, %s9
  $region7: #{basic_block_forward.2} parent=0 // loop_footer_branch
    %8 = sbr.rel target = $region3
  $region8: #{basic_block_forward.2} parent=0 // loop_exit
    _

// kernel: basic_block_forward.3
$region0: #{basic_block_forward.3}
  #allocation0 [shape = 'u32[]', space=smem, size = 0x4, offset = 0x4, fixed_abs, tag = 'smem constant byte address 0x4 - core index']
  #allocation1 [shape = 'u32[144,128]{1,0:T(1,128)}', space=vmem, size = 0x12000, scoped, tag = 'internal scratch']
  %s0 = inlined_call_operand.vmem [shape: bf16[2,10,10,8], index: 0, kind: input, shape index: {}]
  %s1 = inlined_call_operand.vmem [shape: bf16[72,8], index: 1, kind: input, shape index: {}]
  %s2 = inlined_call_operand.vmem [shape: f32[1,8], index: 2, kind: input, shape index: {}]
  %s3 = inlined_call_operand.vmem [shape: bf16[2,4,9,9,8], index: 3, kind: input, shape index: {}]
  %s4 = inlined_call_operand.vmem [shape: bf16[8,8], index: 4, kind: input, shape index: {}]
  %s5 = inlined_call_operand.vmem [shape: f32[2,64,8], index: 5, kind: output, shape index: {}]
  %s6 = sld [smem:[#allocation0]]
  $region53: #{basic_block_forward.3} parent=0
    _
  %s8 = ssub.s32 1, %s6
  %s9 = scalar_select 0, %s8, %s6
  loop: start=0, step=1, limit=4
  $region2: #{basic_block_forward.3} parent=0 // loop_pre_header
    _
  $region3: #{basic_block_forward.3} parent=0 // loop_header
    %s11 = sphi 0, %s15
    %p12 = scmp.ge.s32.totalorder %s11, 4
    %s18 = sphi 0, %s30
    %s19 = sphi 0, %s26
    %s20 = sphi 0, %s18
    %s21 = sphi 0, %s19
    %s22 = sphi 0, %s20
    %s23 = sphi 0, %s21
    %s33 = sphi 0, %s35
    %s36 = sphi 0, %s33
    %s37 = sphi 0, %s36
    %s53 = sphi 0, %s37
    %s59 = sphi 0, %s61
    %s62 = sphi 0, %s59
    %s63 = sphi 0, %s62
    %s79 = sphi 0, %s63
    %s85 = sphi 0, %s87
    %s88 = sphi 0, %s85
    %s89 = sphi 0, %s88
    %s105 = sphi 0, %s89
    %s111 = sphi 0, %s113
    %s114 = sphi 0, %s111
    %s115 = sphi 0, %s114
    %s131 = sphi 0, %s115
    %s137 = sphi 0, %s139
    %s140 = sphi 0, %s137
    %s141 = sphi 0, %s140
    %s157 = sphi 0, %s141
    %s165 = sphi 0, %s167
    %s168 = sphi 0, %s165
    %s169 = sphi 0, %s168
    %s185 = sphi 0, %s169
  $region4: #{basic_block_forward.3} parent=0 // loop_header_branch
    %14 = sbr.rel (%p12) target = $region8
  $region5: #{basic_block_forward.3} parent=0 // loop_body
    %s16 = ssub.s32 %s11, 1
    %s17 = ssub.s32 %s11, 2
    %s24 = sadd.s32 1, %s19
    %p25 = scmp.ge.s32.totalorder %s24, 1
    %s26 = scalar_select %p25, 0, %s24
    %s27 = sadd.s32 1, %s18
    %s28 = scalar_select %p25, %s27, %s18
    %p29 = scmp.ge.s32.totalorder %s28, 2
    %s30 = scalar_select %p29, 0, %s28
    %s31 = ssub.s32 %s18, %s30
    %p32 = scmp.eq.s32.totalorder %s31, 0
    %s34 = sadd.s32 %s33, 1
    %s35 = scalar_select %p32, %s33, %s34
    %p38 = pneg %p32
    %p39 = scmp.eq.s32.totalorder %s11, 1
    %p40 = por %p38, %p39
    %p41 = scmp.ne.s32.totalorder %s33, %s36
    %p42 = scmp.eq.s32.totalorder %s11, 0
    %p43 = por %p41, %p42
    %p44 = scmp.ne.s32.totalorder %s33, %s36
    %p45 = scmp.eq.s32.totalorder %s16, 1
    %p46 = por %p44, %p45
    %p47 = scmp.ne.s32.totalorder %s36, %s37
    %p48 = scmp.eq.s32.totalorder %s16, 0
    %p49 = por %p47, %p48
    %p50 = scmp.ne.s32.totalorder %s36, %s37
    %p51 = scmp.eq.s32.totalorder %s17, 1
    %p52 = por %p50, %p51
    %p54 = scmp.ne.s32.totalorder %s37, %s53
    %p55 = scmp.eq.s32.totalorder %s17, 0
    %p56 = por %p54, %p55
    %s57 = ssub.s32 %s19, %s26
    %p58 = scmp.eq.s32.totalorder %s57, 0
    %s60 = sadd.s32 %s59, 1
    %s61 = scalar_select %p58, %s59, %s60
    %p64 = pneg %p58
    %p65 = scmp.eq.s32.totalorder %s11, 1
    %p66 = por %p64, %p65
    %p67 = scmp.ne.s32.totalorder %s59, %s62
    %p68 = scmp.eq.s32.totalorder %s11, 0
    %p69 = por %p67, %p68
    %p70 = scmp.ne.s32.totalorder %s59, %s62
    %p71 = scmp.eq.s32.totalorder %s16, 1
    %p72 = por %p70, %p71
    %p73 = scmp.ne.s32.totalorder %s62, %s63
    %p74 = scmp.eq.s32.totalorder %s16, 0
    %p75 = por %p73, %p74
    %p76 = scmp.ne.s32.totalorder %s62, %s63
    %p77 = scmp.eq.s32.totalorder %s17, 1
    %p78 = por %p76, %p77
    %p80 = scmp.ne.s32.totalorder %s63, %s79
    %p81 = scmp.eq.s32.totalorder %s17, 0
    %p82 = por %p80, %p81
    %s83 = ssub.s32 %s19, %s26
    %p84 = scmp.eq.s32.totalorder %s83, 0
    %s86 = sadd.s32 %s85, 1
    %s87 = scalar_select %p84, %s85, %s86
    %p90 = pneg %p84
    %p91 = scmp.eq.s32.totalorder %s11, 1
    %p92 = por %p90, %p91
    %p93 = scmp.ne.s32.totalorder %s85, %s88
    %p94 = scmp.eq.s32.totalorder %s11, 0
    %p95 = por %p93, %p94
    %p96 = scmp.ne.s32.totalorder %s85, %s88
    %p97 = scmp.eq.s32.totalorder %s16, 1
    %p98 = por %p96, %p97
    %p99 = scmp.ne.s32.totalorder %s88, %s89
    %p100 = scmp.eq.s32.totalorder %s16, 0
    %p101 = por %p99, %p100
    %p102 = scmp.ne.s32.totalorder %s88, %s89
    %p103 = scmp.eq.s32.totalorder %s17, 1
    %p104 = por %p102, %p103
    %p106 = scmp.ne.s32.totalorder %s89, %s105
    %p107 = scmp.eq.s32.totalorder %s17, 0
    %p108 = por %p106, %p107
    %s109 = ssub.s32 %s18, %s30
    %p110 = scmp.eq.s32.totalorder %s109, 0
    %s112 = sadd.s32 %s111, 1
    %s113 = scalar_select %p110, %s111, %s112
    %p116 = pneg %p110
    %p117 = scmp.eq.s32.totalorder %s11, 1
    %p118 = por %p116, %p117
    %p119 = scmp.ne.s32.totalorder %s111, %s114
    %p120 = scmp.eq.s32.totalorder %s11, 0
    %p121 = por %p119, %p120
    %p122 = scmp.ne.s32.totalorder %s111, %s114
    %p123 = scmp.eq.s32.totalorder %s16, 1
    %p124 = por %p122, %p123
    %p125 = scmp.ne.s32.totalorder %s114, %s115
    %p126 = scmp.eq.s32.totalorder %s16, 0
    %p127 = por %p125, %p126
    %p128 = scmp.ne.s32.totalorder %s114, %s115
    %p129 = scmp.eq.s32.totalorder %s17, 1
    %p130 = por %p128, %p129
    %p132 = scmp.ne.s32.totalorder %s115, %s131
    %p133 = scmp.eq.s32.totalorder %s17, 0
    %p134 = por %p132, %p133
    %s135 = ssub.s32 %s19, %s26
    %p136 = scmp.eq.s32.totalorder %s135, 0
    %s138 = sadd.s32 %s137, 1
    %s139 = scalar_select %p136, %s137, %s138
    %p142 = pneg %p136
    %p143 = scmp.eq.s32.totalorder %s11, 1
    %p144 = por %p142, %p143
    %p145 = scmp.ne.s32.totalorder %s137, %s140
    %p146 = scmp.eq.s32.totalorder %s11, 0
    %p147 = por %p145, %p146
    %p148 = scmp.ne.s32.totalorder %s137, %s140
    %p149 = scmp.eq.s32.totalorder %s16, 1
    %p150 = por %p148, %p149
    %p151 = scmp.ne.s32.totalorder %s140, %s141
    %p152 = scmp.eq.s32.totalorder %s16, 0
    %p153 = por %p151, %p152
    %p154 = scmp.ne.s32.totalorder %s140, %s141
    %p155 = scmp.eq.s32.totalorder %s17, 1
    %p156 = por %p154, %p155
    %p158 = scmp.ne.s32.totalorder %s141, %s157
    %p159 = scmp.eq.s32.totalorder %s17, 0
    %p160 = por %p158, %p159
    %s161 = ssub.s32 %s18, %s30
    %s162 = ssub.s32 %s19, %s26
    %s163 = sor.u32 %s161, %s162
    %p164 = scmp.eq.s32.totalorder %s163, 0
    %s166 = sadd.s32 %s165, 1
    %s167 = scalar_select %p164, %s165, %s166
    %p170 = pneg %p164
    %p171 = scmp.eq.s32.totalorder %s11, 1
    %p172 = por %p170, %p171
    %p173 = scmp.ne.s32.totalorder %s165, %s168
    %p174 = scmp.eq.s32.totalorder %s11, 0
    %p175 = por %p173, %p174
    %p176 = scmp.ne.s32.totalorder %s165, %s168
    %p177 = scmp.eq.s32.totalorder %s16, 1
    %p178 = por %p176, %p177
    %p179 = scmp.ne.s32.totalorder %s168, %s169
    %p180 = scmp.eq.s32.totalorder %s16, 0
    %p181 = por %p179, %p180
    %p182 = scmp.ne.s32.totalorder %s168, %s169
    %p183 = scmp.eq.s32.totalorder %s17, 1
    %p184 = por %p182, %p183
    %p186 = scmp.ne.s32.totalorder %s169, %s185
    %p187 = scmp.eq.s32.totalorder %s17, 0
    %p188 = por %p186, %p187
    %p189 = scmp.le.s32.totalorder 1, %s11
    %p190 = scmp.lt.s32.totalorder %s11, 3
    %p191 = pnand %p189, %p190
    %p192 = pneg %p191
    // Predicated region
    $region9: #{basic_block_forward.3} parent=5 // pred_check
      _
    $region10: #{basic_block_forward.3} parent=5 // pred_check_branch
      %194 = sbr.rel (%p191) target = $region12
    $region11: #{basic_block_forward.3} parent=5 // pred_region
      %s195 = ssub.s32 %s11, 1
      // Predicated region
      $region13: #{basic_block_forward.3} parent=11 // pred_check
        %p196 = pneg %p75
      $region14: #{basic_block_forward.3} parent=11 // pred_check_branch
        %198 = sbr.rel (%p196) target = $region16
      $region15: #{basic_block_forward.3} parent=11 // pred_region
        %p199 = scmp.lt.s32.totalorder %s21, 0
        %s200 = scalar_select %p199, %s21, 0
        %s201 = smul.addr %s200, 4
        %s202 = scalar_lea.vmem %s1, %s201
      $region16: #{basic_block_forward.3} parent=11 // pred_fallthru
        _
      // Predicated region
      $region17: #{basic_block_forward.3} parent=11 // pred_check
        %p203 = pneg %p101
      $region18: #{basic_block_forward.3} parent=11 // pred_check_branch
        %205 = sbr.rel (%p203) target = $region20
      $region19: #{basic_block_forward.3} parent=11 // pred_region
        %p206 = scmp.lt.s32.totalorder %s21, 0
        %s207 = scalar_select %p206, %s21, 0
        %s208 = scalar_lea.vmem %s2, %s207
      $region20: #{basic_block_forward.3} parent=11 // pred_fallthru
        _
      // Predicated region
      $region21: #{basic_block_forward.3} parent=11 // pred_check
        %p209 = pneg %p153
      $region22: #{basic_block_forward.3} parent=11 // pred_check_branch
        %211 = sbr.rel (%p209) target = $region24
      $region23: #{basic_block_forward.3} parent=11 // pred_region
        %p212 = scmp.lt.s32.totalorder %s21, 0
        %s213 = scalar_select %p212, %s21, 0
        %s214 = smul.addr %s213, 4
        %s215 = scalar_lea.vmem %s4, %s214
      $region24: #{basic_block_forward.3} parent=11 // pred_fallthru
        _
    $region12: #{basic_block_forward.3} parent=5 // pred_fallthru
      _
    %p216 = scmp.lt.s32.totalorder %s11, 2
    // Predicated region
    $region25: #{basic_block_forward.3} parent=5 // pred_check
      %p217 = pneg %p216
    $region26: #{basic_block_forward.3} parent=5 // pred_check_branch
      %219 = sbr.rel (%p217) target = $region28
    $region27: #{basic_block_forward.3} parent=5 // pred_region
      // Predicated region
      $region29: #{basic_block_forward.3} parent=27 // pred_check
        %p220 = pneg %p43
      $region30: #{basic_block_forward.3} parent=27 // pred_check_branch
        %222 = sbr.rel (%p220) target = $region32
      $region31: #{basic_block_forward.3} parent=27 // pred_region
        %p223 = scmp.lt.s32.totalorder %s18, 1
        %s224 = scalar_select %p223, %s18, 1
        %s225 = smul.addr %s224, 20
        %s226 = smul.addr %s225, 4
        %s227 = scalar_lea.vmem %s0, %s226
      $region32: #{basic_block_forward.3} parent=27 // pred_fallthru
        _
      // Predicated region
      $region33: #{basic_block_forward.3} parent=27 // pred_check
        %p228 = pneg %p121
      $region34: #{basic_block_forward.3} parent=27 // pred_check_branch
        %230 = sbr.rel (%p228) target = $region36
      $region35: #{basic_block_forward.3} parent=27 // pred_region
        %p231 = scmp.lt.s32.totalorder %s18, 1
        %s232 = scalar_select %p231, %s18, 1
        %s233 = smul.addr %s232, 72
        %s234 = sadd.s32 54, %s233
        %s235 = smul.addr %s234, 4
        %s236 = scalar_lea.vmem %s3, %s235
      $region36: #{basic_block_forward.3} parent=27 // pred_fallthru
        _
    $region28: #{basic_block_forward.3} parent=5 // pred_fallthru
      _
    %p237 = scmp.le.s32.totalorder 1, %s11
    %p238 = scmp.lt.s32.totalorder %s11, 3
    %p239 = pnand %p237, %p238
    %p240 = pneg %p239
    // Predicated region
    $region37: #{basic_block_forward.3} parent=5 // pred_check
      _
    $region38: #{basic_block_forward.3} parent=5 // pred_check_branch
      %242 = sbr.rel (%p239) target = $region40
    $region39: #{basic_block_forward.3} parent=5 // pred_region
      %s243 = ssub.s32 %s11, 1
      %p244 = scmp.lt.s32.totalorder %s20, 1
      %s245 = scalar_select %p244, %s20, 1
      %s246 = smul.addr %s245, 20
      %s247 = smul.addr %s246, 4
      %s248 = scalar_lea.vmem %s0, %s247
      %p249 = pneg %p49
      %p250 = pneg %p46
      %p251 = scmp.lt.s32.totalorder %s21, 0
      %s252 = scalar_select %p251, %s21, 0
      %s253 = smul.addr %s252, 4
      %s254 = scalar_lea.vmem %s1, %s253
      %p255 = pneg %p75
      %p256 = pneg %p72
      %p257 = scmp.lt.s32.totalorder %s21, 0
      %s258 = scalar_select %p257, %s21, 0
      %s259 = scalar_lea.vmem %s2, %s258
      %p260 = pneg %p101
      %p261 = pneg %p98
      %p262 = scmp.lt.s32.totalorder %s20, 1
      %s263 = scalar_select %p262, %s20, 1
      %s264 = smul.addr %s263, 72
      %s265 = sadd.s32 54, %s264
      %s266 = smul.addr %s265, 4
      %s267 = scalar_lea.vmem %s3, %s266
      %p268 = pneg %p127
      %p269 = pneg %p124
      %p270 = scmp.lt.s32.totalorder %s21, 0
      %s271 = scalar_select %p270, %s21, 0
      %s272 = smul.addr %s271, 4
      %s273 = scalar_lea.vmem %s4, %s272
      %p274 = pneg %p153
      %p275 = pneg %p150
      %p276 = pneg %p181
      %p277 = pneg %p178
      %p278 = scmp.lt.s32.totalorder %s20, 1
      %s279 = scalar_select %p278, %s20, 1
      %p280 = scmp.lt.s32.totalorder %s21, 0
      %s281 = scalar_select %p280, %s21, 0
      %s282 = smul.addr %s279, 8
      %s283 = sadd.s32 %s281, %s282
      %s284 = smul.addr %s283, 8
      %s285 = scalar_lea.vmem %s5, %s284
      %p286 = scmp.lt.s32.totalorder %s20, 1
      %s287 = scalar_select %p286, %s20, 1
      %s288 = smul.addr %s287, 20
      %s289 = smul.addr %s288, 4
      %s290 = scalar_lea.vmem %s0, %s289
      %p291 = scmp.lt.s32.totalorder %s21, 0
      %s292 = scalar_select %p291, %s21, 0
      %s293 = smul.addr %s292, 4
      %s294 = scalar_lea.vmem %s1, %s293
      %p295 = scmp.lt.s32.totalorder %s21, 0
      %s296 = scalar_select %p295, %s21, 0
      %s297 = scalar_lea.vmem %s2, %s296
      %p298 = scmp.lt.s32.totalorder %s20, 1
      %s299 = scalar_select %p298, %s20, 1
      %s300 = smul.addr %s299, 72
      %s301 = sadd.s32 54, %s300
      %s302 = smul.addr %s301, 4
      %s303 = scalar_lea.vmem %s3, %s302
      %p304 = scmp.lt.s32.totalorder %s21, 0
      %s305 = scalar_select %p304, %s21, 0
      %s306 = smul.addr %s305, 4
      %s307 = scalar_lea.vmem %s4, %s306
      %p308 = scmp.lt.s32.totalorder %s20, 1
      %s309 = scalar_select %p308, %s20, 1
      %p310 = scmp.lt.s32.totalorder %s21, 0
      %s311 = scalar_select %p310, %s21, 0
      %s312 = smul.addr %s309, 8
      %s313 = sadd.s32 %s311, %s312
      %s314 = smul.addr %s313, 8
      %s315 = scalar_lea.vmem %s5, %s314
      %v317 = vld [vmem:[%s290] sm:$0xf]
      %v318 = vld [vmem:[%s290 + $0x4] sm:$0x1]
      %v319 = vld [vmem:[%s290 + $0x8] sm:$0xf]
      %v320 = vld [vmem:[%s290 + $0xc] sm:$0x1]
      %v321 = vld [vmem:[%s290 + $0x10] sm:$0xf]
      %v322 = vld [vmem:[%s290 + $0x14] sm:$0x1]
      %v323 = vld [vmem:[%s290 + $0x18] sm:$0xf]
      %v324 = vld [vmem:[%s290 + $0x1c] sm:$0x1]
      %v325 = vld [vmem:[%s290 + $0x20] sm:$0xf]
      %v326 = vld [vmem:[%s290 + $0x24] sm:$0x1]
      %v327 = vld [vmem:[%s290 + $0x28] sm:$0xf]
      %v328 = vld [vmem:[%s290 + $0x2c] sm:$0x1]
      %v329 = vld [vmem:[%s290 + $0x30] sm:$0xf]
      %v330 = vld [vmem:[%s290 + $0x34] sm:$0x1]
      %v331 = vld [vmem:[%s290 + $0x38] sm:$0xf]
      %v332 = vld [vmem:[%s290 + $0x3c] sm:$0x1]
      %v333 = vld [vmem:[%s290 + $0x40] sm:$0xf]
      %v334 = vld [vmem:[%s290 + $0x44] sm:$0x1]
      %v335 = vld [vmem:[%s290 + $0x48] sm:$0xf]
      %v336 = vld [vmem:[%s290 + $0x4c] sm:$0x1]
      %v337 = vld [vmem:[%s294] sm:$0xf]
      %vm338 = vsmask.f32 3328
      %vm339 = vsmask.f32 7440
      %vm340 = vmor %vm338, %vm339
      %v342 = vshrl.u32 %v317, 16
      %v344 = vrot.slane %v342, 4
      %v345 = vshll.u32 %v317, 16
      %v347 = vrot.slane %v345, 5
      %v348 = vor.u32 %v344, %v347
      %v349 = vrot.slane %v348, 4
      %v351 = vshll.u32 %v318, 16
      %v353 = vrot.slane %v351, 5
      %v354 = vsel %vm340, %v349, %v353
      %v356 = vshrl.u32 %v319, 16
      %v358 = vrot.slane %v356, 4
      %v359 = vshll.u32 %v319, 16
      %v361 = vrot.slane %v359, 5
      %v362 = vor.u32 %v358, %v361
      %v363 = vrot.slane %v362, 4
      %v365 = vshll.u32 %v320, 16
      %v367 = vrot.slane %v365, 5
      %v368 = vsel %vm340, %v363, %v367
      %v370 = vshrl.u32 %v321, 16
      %v372 = vrot.slane %v370, 4
      %v373 = vshll.u32 %v321, 16
      %v375 = vrot.slane %v373, 5
      %v376 = vor.u32 %v372, %v375
      %v377 = vrot.slane %v376, 4
      %v379 = vshll.u32 %v322, 16
      %v381 = vrot.slane %v379, 5
      %v382 = vsel %vm340, %v377, %v381
      %v384 = vshrl.u32 %v323, 16
      %v386 = vrot.slane %v384, 4
      %v387 = vshll.u32 %v323, 16
      %v389 = vrot.slane %v387, 5
      %v390 = vor.u32 %v386, %v389
      %v391 = vrot.slane %v390, 4
      %v393 = vshll.u32 %v324, 16
      %v395 = vrot.slane %v393, 5
      %v396 = vsel %vm340, %v391, %v395
      %v398 = vshrl.u32 %v325, 16
      %v400 = vrot.slane %v398, 4
      %v401 = vshll.u32 %v325, 16
      %v403 = vrot.slane %v401, 5
      %v404 = vor.u32 %v400, %v403
      %v405 = vrot.slane %v404, 4
      %v407 = vshll.u32 %v326, 16
      %v409 = vrot.slane %v407, 5
      %v410 = vsel %vm340, %v405, %v409
      %v412 = vshrl.u32 %v327, 16
      %v414 = vrot.slane %v412, 4
      %v415 = vshll.u32 %v327, 16
      %v417 = vrot.slane %v415, 5
      %v418 = vor.u32 %v414, %v417
      %v419 = vrot.slane %v418, 4
      %v421 = vshll.u32 %v328, 16
      %v423 = vrot.slane %v421, 5
      %v424 = vsel %vm340, %v419, %v423
      %v426 = vshrl.u32 %v329, 16
      %v428 = vrot.slane %v426, 4
      %v429 = vshll.u32 %v329, 16
      %v431 = vrot.slane %v429, 5
      %v432 = vor.u32 %v428, %v431
      %v433 = vrot.slane %v432, 4
      %v435 = vshll.u32 %v330, 16
      %v437 = vrot.slane %v435, 5
      %v438 = vsel %vm340, %v433, %v437
      %v440 = vshrl.u32 %v331, 16
      %v442 = vrot.slane %v440, 4
      %v443 = vshll.u32 %v331, 16
      %v445 = vrot.slane %v443, 5
      %v446 = vor.u32 %v442, %v445
      %v447 = vrot.slane %v446, 4
      %v449 = vshll.u32 %v332, 16
      %v451 = vrot.slane %v449, 5
      %v452 = vsel %vm340, %v447, %v451
      %v453 = vld [vmem:[%s294 + $0x4] sm:$0xf]
      %v454 = vunpack.c.l.b16 %v354
      %v455 = vunpack.c.l.b16 %v368
      %v456 = vunpack.c.l.b16 %v382
      %v457 = vunpack.c.l.b16 %v396
      %v458 = vunpack.c.l.b16 %v410
      %v459 = vunpack.c.l.b16 %v424
      %v460 = vunpack.c.l.b16 %v438
      %v461 = vunpack.c.l.b16 %v452
      %v462 = vpack.c.b16 %v455, %v454
      %v463 = vpack.c.b16 %v457, %v456
      %v464 = vpack.c.b16 %v459, %v458
      %v465 = vpack.c.b16 %v461, %v460
      %vm466 = vcmask 64512
      %v468 = vsel %vm466, %v462, 0
      %v471 = vsel %vm466, %v463, 0
      %v474 = vsel %vm466, %v464, 0
      %v477 = vsel %vm466, %v465, 0
      %vm479 = vcmask 1043456
      %v481 = vsel %vm479, %v453, 0
      %483 = vmatprep.subr.bf16.mxu0 0
      %484 = vmatpush1.bf16.msra.mxu0 0
      %485 = vmatprep.subr.bf16.mxu0 0
      %486 = vmatpush1.bf16.msra.mxu0 0
      %487 = vmatprep.subr.bf16.mxu0 0
      %488 = vmatpush1.bf16.msra.mxu0 0
      %489 = vmatprep.subr.bf16.mxu0 0
      %490 = vmatpush1.bf16.msra.mxu0 0
      %491 = vmatprep.subr.bf16.mxu0 0
      %492 = vmatpush1.bf16.msra.mxu0 0
      %493 = vmatprep.subr.bf16.mxu0 0
      %494 = vmatpush1.bf16.msra.mxu0 0
      %495 = vmatprep.subr.bf16.mxu0 0
      %496 = vmatpush1.bf16.msra.mxu0 0
      %497 = vmatprep.subr.bf16.mxu0 0
      %498 = vmatpush1.bf16.msra.mxu0 %v481
      %499 = vmatprep.subr.bf16.mxu0 0
      %500 = vmatpush2.bf16.msra.mxu0 0
      %501 = vmatprep.subr.bf16.mxu0 0
      %502 = vmatpush2.bf16.msra.mxu0 0
      %503 = vmatprep.subr.bf16.mxu0 0
      %504 = vmatpush2.bf16.msra.mxu0 0
      %505 = vmatprep.subr.bf16.mxu0 0
      %506 = vmatpush2.bf16.msra.mxu0 0
      %507 = vmatprep.subr.bf16.mxu0 0
      %508 = vmatpush2.bf16.msra.mxu0 0
      %509 = vmatprep.subr.bf16.mxu0 0
      %510 = vmatpush2.bf16.msra.mxu0 0
      %511 = vmatprep.subr.bf16.mxu0 0
      %512 = vmatpush2.bf16.msra.mxu0 0
      %513 = vmatprep.subr.bf16.mxu0 0
      %514 = vmatpush2.bf16.msra.mxu0 0
      %515 = vmatprep.mubr.bf16.mxu0 0
      %516 = vmatmul.mubr.bf16.gmra.mxu0 %v468
      %v517 = vpop.f32.mrf.mxu0
      %v518 = vadd.f32 0.0, %v517
      %v519 = vpop.f32.mrf.mxu0
      %v520 = vpop.f32.mrf.mxu0
      %v521 = vadd.f32 0.0, %v520
      %v522 = vpop.f32.mrf.mxu0
      %523 = vmatprep.mubr.bf16.mxu0 0
      %524 = vmatmul.mubr.bf16.gmra.mxu0 %v471
      %v525 = vpop.f32.mrf.mxu0
      %v526 = vadd.f32 0.0, %v525
      %v527 = vpop.f32.mrf.mxu0
      %v528 = vpop.f32.mrf.mxu0
      %v529 = vadd.f32 0.0, %v528
      %v530 = vpop.f32.mrf.mxu0
      %531 = vmatprep.mubr.bf16.mxu0 0
      %532 = vmatmul.mubr.bf16.gmra.mxu0 %v474
      %v533 = vpop.f32.mrf.mxu0
      %v534 = vadd.f32 0.0, %v533
      %v535 = vpop.f32.mrf.mxu0
      %v536 = vpop.f32.mrf.mxu0
      %v537 = vadd.f32 0.0, %v536
      %v538 = vpop.f32.mrf.mxu0
      %539 = vmatprep.mubr.bf16.mxu0 0
      %540 = vmatmul.mubr.bf16.gmra.mxu0 %v477
      %v541 = vpop.f32.mrf.mxu0
      %v542 = vadd.f32 0.0, %v541
      %v543 = vpop.f32.mrf.mxu0
      %v544 = vpop.f32.mrf.mxu0
      %v545 = vadd.f32 0.0, %v544
      %v546 = vpop.f32.mrf.mxu0
      %547 = vdwg.mxu0
      %v556 = vunpack.c.l.b16 %v317
      %v557 = vunpack.c.l.b16 %v319
      %v558 = vunpack.c.l.b16 %v321
      %v559 = vunpack.c.l.b16 %v323
      %v560 = vunpack.c.l.b16 %v325
      %v561 = vunpack.c.l.b16 %v327
      %v562 = vunpack.c.l.b16 %v329
      %v563 = vunpack.c.l.b16 %v331
      %v564 = vpack.c.b16 %v557, %v556
      %v565 = vpack.c.b16 %v559, %v558
      %v566 = vpack.c.b16 %v561, %v560
      %v567 = vpack.c.b16 %v563, %v562
      %v569 = vsel %vm466, %v564, 0
      %v572 = vsel %vm466, %v565, 0
      %v575 = vsel %vm466, %v566, 0
      %v578 = vsel %vm466, %v567, 0
      %v581 = vsel %vm479, %v337, 0
      %583 = vmatprep.subr.bf16.mxu0 0
      %584 = vmatpush1.bf16.msra.mxu0 0
      %585 = vmatprep.subr.bf16.mxu0 0
      %586 = vmatpush1.bf16.msra.mxu0 0
      %587 = vmatprep.subr.bf16.mxu0 0
      %588 = vmatpush1.bf16.msra.mxu0 0
      %589 = vmatprep.subr.bf16.mxu0 0
      %590 = vmatpush1.bf16.msra.mxu0 0
      %591 = vmatprep.subr.bf16.mxu0 0
      %592 = vmatpush1.bf16.msra.mxu0 0
      %593 = vmatprep.subr.bf16.mxu0 0
      %594 = vmatpush1.bf16.msra.mxu0 0
      %595 = vmatprep.subr.bf16.mxu0 0
      %596 = vmatpush1.bf16.msra.mxu0 0
      %597 = vmatprep.subr.bf16.mxu0 0
      %598 = vmatpush1.bf16.msra.mxu0 %v581
      %599 = vmatprep.subr.bf16.mxu0 0
      %600 = vmatpush2.bf16.msra.mxu0 0
      %601 = vmatprep.subr.bf16.mxu0 0
      %602 = vmatpush2.bf16.msra.mxu0 0
      %603 = vmatprep.subr.bf16.mxu0 0
      %604 = vmatpush2.bf16.msra.mxu0 0
      %605 = vmatprep.subr.bf16.mxu0 0
      %606 = vmatpush2.bf16.msra.mxu0 0
      %607 = vmatprep.subr.bf16.mxu0 0
      %608 = vmatpush2.bf16.msra.mxu0 0
      %609 = vmatprep.subr.bf16.mxu0 0
      %610 = vmatpush2.bf16.msra.mxu0 0
      %611 = vmatprep.subr.bf16.mxu0 0
      %612 = vmatpush2.bf16.msra.mxu0 0
      %613 = vmatprep.subr.bf16.mxu0 0
      %614 = vmatpush2.bf16.msra.mxu0 0
      %615 = vmatprep.mubr.bf16.mxu0 0
      %616 = vmatmul.mubr.bf16.gmra.mxu0 %v569
      %v617 = vpop.f32.mrf.mxu0
      %v618 = vadd.f32 %v518, %v617
      %v619 = vpop.f32.mrf.mxu0
      %v620 = vpop.f32.mrf.mxu0
      %v621 = vadd.f32 %v521, %v620
      %v622 = vpop.f32.mrf.mxu0
      %623 = vmatprep.mubr.bf16.mxu0 0
      %624 = vmatmul.mubr.bf16.gmra.mxu0 %v572
      %v625 = vpop.f32.mrf.mxu0
      %v626 = vadd.f32 %v526, %v625
      %v627 = vpop.f32.mrf.mxu0
      %v628 = vpop.f32.mrf.mxu0
      %v629 = vadd.f32 %v529, %v628
      %v630 = vpop.f32.mrf.mxu0
      %631 = vmatprep.mubr.bf16.mxu0 0
      %632 = vmatmul.mubr.bf16.gmra.mxu0 %v575
      %v633 = vpop.f32.mrf.mxu0
      %v634 = vadd.f32 %v534, %v633
      %v635 = vpop.f32.mrf.mxu0
      %v636 = vpop.f32.mrf.mxu0
      %v637 = vadd.f32 %v537, %v636
      %v638 = vpop.f32.mrf.mxu0
      %639 = vmatprep.mubr.bf16.mxu0 0
      %640 = vmatmul.mubr.bf16.gmra.mxu0 %v578
      %v641 = vpop.f32.mrf.mxu0
      %v642 = vadd.f32 %v542, %v641
      %v643 = vpop.f32.mrf.mxu0
      %v644 = vpop.f32.mrf.mxu0
      %v645 = vadd.f32 %v545, %v644
      %v646 = vpop.f32.mrf.mxu0
      %647 = vdwg.mxu0
      %vm656 = vcmask 1042432
      %vm657 = vcmask 1046532
      %vm658 = vmor %vm656, %vm657
      %v659 = vrot.slane %v317, 5
      %v660 = vrot.slane %v659, 4
      %v661 = vrot.slane %v318, 5
      %v662 = vsel %vm658, %v660, %v661
      %v663 = vrot.slane %v319, 5
      %v664 = vrot.slane %v663, 4
      %v665 = vrot.slane %v320, 5
      %v666 = vsel %vm658, %v664, %v665
      %v667 = vrot.slane %v321, 5
      %v668 = vrot.slane %v667, 4
      %v669 = vrot.slane %v322, 5
      %v670 = vsel %vm658, %v668, %v669
      %v671 = vrot.slane %v323, 5
      %v672 = vrot.slane %v671, 4
      %v673 = vrot.slane %v324, 5
      %v674 = vsel %vm658, %v672, %v673
      %v675 = vrot.slane %v325, 5
      %v676 = vrot.slane %v675, 4
      %v677 = vrot.slane %v326, 5
      %v678 = vsel %vm658, %v676, %v677
      %v679 = vrot.slane %v327, 5
      %v680 = vrot.slane %v679, 4
      %v681 = vrot.slane %v328, 5
      %v682 = vsel %vm658, %v680, %v681
      %v683 = vrot.slane %v329, 5
      %v684 = vrot.slane %v683, 4
      %v685 = vrot.slane %v330, 5
      %v686 = vsel %vm658, %v684, %v685
      %v687 = vrot.slane %v331, 5
      %v688 = vrot.slane %v687, 4
      %v689 = vrot.slane %v332, 5
      %v690 = vsel %vm658, %v688, %v689
      %v691 = vld [vmem:[%s294 + $0x8] sm:$0xf]
      %v692 = vunpack.c.l.b16 %v662
      %v693 = vunpack.c.l.b16 %v666
      %v694 = vunpack.c.l.b16 %v670
      %v695 = vunpack.c.l.b16 %v674
      %v696 = vunpack.c.l.b16 %v678
      %v697 = vunpack.c.l.b16 %v682
      %v698 = vunpack.c.l.b16 %v686
      %v699 = vunpack.c.l.b16 %v690
      %v700 = vpack.c.b16 %v693, %v692
      %v701 = vpack.c.b16 %v695, %v694
      %v702 = vpack.c.b16 %v697, %v696
      %v703 = vpack.c.b16 %v699, %v698
      %v705 = vsel %vm466, %v700, 0
      %v708 = vsel %vm466, %v701, 0
      %v711 = vsel %vm466, %v702, 0
      %v714 = vsel %vm466, %v703, 0
      %v717 = vsel %vm479, %v691, 0
      %719 = vmatprep.subr.bf16.mxu0 0
      %720 = vmatpush1.bf16.msra.mxu0 0
      %721 = vmatprep.subr.bf16.mxu0 0
      %722 = vmatpush1.bf16.msra.mxu0 0
      %723 = vmatprep.subr.bf16.mxu0 0
      %724 = vmatpush1.bf16.msra.mxu0 0
      %725 = vmatprep.subr.bf16.mxu0 0
      %726 = vmatpush1.bf16.msra.mxu0 0
      %727 = vmatprep.subr.bf16.mxu0 0
      %728 = vmatpush1.bf16.msra.mxu0 0
      %729 = vmatprep.subr.bf16.mxu0 0
      %730 = vmatpush1.bf16.msra.mxu0 0
      %731 = vmatprep.subr.bf16.mxu0 0
      %732 = vmatpush1.bf16.msra.mxu0 0
      %733 = vmatprep.subr.bf16.mxu0 0
      %734 = vmatpush1.bf16.msra.mxu0 %v717
      %735 = vmatprep.subr.bf16.mxu0 0
      %736 = vmatpush2.bf16.msra.mxu0 0
      %737 = vmatprep.subr.bf16.mxu0 0
      %738 = vmatpush2.bf16.msra.mxu0 0
      %739 = vmatprep.subr.bf16.mxu0 0
      %740 = vmatpush2.bf16.msra.mxu0 0
      %741 = vmatprep.subr.bf16.mxu0 0
      %742 = vmatpush2.bf16.msra.mxu0 0
      %743 = vmatprep.subr.bf16.mxu0 0
      %744 = vmatpush2.bf16.msra.mxu0 0
      %745 = vmatprep.subr.bf16.mxu0 0
      %746 = vmatpush2.bf16.msra.mxu0 0
      %747 = vmatprep.subr.bf16.mxu0 0
      %748 = vmatpush2.bf16.msra.mxu0 0
      %749 = vmatprep.subr.bf16.mxu0 0
      %750 = vmatpush2.bf16.msra.mxu0 0
      %751 = vmatprep.mubr.bf16.mxu0 0
      %752 = vmatmul.mubr.bf16.gmra.mxu0 %v705
      %v753 = vpop.f32.mrf.mxu0
      %v754 = vadd.f32 0.0, %v753
      %v755 = vpop.f32.mrf.mxu0
      %v756 = vpop.f32.mrf.mxu0
      %v757 = vadd.f32 0.0, %v756
      %v758 = vpop.f32.mrf.mxu0
      %759 = vmatprep.mubr.bf16.mxu0 0
      %760 = vmatmul.mubr.bf16.gmra.mxu0 %v708
      %v761 = vpop.f32.mrf.mxu0
      %v762 = vadd.f32 0.0, %v761
      %v763 = vpop.f32.mrf.mxu0
      %v764 = vpop.f32.mrf.mxu0
      %v765 = vadd.f32 0.0, %v764
      %v766 = vpop.f32.mrf.mxu0
      %767 = vmatprep.mubr.bf16.mxu0 0
      %768 = vmatmul.mubr.bf16.gmra.mxu0 %v711
      %v769 = vpop.f32.mrf.mxu0
      %v770 = vadd.f32 0.0, %v769
      %v771 = vpop.f32.mrf.mxu0
      %v772 = vpop.f32.mrf.mxu0
      %v773 = vadd.f32 0.0, %v772
      %v774 = vpop.f32.mrf.mxu0
      %775 = vmatprep.mubr.bf16.mxu0 0
      %776 = vmatmul.mubr.bf16.gmra.mxu0 %v714
      %v777 = vpop.f32.mrf.mxu0
      %v778 = vadd.f32 0.0, %v777
      %v779 = vpop.f32.mrf.mxu0
      %v780 = vpop.f32.mrf.mxu0
      %v781 = vadd.f32 0.0, %v780
      %v782 = vpop.f32.mrf.mxu0
      %783 = vdwg.mxu0
      %v784 = vadd.f32 %v618, %v754
      %v785 = vadd.f32 %v621, %v757
      %v786 = vadd.f32 %v626, %v762
      %v787 = vadd.f32 %v629, %v765
      %v788 = vadd.f32 %v634, %v770
      %v789 = vadd.f32 %v637, %v773
      %v790 = vadd.f32 %v642, %v778
      %v791 = vadd.f32 %v645, %v781
      %v792 = vld [vmem:[%s294 + $0xc] sm:$0xf]
      %v794 = vunpack.c.l.b16 %v333
      %v795 = vpack.c.b16 %v558, %v557
      %v796 = vpack.c.b16 %v560, %v559
      %v797 = vpack.c.b16 %v562, %v561
      %v798 = vpack.c.b16 %v794, %v563
      %v800 = vsel %vm466, %v795, 0
      %v803 = vsel %vm466, %v796, 0
      %v806 = vsel %vm466, %v797, 0
      %v809 = vsel %vm466, %v798, 0
      %v812 = vsel %vm479, %v792, 0
      %814 = vmatprep.subr.bf16.mxu0 0
      %815 = vmatpush1.bf16.msra.mxu0 0
      %816 = vmatprep.subr.bf16.mxu0 0
      %817 = vmatpush1.bf16.msra.mxu0 0
      %818 = vmatprep.subr.bf16.mxu0 0
      %819 = vmatpush1.bf16.msra.mxu0 0
      %820 = vmatprep.subr.bf16.mxu0 0
      %821 = vmatpush1.bf16.msra.mxu0 0
      %822 = vmatprep.subr.bf16.mxu0 0
      %823 = vmatpush1.bf16.msra.mxu0 0
      %824 = vmatprep.subr.bf16.mxu0 0
      %825 = vmatpush1.bf16.msra.mxu0 0
      %826 = vmatprep.subr.bf16.mxu0 0
      %827 = vmatpush1.bf16.msra.mxu0 0
      %828 = vmatprep.subr.bf16.mxu0 0
      %829 = vmatpush1.bf16.msra.mxu0 %v812
      %830 = vmatprep.subr.bf16.mxu0 0
      %831 = vmatpush2.bf16.msra.mxu0 0
      %832 = vmatprep.subr.bf16.mxu0 0
      %833 = vmatpush2.bf16.msra.mxu0 0
      %834 = vmatprep.subr.bf16.mxu0 0
      %835 = vmatpush2.bf16.msra.mxu0 0
      %836 = vmatprep.subr.bf16.mxu0 0
      %837 = vmatpush2.bf16.msra.mxu0 0
      %838 = vmatprep.subr.bf16.mxu0 0
      %839 = vmatpush2.bf16.msra.mxu0 0
      %840 = vmatprep.subr.bf16.mxu0 0
      %841 = vmatpush2.bf16.msra.mxu0 0
      %842 = vmatprep.subr.bf16.mxu0 0
      %843 = vmatpush2.bf16.msra.mxu0 0
      %844 = vmatprep.subr.bf16.mxu0 0
      %845 = vmatpush2.bf16.msra.mxu0 0
      %846 = vmatprep.mubr.bf16.mxu0 0
      %847 = vmatmul.mubr.bf16.gmra.mxu0 %v800
      %v848 = vpop.f32.mrf.mxu0
      %v849 = vadd.f32 0.0, %v848
      %v850 = vpop.f32.mrf.mxu0
      %v851 = vpop.f32.mrf.mxu0
      %v852 = vadd.f32 0.0, %v851
      %v853 = vpop.f32.mrf.mxu0
      %854 = vmatprep.mubr.bf16.mxu0 0
      %855 = vmatmul.mubr.bf16.gmra.mxu0 %v803
      %v856 = vpop.f32.mrf.mxu0
      %v857 = vadd.f32 0.0, %v856
      %v858 = vpop.f32.mrf.mxu0
      %v859 = vpop.f32.mrf.mxu0
      %v860 = vadd.f32 0.0, %v859
      %v861 = vpop.f32.mrf.mxu0
      %862 = vmatprep.mubr.bf16.mxu0 0
      %863 = vmatmul.mubr.bf16.gmra.mxu0 %v806
      %v864 = vpop.f32.mrf.mxu0
      %v865 = vadd.f32 0.0, %v864
      %v866 = vpop.f32.mrf.mxu0
      %v867 = vpop.f32.mrf.mxu0
      %v868 = vadd.f32 0.0, %v867
      %v869 = vpop.f32.mrf.mxu0
      %870 = vmatprep.mubr.bf16.mxu0 0
      %871 = vmatmul.mubr.bf16.gmra.mxu0 %v809
      %v872 = vpop.f32.mrf.mxu0
      %v873 = vadd.f32 0.0, %v872
      %v874 = vpop.f32.mrf.mxu0
      %v875 = vpop.f32.mrf.mxu0
      %v876 = vadd.f32 0.0, %v875
      %v877 = vpop.f32.mrf.mxu0
      %878 = vdwg.mxu0
      %v879 = vadd.f32 %v784, %v849
      %v880 = vadd.f32 %v785, %v852
      %v881 = vadd.f32 %v786, %v857
      %v882 = vadd.f32 %v787, %v860
      %v883 = vadd.f32 %v788, %v865
      %v884 = vadd.f32 %v789, %v868
      %v885 = vadd.f32 %v790, %v873
      %v886 = vadd.f32 %v791, %v876
      %v888 = vshrl.u32 %v333, 16
      %v890 = vrot.slane %v888, 4
      %v891 = vshll.u32 %v333, 16
      %v893 = vrot.slane %v891, 5
      %v894 = vor.u32 %v890, %v893
      %v895 = vrot.slane %v894, 4
      %v897 = vshll.u32 %v334, 16
      %v899 = vrot.slane %v897, 5
      %v900 = vsel %vm340, %v895, %v899
      %v901 = vld [vmem:[%s294 + $0x10] sm:$0xf]
      %v902 = vunpack.c.l.b16 %v900
      %v903 = vpack.c.b16 %v456, %v455
      %v904 = vpack.c.b16 %v458, %v457
      %v905 = vpack.c.b16 %v460, %v459
      %v906 = vpack.c.b16 %v902, %v461
      %v908 = vsel %vm466, %v903, 0
      %v911 = vsel %vm466, %v904, 0
      %v914 = vsel %vm466, %v905, 0
      %v917 = vsel %vm466, %v906, 0
      %v920 = vsel %vm479, %v901, 0
      %922 = vmatprep.subr.bf16.mxu0 0
      %923 = vmatpush1.bf16.msra.mxu0 0
      %924 = vmatprep.subr.bf16.mxu0 0
      %925 = vmatpush1.bf16.msra.mxu0 0
      %926 = vmatprep.subr.bf16.mxu0 0
      %927 = vmatpush1.bf16.msra.mxu0 0
      %928 = vmatprep.subr.bf16.mxu0 0
      %929 = vmatpush1.bf16.msra.mxu0 0
      %930 = vmatprep.subr.bf16.mxu0 0
      %931 = vmatpush1.bf16.msra.mxu0 0
      %932 = vmatprep.subr.bf16.mxu0 0
      %933 = vmatpush1.bf16.msra.mxu0 0
      %934 = vmatprep.subr.bf16.mxu0 0
      %935 = vmatpush1.bf16.msra.mxu0 0
      %936 = vmatprep.subr.bf16.mxu0 0
      %937 = vmatpush1.bf16.msra.mxu0 %v920
      %938 = vmatprep.subr.bf16.mxu0 0
      %939 = vmatpush2.bf16.msra.mxu0 0
      %940 = vmatprep.subr.bf16.mxu0 0
      %941 = vmatpush2.bf16.msra.mxu0 0
      %942 = vmatprep.subr.bf16.mxu0 0
      %943 = vmatpush2.bf16.msra.mxu0 0
      %944 = vmatprep.subr.bf16.mxu0 0
      %945 = vmatpush2.bf16.msra.mxu0 0
      %946 = vmatprep.subr.bf16.mxu0 0
      %947 = vmatpush2.bf16.msra.mxu0 0
      %948 = vmatprep.subr.bf16.mxu0 0
      %949 = vmatpush2.bf16.msra.mxu0 0
      %950 = vmatprep.subr.bf16.mxu0 0
      %951 = vmatpush2.bf16.msra.mxu0 0
      %952 = vmatprep.subr.bf16.mxu0 0
      %953 = vmatpush2.bf16.msra.mxu0 0
      %954 = vmatprep.mubr.bf16.mxu0 0
      %955 = vmatmul.mubr.bf16.gmra.mxu0 %v908
      %v956 = vpop.f32.mrf.mxu0
      %v957 = vadd.f32 0.0, %v956
      %v958 = vpop.f32.mrf.mxu0
      %v959 = vpop.f32.mrf.mxu0
      %v960 = vadd.f32 0.0, %v959
      %v961 = vpop.f32.mrf.mxu0
      %962 = vmatprep.mubr.bf16.mxu0 0
      %963 = vmatmul.mubr.bf16.gmra.mxu0 %v911
      %v964 = vpop.f32.mrf.mxu0
      %v965 = vadd.f32 0.0, %v964
      %v966 = vpop.f32.mrf.mxu0
      %v967 = vpop.f32.mrf.mxu0
      %v968 = vadd.f32 0.0, %v967
      %v969 = vpop.f32.mrf.mxu0
      %970 = vmatprep.mubr.bf16.mxu0 0
      %971 = vmatmul.mubr.bf16.gmra.mxu0 %v914
      %v972 = vpop.f32.mrf.mxu0
      %v973 = vadd.f32 0.0, %v972
      %v974 = vpop.f32.mrf.mxu0
      %v975 = vpop.f32.mrf.mxu0
      %v976 = vadd.f32 0.0, %v975
      %v977 = vpop.f32.mrf.mxu0
      %978 = vmatprep.mubr.bf16.mxu0 0
      %979 = vmatmul.mubr.bf16.gmra.mxu0 %v917
      %v980 = vpop.f32.mrf.mxu0
      %v981 = vadd.f32 0.0, %v980
      %v982 = vpop.f32.mrf.mxu0
      %v983 = vpop.f32.mrf.mxu0
      %v984 = vadd.f32 0.0, %v983
      %v985 = vpop.f32.mrf.mxu0
      %986 = vdwg.mxu0
      %v987 = vadd.f32 %v879, %v957
      %v988 = vadd.f32 %v880, %v960
      %v989 = vadd.f32 %v881, %v965
      %v990 = vadd.f32 %v882, %v968
      %v991 = vadd.f32 %v883, %v973
      %v992 = vadd.f32 %v884, %v976
      %v993 = vadd.f32 %v885, %v981
      %v994 = vadd.f32 %v886, %v984
      %v996 = vrot.slane %v333, 5
      %v997 = vrot.slane %v996, 4
      %v998 = vrot.slane %v334, 5
      %v999 = vsel %vm658, %v997, %v998
      %v1000 = vld [vmem:[%s294 + $0x14] sm:$0xf]
      %v1001 = vunpack.c.l.b16 %v999
      %v1002 = vpack.c.b16 %v694, %v693
      %v1003 = vpack.c.b16 %v696, %v695
      %v1004 = vpack.c.b16 %v698, %v697
      %v1005 = vpack.c.b16 %v1001, %v699
      %v1007 = vsel %vm466, %v1002, 0
      %v1010 = vsel %vm466, %v1003, 0
      %v1013 = vsel %vm466, %v1004, 0
      %v1016 = vsel %vm466, %v1005, 0
      %v1019 = vsel %vm479, %v1000, 0
      %1021 = vmatprep.subr.bf16.mxu0 0
      %1022 = vmatpush1.bf16.msra.mxu0 0
      %1023 = vmatprep.subr.bf16.mxu0 0
      %1024 = vmatpush1.bf16.msra.mxu0 0
      %1025 = vmatprep.subr.bf16.mxu0 0
      %1026 = vmatpush1.bf16.msra.mxu0 0
      %1027 = vmatprep.subr.bf16.mxu0 0
      %1028 = vmatpush1.bf16.msra.mxu0 0
      %1029 = vmatprep.subr.bf16.mxu0 0
      %1030 = vmatpush1.bf16.msra.mxu0 0
      %1031 = vmatprep.subr.bf16.mxu0 0
      %1032 = vmatpush1.bf16.msra.mxu0 0
      %1033 = vmatprep.subr.bf16.mxu0 0
      %1034 = vmatpush1.bf16.msra.mxu0 0
      %1035 = vmatprep.subr.bf16.mxu0 0
      %1036 = vmatpush1.bf16.msra.mxu0 %v1019
      %1037 = vmatprep.subr.bf16.mxu0 0
      %1038 = vmatpush2.bf16.msra.mxu0 0
      %1039 = vmatprep.subr.bf16.mxu0 0
      %1040 = vmatpush2.bf16.msra.mxu0 0
      %1041 = vmatprep.subr.bf16.mxu0 0
      %1042 = vmatpush2.bf16.msra.mxu0 0
      %1043 = vmatprep.subr.bf16.mxu0 0
      %1044 = vmatpush2.bf16.msra.mxu0 0
      %1045 = vmatprep.subr.bf16.mxu0 0
      %1046 = vmatpush2.bf16.msra.mxu0 0
      %1047 = vmatprep.subr.bf16.mxu0 0
      %1048 = vmatpush2.bf16.msra.mxu0 0
      %1049 = vmatprep.subr.bf16.mxu0 0
      %1050 = vmatpush2.bf16.msra.mxu0 0
      %1051 = vmatprep.subr.bf16.mxu0 0
      %1052 = vmatpush2.bf16.msra.mxu0 0
      %1053 = vmatprep.mubr.bf16.mxu0 0
      %1054 = vmatmul.mubr.bf16.gmra.mxu0 %v1007
      %v1055 = vpop.f32.mrf.mxu0
      %v1056 = vadd.f32 0.0, %v1055
      %v1057 = vpop.f32.mrf.mxu0
      %v1058 = vpop.f32.mrf.mxu0
      %v1059 = vadd.f32 0.0, %v1058
      %v1060 = vpop.f32.mrf.mxu0
      %1061 = vmatprep.mubr.bf16.mxu0 0
      %1062 = vmatmul.mubr.bf16.gmra.mxu0 %v1010
      %v1063 = vpop.f32.mrf.mxu0
      %v1064 = vadd.f32 0.0, %v1063
      %v1065 = vpop.f32.mrf.mxu0
      %v1066 = vpop.f32.mrf.mxu0
      %v1067 = vadd.f32 0.0, %v1066
      %v1068 = vpop.f32.mrf.mxu0
      %1069 = vmatprep.mubr.bf16.mxu0 0
      %1070 = vmatmul.mubr.bf16.gmra.mxu0 %v1013
      %v1071 = vpop.f32.mrf.mxu0
      %v1072 = vadd.f32 0.0, %v1071
      %v1073 = vpop.f32.mrf.mxu0
      %v1074 = vpop.f32.mrf.mxu0
      %v1075 = vadd.f32 0.0, %v1074
      %v1076 = vpop.f32.mrf.mxu0
      %1077 = vmatprep.mubr.bf16.mxu0 0
      %1078 = vmatmul.mubr.bf16.gmra.mxu0 %v1016
      %v1079 = vpop.f32.mrf.mxu0
      %v1080 = vadd.f32 0.0, %v1079
      %v1081 = vpop.f32.mrf.mxu0
      %v1082 = vpop.f32.mrf.mxu0
      %v1083 = vadd.f32 0.0, %v1082
      %v1084 = vpop.f32.mrf.mxu0
      %1085 = vdwg.mxu0
      %v1086 = vadd.f32 %v987, %v1056
      %v1087 = vadd.f32 %v988, %v1059
      %v1088 = vadd.f32 %v989, %v1064
      %v1089 = vadd.f32 %v990, %v1067
      %v1090 = vadd.f32 %v991, %v1072
      %v1091 = vadd.f32 %v992, %v1075
      %v1092 = vadd.f32 %v993, %v1080
      %v1093 = vadd.f32 %v994, %v1083
      %v1094 = vld [vmem:[%s294 + $0x18] sm:$0xf]
      %v1096 = vunpack.c.l.b16 %v335
      %v1097 = vpack.c.b16 %v1096, %v794
      %v1099 = vsel %vm466, %v1097, 0
      %v1102 = vsel %vm479, %v1094, 0
      %1104 = vmatprep.subr.bf16.mxu0 0
      %1105 = vmatpush1.bf16.msra.mxu0 0
      %1106 = vmatprep.subr.bf16.mxu0 0
      %1107 = vmatpush1.bf16.msra.mxu0 0
      %1108 = vmatprep.subr.bf16.mxu0 0
      %1109 = vmatpush1.bf16.msra.mxu0 0
      %1110 = vmatprep.subr.bf16.mxu0 0
      %1111 = vmatpush1.bf16.msra.mxu0 0
      %1112 = vmatprep.subr.bf16.mxu0 0
      %1113 = vmatpush1.bf16.msra.mxu0 0
      %1114 = vmatprep.subr.bf16.mxu0 0
      %1115 = vmatpush1.bf16.msra.mxu0 0
      %1116 = vmatprep.subr.bf16.mxu0 0
      %1117 = vmatpush1.bf16.msra.mxu0 0
      %1118 = vmatprep.subr.bf16.mxu0 0
      %1119 = vmatpush1.bf16.msra.mxu0 %v1102
      %1120 = vmatprep.subr.bf16.mxu0 0
      %1121 = vmatpush2.bf16.msra.mxu0 0
      %1122 = vmatprep.subr.bf16.mxu0 0
      %1123 = vmatpush2.bf16.msra.mxu0 0
      %1124 = vmatprep.subr.bf16.mxu0 0
      %1125 = vmatpush2.bf16.msra.mxu0 0
      %1126 = vmatprep.subr.bf16.mxu0 0
      %1127 = vmatpush2.bf16.msra.mxu0 0
      %1128 = vmatprep.subr.bf16.mxu0 0
      %1129 = vmatpush2.bf16.msra.mxu0 0
      %1130 = vmatprep.subr.bf16.mxu0 0
      %1131 = vmatpush2.bf16.msra.mxu0 0
      %1132 = vmatprep.subr.bf16.mxu0 0
      %1133 = vmatpush2.bf16.msra.mxu0 0
      %1134 = vmatprep.subr.bf16.mxu0 0
      %1135 = vmatpush2.bf16.msra.mxu0 0
      %1136 = vmatprep.mubr.bf16.mxu0 0
      %1137 = vmatmul.mubr.bf16.gmra.mxu0 %v572
      %v1138 = vpop.f32.mrf.mxu0
      %v1139 = vadd.f32 0.0, %v1138
      %v1140 = vpop.f32.mrf.mxu0
      %v1141 = vpop.f32.mrf.mxu0
      %v1142 = vadd.f32 0.0, %v1141
      %v1143 = vpop.f32.mrf.mxu0
      %1144 = vmatprep.mubr.bf16.mxu0 0
      %1145 = vmatmul.mubr.bf16.gmra.mxu0 %v575
      %v1146 = vpop.f32.mrf.mxu0
      %v1147 = vadd.f32 0.0, %v1146
      %v1148 = vpop.f32.mrf.mxu0
      %v1149 = vpop.f32.mrf.mxu0
      %v1150 = vadd.f32 0.0, %v1149
      %v1151 = vpop.f32.mrf.mxu0
      %1152 = vmatprep.mubr.bf16.mxu0 0
      %1153 = vmatmul.mubr.bf16.gmra.mxu0 %v578
      %v1154 = vpop.f32.mrf.mxu0
      %v1155 = vadd.f32 0.0, %v1154
      %v1156 = vpop.f32.mrf.mxu0
      %v1157 = vpop.f32.mrf.mxu0
      %v1158 = vadd.f32 0.0, %v1157
      %v1159 = vpop.f32.mrf.mxu0
      %1160 = vmatprep.mubr.bf16.mxu0 0
      %1161 = vmatmul.mubr.bf16.gmra.mxu0 %v1099
      %v1162 = vpop.f32.mrf.mxu0
      %v1163 = vadd.f32 0.0, %v1162
      %v1164 = vpop.f32.mrf.mxu0
      %v1165 = vpop.f32.mrf.mxu0
      %v1166 = vadd.f32 0.0, %v1165
      %v1167 = vpop.f32.mrf.mxu0
      %1168 = vdwg.mxu0
      %v1169 = vadd.f32 %v1086, %v1139
      %v1170 = vadd.f32 %v1087, %v1142
      %v1171 = vadd.f32 %v1088, %v1147
      %v1172 = vadd.f32 %v1089, %v1150
      %v1173 = vadd.f32 %v1090, %v1155
      %v1174 = vadd.f32 %v1091, %v1158
      %v1175 = vadd.f32 %v1092, %v1163
      %v1176 = vadd.f32 %v1093, %v1166
      %v1178 = vshrl.u32 %v335, 16
      %v1180 = vrot.slane %v1178, 4
      %v1181 = vshll.u32 %v335, 16
      %v1183 = vrot.slane %v1181, 5
      %v1184 = vor.u32 %v1180, %v1183
      %v1185 = vrot.slane %v1184, 4
      %v1187 = vshll.u32 %v336, 16
      %v1189 = vrot.slane %v1187, 5
      %v1190 = vsel %vm340, %v1185, %v1189
      %v1191 = vld [vmem:[%s294 + $0x1c] sm:$0xf]
      %v1192 = vunpack.c.l.b16 %v1190
      %v1193 = vpack.c.b16 %v1192, %v902
      %v1195 = vsel %vm466, %v1193, 0
      %v1198 = vsel %vm479, %v1191, 0
      %1200 = vmatprep.subr.bf16.mxu0 0
      %1201 = vmatpush1.bf16.msra.mxu0 0
      %1202 = vmatprep.subr.bf16.mxu0 0
      %1203 = vmatpush1.bf16.msra.mxu0 0
      %1204 = vmatprep.subr.bf16.mxu0 0
      %1205 = vmatpush1.bf16.msra.mxu0 0
      %1206 = vmatprep.subr.bf16.mxu0 0
      %1207 = vmatpush1.bf16.msra.mxu0 0
      %1208 = vmatprep.subr.bf16.mxu0 0
      %1209 = vmatpush1.bf16.msra.mxu0 0
      %1210 = vmatprep.subr.bf16.mxu0 0
      %1211 = vmatpush1.bf16.msra.mxu0 0
      %1212 = vmatprep.subr.bf16.mxu0 0
      %1213 = vmatpush1.bf16.msra.mxu0 0
      %1214 = vmatprep.subr.bf16.mxu0 0
      %1215 = vmatpush1.bf16.msra.mxu0 %v1198
      %1216 = vmatprep.subr.bf16.mxu0 0
      %1217 = vmatpush2.bf16.msra.mxu0 0
      %1218 = vmatprep.subr.bf16.mxu0 0
      %1219 = vmatpush2.bf16.msra.mxu0 0
      %1220 = vmatprep.subr.bf16.mxu0 0
      %1221 = vmatpush2.bf16.msra.mxu0 0
      %1222 = vmatprep.subr.bf16.mxu0 0
      %1223 = vmatpush2.bf16.msra.mxu0 0
      %1224 = vmatprep.subr.bf16.mxu0 0
      %1225 = vmatpush2.bf16.msra.mxu0 0
      %1226 = vmatprep.subr.bf16.mxu0 0
      %1227 = vmatpush2.bf16.msra.mxu0 0
      %1228 = vmatprep.subr.bf16.mxu0 0
      %1229 = vmatpush2.bf16.msra.mxu0 0
      %1230 = vmatprep.subr.bf16.mxu0 0
      %1231 = vmatpush2.bf16.msra.mxu0 0
      %1232 = vmatprep.mubr.bf16.mxu0 0
      %1233 = vmatmul.mubr.bf16.gmra.mxu0 %v471
      %v1234 = vpop.f32.mrf.mxu0
      %v1235 = vadd.f32 0.0, %v1234
      %v1236 = vpop.f32.mrf.mxu0
      %v1237 = vpop.f32.mrf.mxu0
      %v1238 = vadd.f32 0.0, %v1237
      %v1239 = vpop.f32.mrf.mxu0
      %1240 = vmatprep.mubr.bf16.mxu0 0
      %1241 = vmatmul.mubr.bf16.gmra.mxu0 %v474
      %v1242 = vpop.f32.mrf.mxu0
      %v1243 = vadd.f32 0.0, %v1242
      %v1244 = vpop.f32.mrf.mxu0
      %v1245 = vpop.f32.mrf.mxu0
      %v1246 = vadd.f32 0.0, %v1245
      %v1247 = vpop.f32.mrf.mxu0
      %1248 = vmatprep.mubr.bf16.mxu0 0
      %1249 = vmatmul.mubr.bf16.gmra.mxu0 %v477
      %v1250 = vpop.f32.mrf.mxu0
      %v1251 = vadd.f32 0.0, %v1250
      %v1252 = vpop.f32.mrf.mxu0
      %v1253 = vpop.f32.mrf.mxu0
      %v1254 = vadd.f32 0.0, %v1253
      %v1255 = vpop.f32.mrf.mxu0
      %1256 = vmatprep.mubr.bf16.mxu0 0
      %1257 = vmatmul.mubr.bf16.gmra.mxu0 %v1195
      %v1258 = vpop.f32.mrf.mxu0
      %v1259 = vadd.f32 0.0, %v1258
      %v1260 = vpop.f32.mrf.mxu0
      %v1261 = vpop.f32.mrf.mxu0
      %v1262 = vadd.f32 0.0, %v1261
      %v1263 = vpop.f32.mrf.mxu0
      %1264 = vdwg.mxu0
      %v1265 = vadd.f32 %v1169, %v1235
      %v1266 = vadd.f32 %v1170, %v1238
      %v1267 = vadd.f32 %v1171, %v1243
      %v1268 = vadd.f32 %v1172, %v1246
      %v1269 = vadd.f32 %v1173, %v1251
      %v1270 = vadd.f32 %v1174, %v1254
      %v1271 = vadd.f32 %v1175, %v1259
      %v1272 = vadd.f32 %v1176, %v1262
      %v1274 = vrot.slane %v335, 5
      %v1275 = vrot.slane %v1274, 4
      %v1276 = vrot.slane %v336, 5
      %v1277 = vsel %vm658, %v1275, %v1276
      %v1278 = vld [vmem:[%s294 + $0x20] sm:$0xf]
      %v1279 = vunpack.c.l.b16 %v1277
      %v1280 = vpack.c.b16 %v1279, %v1001
      %v1282 = vsel %vm466, %v1280, 0
      %v1285 = vsel %vm479, %v1278, 0
      %1287 = vmatprep.subr.bf16.mxu0 0
      %1288 = vmatpush1.bf16.msra.mxu0 0
      %1289 = vmatprep.subr.bf16.mxu0 0
      %1290 = vmatpush1.bf16.msra.mxu0 0
      %1291 = vmatprep.subr.bf16.mxu0 0
      %1292 = vmatpush1.bf16.msra.mxu0 0
      %1293 = vmatprep.subr.bf16.mxu0 0
      %1294 = vmatpush1.bf16.msra.mxu0 0
      %1295 = vmatprep.subr.bf16.mxu0 0
      %1296 = vmatpush1.bf16.msra.mxu0 0
      %1297 = vmatprep.subr.bf16.mxu0 0
      %1298 = vmatpush1.bf16.msra.mxu0 0
      %1299 = vmatprep.subr.bf16.mxu0 0
      %1300 = vmatpush1.bf16.msra.mxu0 0
      %1301 = vmatprep.subr.bf16.mxu0 0
      %1302 = vmatpush1.bf16.msra.mxu0 %v1285
      %1303 = vmatprep.subr.bf16.mxu0 0
      %1304 = vmatpush2.bf16.msra.mxu0 0
      %1305 = vmatprep.subr.bf16.mxu0 0
      %1306 = vmatpush2.bf16.msra.mxu0 0
      %1307 = vmatprep.subr.bf16.mxu0 0
      %1308 = vmatpush2.bf16.msra.mxu0 0
      %1309 = vmatprep.subr.bf16.mxu0 0
      %1310 = vmatpush2.bf16.msra.mxu0 0
      %1311 = vmatprep.subr.bf16.mxu0 0
      %1312 = vmatpush2.bf16.msra.mxu0 0
      %1313 = vmatprep.subr.bf16.mxu0 0
      %1314 = vmatpush2.bf16.msra.mxu0 0
      %1315 = vmatprep.subr.bf16.mxu0 0
      %1316 = vmatpush2.bf16.msra.mxu0 0
      %1317 = vmatprep.subr.bf16.mxu0 0
      %1318 = vmatpush2.bf16.msra.mxu0 0
      %1319 = vmatprep.mubr.bf16.mxu0 0
      %1320 = vmatmul.mubr.bf16.gmra.mxu0 %v708
      %v1321 = vpop.f32.mrf.mxu0
      %v1322 = vadd.f32 0.0, %v1321
      %v1323 = vpop.f32.mrf.mxu0
      %v1324 = vpop.f32.mrf.mxu0
      %v1325 = vadd.f32 0.0, %v1324
      %v1326 = vpop.f32.mrf.mxu0
      %1327 = vmatprep.mubr.bf16.mxu0 0
      %1328 = vmatmul.mubr.bf16.gmra.mxu0 %v711
      %v1329 = vpop.f32.mrf.mxu0
      %v1330 = vadd.f32 0.0, %v1329
      %v1331 = vpop.f32.mrf.mxu0
      %v1332 = vpop.f32.mrf.mxu0
      %v1333 = vadd.f32 0.0, %v1332
      %v1334 = vpop.f32.mrf.mxu0
      %1335 = vmatprep.mubr.bf16.mxu0 0
      %1336 = vmatmul.mubr.bf16.gmra.mxu0 %v714
      %v1337 = vpop.f32.mrf.mxu0
      %v1338 = vadd.f32 0.0, %v1337
      %v1339 = vpop.f32.mrf.mxu0
      %v1340 = vpop.f32.mrf.mxu0
      %v1341 = vadd.f32 0.0, %v1340
      %v1342 = vpop.f32.mrf.mxu0
      %1343 = vmatprep.mubr.bf16.mxu0 0
      %1344 = vmatmul.mubr.bf16.gmra.mxu0 %v1282
      %v1345 = vpop.f32.mrf.mxu0
      %v1346 = vadd.f32 0.0, %v1345
      %v1347 = vpop.f32.mrf.mxu0
      %v1348 = vpop.f32.mrf.mxu0
      %v1349 = vadd.f32 0.0, %v1348
      %v1350 = vpop.f32.mrf.mxu0
      %1351 = vdwg.mxu0
      %v1352 = vadd.f32 %v1265, %v1322
      %v1353 = vadd.f32 %v1266, %v1325
      %v1354 = vadd.f32 %v1267, %v1330
      %v1355 = vadd.f32 %v1268, %v1333
      %v1356 = vadd.f32 %v1269, %v1338
      %v1357 = vadd.f32 %v1270, %v1341
      %v1358 = vadd.f32 %v1271, %v1346
      %v1359 = vadd.f32 %v1272, %v1349
      %v1360 = vld [vmem:[%s297] sm:$0x1]
      %v1362 = vlaneseq
      %v1363 = vshrl.u32 %v1362, 7
      %v1364 = vsub.s32 0, %v1363
      %v1365 = vrot.slane %v1360, %v1364
      %v1367 = vadd.f32 %v1352, %v1365
      %v1368 = vadd.f32 %v1353, %v1365
      %v1369 = vadd.f32 %v1354, %v1365
      %v1370 = vadd.f32 %v1355, %v1365
      %v1371 = vadd.f32 %v1356, %v1365
      %v1372 = vadd.f32 %v1357, %v1365
      %v1373 = vadd.f32 %v1358, %v1365
      %v1374 = vadd.f32 %v1359, %v1365
      %v1375 = vld [vmem:[%s303] sm:$0xf]
      %v1376 = vld [vmem:[%s303 + $0x8] sm:$0xf]
      %v1377 = vld [vmem:[%s303 + $0x10] sm:$0xf]
      %v1378 = vld [vmem:[%s303 + $0x18] sm:$0xf]
      %v1379 = vld [vmem:[%s303 + $0x20] sm:$0xf]
      %v1380 = vld [vmem:[%s303 + $0x28] sm:$0xf]
      %v1381 = vld [vmem:[%s303 + $0x30] sm:$0xf]
      %v1382 = vld [vmem:[%s303 + $0x38] sm:$0xf]
      %v1383 = vld [vmem:[%s307] sm:$0xf]
      %v1392 = vunpack.c.l.b16 %v1375
      %v1393 = vunpack.c.l.b16 %v1376
      %v1394 = vunpack.c.l.b16 %v1377
      %v1395 = vunpack.c.l.b16 %v1378
      %v1396 = vunpack.c.l.b16 %v1379
      %v1397 = vunpack.c.l.b16 %v1380
      %v1398 = vunpack.c.l.b16 %v1381
      %v1399 = vunpack.c.l.b16 %v1382
      %v1400 = vpack.c.b16 %v1393, %v1392
      %v1401 = vpack.c.b16 %v1395, %v1394
      %v1402 = vpack.c.b16 %v1397, %v1396
      %v1403 = vpack.c.b16 %v1399, %v1398
      %v1405 = vsel %vm466, %v1400, 0
      %v1408 = vsel %vm466, %v1401, 0
      %v1411 = vsel %vm466, %v1402, 0
      %v1414 = vsel %vm466, %v1403, 0
      %v1417 = vsel %vm479, %v1383, 0
      %1419 = vmatprep.subr.bf16.mxu0 0
      %1420 = vmatpush1.bf16.msra.mxu0 0
      %1421 = vmatprep.subr.bf16.mxu0 0
      %1422 = vmatpush1.bf16.msra.mxu0 0
      %1423 = vmatprep.subr.bf16.mxu0 0
      %1424 = vmatpush1.bf16.msra.mxu0 0
      %1425 = vmatprep.subr.bf16.mxu0 0
      %1426 = vmatpush1.bf16.msra.mxu0 0
      %1427 = vmatprep.subr.bf16.mxu0 0
      %1428 = vmatpush1.bf16.msra.mxu0 0
      %1429 = vmatprep.subr.bf16.mxu0 0
      %1430 = vmatpush1.bf16.msra.mxu0 0
      %1431 = vmatprep.subr.bf16.mxu0 0
      %1432 = vmatpush1.bf16.msra.mxu0 0
      %1433 = vmatprep.subr.bf16.mxu0 0
      %1434 = vmatpush1.bf16.msra.mxu0 %v1417
      %1435 = vmatprep.subr.bf16.mxu0 0
      %1436 = vmatpush2.bf16.msra.mxu0 0
      %1437 = vmatprep.subr.bf16.mxu0 0
      %1438 = vmatpush2.bf16.msra.mxu0 0
      %1439 = vmatprep.subr.bf16.mxu0 0
      %1440 = vmatpush2.bf16.msra.mxu0 0
      %1441 = vmatprep.subr.bf16.mxu0 0
      %1442 = vmatpush2.bf16.msra.mxu0 0
      %1443 = vmatprep.subr.bf16.mxu0 0
      %1444 = vmatpush2.bf16.msra.mxu0 0
      %1445 = vmatprep.subr.bf16.mxu0 0
      %1446 = vmatpush2.bf16.msra.mxu0 0
      %1447 = vmatprep.subr.bf16.mxu0 0
      %1448 = vmatpush2.bf16.msra.mxu0 0
      %1449 = vmatprep.subr.bf16.mxu0 0
      %1450 = vmatpush2.bf16.msra.mxu0 0
      %1451 = vmatprep.mubr.bf16.mxu0 0
      %1452 = vmatmul.mubr.bf16.gmra.mxu0 %v1405
      %v1453 = vpop.f32.mrf.mxu0
      %v1454 = vadd.f32 0.0, %v1453
      %v1455 = vpop.f32.mrf.mxu0
      %v1456 = vpop.f32.mrf.mxu0
      %v1457 = vadd.f32 0.0, %v1456
      %v1458 = vpop.f32.mrf.mxu0
      %1459 = vmatprep.mubr.bf16.mxu0 0
      %1460 = vmatmul.mubr.bf16.gmra.mxu0 %v1408
      %v1461 = vpop.f32.mrf.mxu0
      %v1462 = vadd.f32 0.0, %v1461
      %v1463 = vpop.f32.mrf.mxu0
      %v1464 = vpop.f32.mrf.mxu0
      %v1465 = vadd.f32 0.0, %v1464
      %v1466 = vpop.f32.mrf.mxu0
      %1467 = vmatprep.mubr.bf16.mxu0 0
      %1468 = vmatmul.mubr.bf16.gmra.mxu0 %v1411
      %v1469 = vpop.f32.mrf.mxu0
      %v1470 = vadd.f32 0.0, %v1469
      %v1471 = vpop.f32.mrf.mxu0
      %v1472 = vpop.f32.mrf.mxu0
      %v1473 = vadd.f32 0.0, %v1472
      %v1474 = vpop.f32.mrf.mxu0
      %1475 = vmatprep.mubr.bf16.mxu0 0
      %1476 = vmatmul.mubr.bf16.gmra.mxu0 %v1414
      %v1477 = vpop.f32.mrf.mxu0
      %v1478 = vadd.f32 0.0, %v1477
      %v1479 = vpop.f32.mrf.mxu0
      %v1480 = vpop.f32.mrf.mxu0
      %v1481 = vadd.f32 0.0, %v1480
      %v1482 = vpop.f32.mrf.mxu0
      %1483 = vdwg.mxu0
      %v1484 = vadd.f32 %v1367, %v1454
      %v1485 = vadd.f32 %v1368, %v1457
      %v1486 = vadd.f32 %v1369, %v1462
      %v1487 = vadd.f32 %v1370, %v1465
      %v1488 = vadd.f32 %v1371, %v1470
      %v1489 = vadd.f32 %v1372, %v1473
      %v1490 = vadd.f32 %v1373, %v1478
      %v1491 = vadd.f32 %v1374, %v1481
      %v1492 = vmax.f32 %v1484, 0.0
      %v1493 = vmax.f32 %v1485, 0.0
      %v1494 = vmax.f32 %v1486, 0.0
      %v1495 = vmax.f32 %v1487, 0.0
      %v1496 = vmax.f32 %v1488, 0.0
      %v1497 = vmax.f32 %v1489, 0.0
      %v1498 = vmax.f32 %v1490, 0.0
      %v1499 = vmax.f32 %v1491, 0.0
      %1500 = vst.msk [vmem:[%s315] sm:$0xff] %vm466, %v1492
      %1501 = vst.msk [vmem:[%s315 + $0x8] sm:$0xff] %vm466, %v1493
      %1502 = vst.msk [vmem:[%s315 + $0x10] sm:$0xff] %vm466, %v1494
      %1503 = vst.msk [vmem:[%s315 + $0x18] sm:$0xff] %vm466, %v1495
      %1504 = vst.msk [vmem:[%s315 + $0x20] sm:$0xff] %vm466, %v1496
      %1505 = vst.msk [vmem:[%s315 + $0x28] sm:$0xff] %vm466, %v1497
      %1506 = vst.msk [vmem:[%s315 + $0x30] sm:$0xff] %vm466, %v1498
      %1507 = vst.msk [vmem:[%s315 + $0x38] sm:$0xff] %vm466, %v1499
      %p1508 = scmp.lt.s32.totalorder %s20, 1
      %s1509 = scalar_select %p1508, %s20, 1
      %p1510 = scmp.lt.s32.totalorder %s21, 0
      %s1511 = scalar_select %p1510, %s21, 0
      %s1512 = smul.addr %s1509, 8
      %s1513 = sadd.s32 %s1511, %s1512
      %s1514 = smul.addr %s1513, 8
      %s1515 = scalar_lea.vmem %s5, %s1514
      // Predicated region
      $region41: #{basic_block_forward.3} parent=39 // pred_check
        %p1516 = pneg %p178
      $region42: #{basic_block_forward.3} parent=39 // pred_check_branch
        %1518 = sbr.rel (%p1516) target = $region44
      $region43: #{basic_block_forward.3} parent=39 // pred_region
        _
      $region44: #{basic_block_forward.3} parent=39 // pred_fallthru
        _
    $region40: #{basic_block_forward.3} parent=5 // pred_fallthru
      _
    %p1519 = scmp.le.s32.totalorder 2, %s11
    // Predicated region
    $region45: #{basic_block_forward.3} parent=5 // pred_check
      %p1520 = pneg %p1519
    $region46: #{basic_block_forward.3} parent=5 // pred_check_branch
      %1522 = sbr.rel (%p1520) target = $region48
    $region47: #{basic_block_forward.3} parent=5 // pred_region
      %s1523 = ssub.s32 %s11, 2
      // Predicated region
      $region49: #{basic_block_forward.3} parent=47 // pred_check
        %p1524 = pneg %p184
      $region50: #{basic_block_forward.3} parent=47 // pred_check_branch
        %1526 = sbr.rel (%p1524) target = $region52
      $region51: #{basic_block_forward.3} parent=47 // pred_region
        %p1527 = scmp.lt.s32.totalorder %s22, 1
        %s1528 = scalar_select %p1527, %s22, 1
        %p1529 = scmp.lt.s32.totalorder %s23, 0
        %s1530 = scalar_select %p1529, %s23, 0
        %s1531 = smul.addr %s1528, 8
        %s1532 = sadd.s32 %s1530, %s1531
        %s1533 = smul.addr %s1532, 8
        %s1534 = scalar_lea.vmem %s5, %s1533
      $region52: #{basic_block_forward.3} parent=47 // pred_fallthru
        _
    $region48: #{basic_block_forward.3} parent=5 // pred_fallthru
      _
  $region6: #{basic_block_forward.3} parent=0 // loop_footer
    %s15 = sadd.s32 1, %s11
  $region7: #{basic_block_forward.3} parent=0 // loop_footer_branch
    %10 = sbr.rel target = $region3
  $region8: #{basic_block_forward.3} parent=0 // loop_exit
    _

</llo_original>
